<compile_context>
chip_gen: v7x
topology: tpu7x:2x2x1
jax: 0.10.0
libtpu: 0.0.40
codegen_flags: <defaults>
</compile_context>

<pallas_src>
import functools

import jax
import jax.numpy as jnp
import numpy as np
from jax import lax
from jax.experimental import pallas as pl
from jax.experimental.pallas import tpu as pltpu

_HIGHEST = lax.Precision.HIGHEST

# Older jax releases exposed the Mosaic compiler params under a different name.
_CompilerParams = getattr(pltpu, "CompilerParams", None)
if _CompilerParams is None:  # pragma: no cover - older jax fallback
    _CompilerParams = pltpu.TPUCompilerParams


# ----------------------------------------------------------------------------
# Plain-JAX reference ops (used ONLY for one-time weight prep + numerics check)
# ----------------------------------------------------------------------------
def _conv2d_ref(x, w, stride, padding):
    """PyTorch Conv2d semantics, no bias. x: (N,C,H,W), w: (OC,IC,k,k)."""
    return lax.conv_general_dilated(
        x, w,
        window_strides=(stride, stride),
        padding=((padding, padding), (padding, padding)),
        dimension_numbers=("NCHW", "OIHW", "NCHW"),
        precision=_HIGHEST)


def _conv_transpose2d_ref(x, w, stride, padding, output_padding):
    """PyTorch ConvTranspose2d semantics, no bias. x: (N,IC,H,W), w: (IC,OC,k,k)."""
    k = w.shape[2]
    w_conv = jnp.flip(w, axis=(2, 3)).transpose(1, 0, 2, 3)   # (OC, IC, k, k)
    lo = k - 1 - padding
    hi = k - 1 - padding + output_padding
    return lax.conv_general_dilated(
        x, w_conv,
        window_strides=(1, 1),
        padding=((lo, hi), (lo, hi)),
        lhs_dilation=(stride, stride),                        # input dilation
        dimension_numbers=("NCHW", "OIHW", "NCHW"),
        precision=_HIGHEST)


# ----------------------------------------------------------------------------
# One-time weight preprocessing: lower every layer to a lane-padded dense matrix
# ----------------------------------------------------------------------------
def _round_up(n, m=128):
    return ((n + m - 1) // m) * m


def _pad_operator(t):
    r, c = t.shape
    return jnp.pad(t, ((0, _round_up(r) - r), (0, _round_up(c) - c)))


def _pad_bias(b):
    (n,) = b.shape
    return jnp.pad(b, (0, _round_up(n) - n)).reshape(1, -1)


def _operator_matrix(fn, in_shape):
    """Dense (in_flat, out_flat) matrix of the linear map `fn` on NCHW tensors."""
    n_in = int(np.prod(in_shape))
    basis = jnp.eye(n_in, dtype=jnp.float32).reshape((n_in,) + tuple(in_shape))
    out = fn(basis)                                   # (n_in, OC, OH, OW)
    return out.reshape(n_in, -1), tuple(int(d) for d in out.shape[1:])


def build_dense_params(params, in_shape, filters, code_dim):
    """Lower conv/linear layers to zero-padded dense operators (done once)."""
    C, H, W = in_shape
    _, _, f2 = filters
    mats, biases, acts = [], [], []
    shape = (C, H, W)

    def add(t, b_flat, act, new_shape):
        nonlocal shape
        mats.append(t)
        biases.append(b_flat)
        acts.append(act)
        shape = new_shape

    # --- encoder: three stride-2 convs + SiLU --------------------------------
    for wn, bn in (("enc01_w", "enc01_b"), ("enc02_w", "enc02_b"),
                   ("enc03_w", "enc03_b")):
        w, b = params[wn], params[bn]
        t, oshape = _operator_matrix(
            lambda e, w=w: _conv2d_ref(e, w, stride=2, padding=1), shape)
        add(t, jnp.broadcast_to(b[:, None, None], oshape).reshape(-1), True, oshape)

    flat = f2 * (H // 6) * (W // 6)
    assert int(np.prod(shape)) == flat, (shape, flat)

    # --- bottleneck linears (NCHW flatten order matches PyTorch nn.Flatten) --
    add(params["code_w"], params["code_b"], False, (code_dim,))              # code
    add(params["dec_fc_w"], params["dec_fc_b"], True, (f2, H // 6, W // 6))  # dec_fc

    # --- decoder: three stride-2 transposed convs ----------------------------
    for wn, bn, opad, act in (("dec02_w", "dec02_b", 0, True),
                              ("dec01_w", "dec01_b", 1, True),
                              ("out_w", "out_b", 1, False)):
        w, b = params[wn], params[bn]
        t, oshape = _operator_matrix(
            lambda e, w=w, opad=opad: _conv_transpose2d_ref(
                e, w, stride=2, padding=1, output_padding=opad), shape)
        add(t, jnp.broadcast_to(b[:, None, None], oshape).reshape(-1), act, oshape)

    return {
        "mats": tuple(_pad_operator(t) for t in mats),
        "biases": tuple(_pad_bias(b) for b in biases),
        "acts": tuple(acts),
        "out_shape": tuple(int(d) for d in shape),
    }


# ----------------------------------------------------------------------------
# Fused Pallas kernel: the whole forward as a VMEM-resident matmul chain
# ----------------------------------------------------------------------------
def _cae_chain_kernel(*refs, acts):
    x_ref, o_ref = refs[0], refs[-1]
    layer_refs = refs[1:-1]
    h = x_ref[...]                                    # (bm, 1024) f32
    for i, act in enumerate(acts):                    # static unroll (8 layers)
        t_ref = layer_refs[2 * i]
        b_ref = layer_refs[2 * i + 1]
        h = jnp.dot(h, t_ref[...], preferred_element_type=jnp.float32)
        h = h + b_ref[...]                            # (bm, N) + (1, N)
        if act:
            h = h * jax.nn.sigmoid(h)                 # SiLU; sigmoid -> EUP slot
    o_ref[...] = h.astype(o_ref.dtype)                # lane-dense store (N % 128 == 0)


def _fused_forward(x_flat, mats, biases, acts):
    b_total, d_in = x_flat.shape
    d_out = mats[-1].shape[1]
    bm = min(b_total, 128)                            # batch tile (M axis)
    grid = (pl.cdiv(b_total, bm),)

    in_specs = [pl.BlockSpec((bm, d_in), lambda i: (i, 0))]
    args = [x_flat]
    for t, bias in zip(mats, biases):
        # Constant block index -> weights stay resident in VMEM across steps.
        in_specs.append(pl.BlockSpec(t.shape, lambda i: (0, 0)))
        in_specs.append(pl.BlockSpec(bias.shape, lambda i: (0, 0)))
        args.append(t)
        args.append(bias)

    return pl.pallas_call(
        functools.partial(_cae_chain_kernel, acts=acts),
        out_shape=jax.ShapeDtypeStruct((b_total, d_out), jnp.float32),
        grid=grid,
        in_specs=in_specs,
        out_specs=pl.BlockSpec((bm, d_out), lambda i: (i, 0)),
        compiler_params=_CompilerParams(
            dimension_semantics=("parallel",),          # shard batch tiles (v7x 2 TCs)
            vmem_limit_bytes=32 * 1024 * 1024),         # ~9 MiB resident; safe on v7x
    )(*args)


@functools.partial(jax.jit, static_argnames=("acts", "out_shape"))
def cae_forward_fused(mats, biases, x, *, acts, out_shape):
    b = x.shape[0]
    xf = x.reshape(b, -1).astype(jnp.float32)           # NCHW flatten (view)
    d_in_pad = mats[0].shape[0]
    xf = jnp.pad(xf, ((0, 0), (0, d_in_pad - xf.shape[1])))
    out_pad = _fused_forward(xf, mats, biases, acts)
    n_out = int(np.prod(out_shape))
    return out_pad[:, :n_out].reshape((b,) + tuple(out_shape))


# ----------------------------------------------------------------------------
# Pure-JAX reference of the module (for the numerics check only)
# ----------------------------------------------------------------------------
def cae_forward_reference(params, x, in_shape, filters, code_dim):
    _, H, W = in_shape
    _, _, f2 = filters
    silu = jax.nn.silu
    h = silu(_conv2d_ref(x, params["enc01_w"], 2, 1)
             + params["enc01_b"][None, :, None, None])
    h = silu(_conv2d_ref(h, params["enc02_w"], 2, 1)
             + params["enc02_b"][None, :, None, None])
    h = silu(_conv2d_ref(h, params["enc03_w"], 2, 1)
             + params["enc03_b"][None, :, None, None])
    b = h.shape[0]
    hf = h.reshape(b, -1)
    code = jnp.dot(hf, params["code_w"], precision=_HIGHEST) + params["code_b"]
    h = silu(jnp.dot(code, params["dec_fc_w"], precision=_HIGHEST)
             + params["dec_fc_b"])
    h = h.reshape(b, f2, H // 6, W // 6)
    h = silu(_conv_transpose2d_ref(h, params["dec02_w"], 2, 1, 0)
             + params["dec02_b"][None, :, None, None])
    h = silu(_conv_transpose2d_ref(h, params["dec01_w"], 2, 1, 1)
             + params["dec01_b"][None, :, None, None])
    h = (_conv_transpose2d_ref(h, params["out_w"], 2, 1, 1)
         + params["out_b"][None, :, None, None])
    return h


# ----------------------------------------------------------------------------
# Parameter init (deterministic, PyTorch-default-style uniform fan-in bounds)
# ----------------------------------------------------------------------------
def init_params(key, in_shape, filters, code_dim):
    C, H, W = in_shape
    f0, f1, f2 = filters
    flat = f2 * (H // 6) * (W // 6)

    def uni(k, shape, fan_in):
        bound = 1.0 / (fan_in ** 0.5)
        return jax.random.uniform(k, shape, jnp.float32, -bound, bound)

    keys = jax.random.split(key, 18)
    p = {}
    # Conv2d weights: (OC, IC, 3, 3)
    p["enc01_w"] = uni(keys[0], (f0, C, 3, 3), C * 9)
    p["enc01_b"] = uni(keys[1], (f0,), C * 9)
    p["enc02_w"] = uni(keys[2], (f1, f0, 3, 3), f0 * 9)
    p["enc02_b"] = uni(keys[3], (f1,), f0 * 9)
    p["enc03_w"] = uni(keys[4], (f2, f1, 3, 3), f1 * 9)
    p["enc03_b"] = uni(keys[5], (f2,), f1 * 9)
    # Linear weights stored as (in, out) for direct right-multiplication
    p["code_w"] = uni(keys[6], (flat, code_dim), flat)
    p["code_b"] = uni(keys[7], (code_dim,), flat)
    p["dec_fc_w"] = uni(keys[8], (code_dim, flat), code_dim)
    p["dec_fc_b"] = uni(keys[9], (flat,), code_dim)
    # ConvTranspose2d weights: (IC, OC, 3, 3)
    p["dec02_w"] = uni(keys[10], (f2, f1, 3, 3), f1 * 9)
    p["dec02_b"] = uni(keys[11], (f1,), f1 * 9)
    p["dec01_w"] = uni(keys[12], (f1, f0, 3, 3), f0 * 9)
    p["dec01_b"] = uni(keys[13], (f0,), f0 * 9)
    p["out_w"] = uni(keys[14], (f0, C, 3, 3), C * 9)
    p["out_b"] = uni(keys[15], (C,), C * 9)
    return p


if __name__ == "__main__":
    # Shapes consistent with the module: H//6 must equal the size after three
    # stride-2 convs -> H = W = 16 (16 -> 8 -> 4 -> 2, and 16 // 6 == 2).
    in_shape = (4, 16, 16)
    filters = (8, 16, 32)
    code_dim = 32
    batch = 2

    key = jax.random.PRNGKey(0)
    k_param, k_in = jax.random.split(key)
    params = init_params(k_param, in_shape, filters, code_dim)
    x = jax.random.normal(k_in, (batch,) + in_shape, jnp.float32)

    # One-time weight preprocessing (outside the per-forward hot path).
    dense = build_dense_params(params, in_shape, filters, code_dim)

    out = cae_forward_fused(dense["mats"], dense["biases"], x,
                            acts=dense["acts"], out_shape=dense["out_shape"])
    out = jax.block_until_ready(out)

    # Expected PyTorch output shape for this config: (2, 4, 12, 12).
    assert out.shape == (batch, in_shape[0], 12, 12), out.shape
    assert bool(jnp.all(jnp.isfinite(out)))

    # Numerical check against a plain-JAX reference of the original module.
    ref = cae_forward_reference(params, x, in_shape, filters, code_dim)
    max_err = float(jnp.max(jnp.abs(out - ref)))
    assert max_err < 1e-3, max_err

    print("KERNEL_OK")
</pallas_src>

<mosaic_0001>
module attributes {stable_mosaic.version = 11 : i64} {
  func.func @_cae_chain_kernel(%arg0: i32, %arg1: memref<2x1024xf32, #tpu.memory_space<vmem>>, %arg2: memref<1024x512xf32, #tpu.memory_space<vmem>>, %arg3: memref<1x512xf32, #tpu.memory_space<vmem>>, %arg4: memref<512x256xf32, #tpu.memory_space<vmem>>, %arg5: memref<1x256xf32, #tpu.memory_space<vmem>>, %arg6: memref<256x128xf32, #tpu.memory_space<vmem>>, %arg7: memref<1x128xf32, #tpu.memory_space<vmem>>, %arg8: memref<128x128xf32, #tpu.memory_space<vmem>>, %arg9: memref<1x128xf32, #tpu.memory_space<vmem>>, %arg10: memref<128x128xf32, #tpu.memory_space<vmem>>, %arg11: memref<1x128xf32, #tpu.memory_space<vmem>>, %arg12: memref<128x256xf32, #tpu.memory_space<vmem>>, %arg13: memref<1x256xf32, #tpu.memory_space<vmem>>, %arg14: memref<256x384xf32, #tpu.memory_space<vmem>>, %arg15: memref<1x384xf32, #tpu.memory_space<vmem>>, %arg16: memref<384x640xf32, #tpu.memory_space<vmem>>, %arg17: memref<1x640xf32, #tpu.memory_space<vmem>>, %arg18: memref<2x640xf32, #tpu.memory_space<vmem>>) attributes {dimension_semantics = [#tpu.dimension_semantics<parallel>], iteration_bounds = array<i64: 1>, scalar_prefetch = 0 : i64, scratch_operands = 0 : i64, tpu.core_type = #tpu.core_type<tc>, window_params = [{transform_indices = @transform_0, window_bounds = array<i64: 2, 1024>}, {pipeline_mode = #tpu.pipeline_mode<synchronous>, transform_indices = @transform_1, window_bounds = array<i64: 1024, 512>}, {pipeline_mode = #tpu.pipeline_mode<synchronous>, transform_indices = @transform_2, window_bounds = array<i64: 1, 512>}, {pipeline_mode = #tpu.pipeline_mode<synchronous>, transform_indices = @transform_3, window_bounds = array<i64: 512, 256>}, {pipeline_mode = #tpu.pipeline_mode<synchronous>, transform_indices = @transform_4, window_bounds = array<i64: 1, 256>}, {pipeline_mode = #tpu.pipeline_mode<synchronous>, transform_indices = @transform_5, window_bounds = array<i64: 256, 128>}, {pipeline_mode = #tpu.pipeline_mode<synchronous>, transform_indices = @transform_6, window_bounds = array<i64: 1, 128>}, {pipeline_mode = #tpu.pipeline_mode<synchronous>, transform_indices = @transform_7, window_bounds = array<i64: 128, 128>}, {pipeline_mode = #tpu.pipeline_mode<synchronous>, transform_indices = @transform_8, window_bounds = array<i64: 1, 128>}, {pipeline_mode = #tpu.pipeline_mode<synchronous>, transform_indices = @transform_9, window_bounds = array<i64: 128, 128>}, {pipeline_mode = #tpu.pipeline_mode<synchronous>, transform_indices = @transform_10, window_bounds = array<i64: 1, 128>}, {pipeline_mode = #tpu.pipeline_mode<synchronous>, transform_indices = @transform_11, window_bounds = array<i64: 128, 256>}, {pipeline_mode = #tpu.pipeline_mode<synchronous>, transform_indices = @transform_12, window_bounds = array<i64: 1, 256>}, {pipeline_mode = #tpu.pipeline_mode<synchronous>, transform_indices = @transform_13, window_bounds = array<i64: 256, 384>}, {pipeline_mode = #tpu.pipeline_mode<synchronous>, transform_indices = @transform_14, window_bounds = array<i64: 1, 384>}, {pipeline_mode = #tpu.pipeline_mode<synchronous>, transform_indices = @transform_15, window_bounds = array<i64: 384, 640>}, {pipeline_mode = #tpu.pipeline_mode<synchronous>, transform_indices = @transform_16, window_bounds = array<i64: 1, 640>}, {transform_indices = @transform_17, window_bounds = array<i64: 2, 640>}]} {
    %c0 = arith.constant 0 : index
    %c0_0 = arith.constant 0 : index
    %0 = vector.load %arg1[%c0, %c0_0] : memref<2x1024xf32, #tpu.memory_space<vmem>>, vector<2x1024xf32>
    %c0_1 = arith.constant 0 : index
    %c0_2 = arith.constant 0 : index
    %1 = vector.load %arg2[%c0_1, %c0_2] : memref<1024x512xf32, #tpu.memory_space<vmem>>, vector<1024x512xf32>
    %cst = arith.constant dense<0.000000e+00> : vector<2x512xf32>
    %2 = tpu.matmul %0, %1, %cst {dimension_numbers = #tpu.dot_dimension_numbers<[1], [0], [0], [1], [0, 0, 1, 1], [], []>} : vector<2x1024xf32>, vector<1024x512xf32>, vector<2x512xf32> -> vector<2x512xf32>
    %c0_3 = arith.constant 0 : index
    %c0_4 = arith.constant 0 : index
    %3 = vector.load %arg3[%c0_3, %c0_4] : memref<1x512xf32, #tpu.memory_space<vmem>>, vector<1x512xf32>
    %4 = vector.broadcast %3 : vector<1x512xf32> to vector<2x512xf32>
    %5 = arith.addf %2, %4 : vector<2x512xf32>
    %6 = arith.negf %5 : vector<2x512xf32>
    %7 = math.exp %6 : vector<2x512xf32>
    %cst_5 = arith.constant 1.000000e+00 : f32
    %8 = vector.broadcast %cst_5 : f32 to vector<2x512xf32>
    %9 = arith.addf %8, %7 : vector<2x512xf32>
    %10 = arith.divf %8, %9 : vector<2x512xf32>
    %11 = arith.mulf %5, %10 : vector<2x512xf32>
    %c0_6 = arith.constant 0 : index
    %c0_7 = arith.constant 0 : index
    %12 = vector.load %arg4[%c0_6, %c0_7] : memref<512x256xf32, #tpu.memory_space<vmem>>, vector<512x256xf32>
    %cst_8 = arith.constant dense<0.000000e+00> : vector<2x256xf32>
    %13 = tpu.matmul %11, %12, %cst_8 {dimension_numbers = #tpu.dot_dimension_numbers<[1], [0], [0], [1], [0, 0, 1, 1], [], []>} : vector<2x512xf32>, vector<512x256xf32>, vector<2x256xf32> -> vector<2x256xf32>
    %c0_9 = arith.constant 0 : index
    %c0_10 = arith.constant 0 : index
    %14 = vector.load %arg5[%c0_9, %c0_10] : memref<1x256xf32, #tpu.memory_space<vmem>>, vector<1x256xf32>
    %15 = vector.broadcast %14 : vector<1x256xf32> to vector<2x256xf32>
    %16 = arith.addf %13, %15 : vector<2x256xf32>
    %17 = arith.negf %16 : vector<2x256xf32>
    %18 = math.exp %17 : vector<2x256xf32>
    %cst_11 = arith.constant 1.000000e+00 : f32
    %19 = vector.broadcast %cst_11 : f32 to vector<2x256xf32>
    %20 = arith.addf %19, %18 : vector<2x256xf32>
    %21 = arith.divf %19, %20 : vector<2x256xf32>
    %22 = arith.mulf %16, %21 : vector<2x256xf32>
    %c0_12 = arith.constant 0 : index
    %c0_13 = arith.constant 0 : index
    %23 = vector.load %arg6[%c0_12, %c0_13] : memref<256x128xf32, #tpu.memory_space<vmem>>, vector<256x128xf32>
    %cst_14 = arith.constant dense<0.000000e+00> : vector<2x128xf32>
    %24 = tpu.matmul %22, %23, %cst_14 {dimension_numbers = #tpu.dot_dimension_numbers<[1], [0], [0], [1], [0, 0, 1, 1], [], []>} : vector<2x256xf32>, vector<256x128xf32>, vector<2x128xf32> -> vector<2x128xf32>
    %c0_15 = arith.constant 0 : index
    %c0_16 = arith.constant 0 : index
    %25 = vector.load %arg7[%c0_15, %c0_16] : memref<1x128xf32, #tpu.memory_space<vmem>>, vector<1x128xf32>
    %26 = vector.broadcast %25 : vector<1x128xf32> to vector<2x128xf32>
    %27 = arith.addf %24, %26 : vector<2x128xf32>
    %28 = arith.negf %27 : vector<2x128xf32>
    %29 = math.exp %28 : vector<2x128xf32>
    %cst_17 = arith.constant 1.000000e+00 : f32
    %30 = vector.broadcast %cst_17 : f32 to vector<2x128xf32>
    %31 = arith.addf %30, %29 : vector<2x128xf32>
    %32 = arith.divf %30, %31 : vector<2x128xf32>
    %33 = arith.mulf %27, %32 : vector<2x128xf32>
    %c0_18 = arith.constant 0 : index
    %c0_19 = arith.constant 0 : index
    %34 = vector.load %arg8[%c0_18, %c0_19] : memref<128x128xf32, #tpu.memory_space<vmem>>, vector<128x128xf32>
    %cst_20 = arith.constant dense<0.000000e+00> : vector<2x128xf32>
    %35 = tpu.matmul %33, %34, %cst_20 {dimension_numbers = #tpu.dot_dimension_numbers<[1], [0], [0], [1], [0, 0, 1, 1], [], []>} : vector<2x128xf32>, vector<128x128xf32>, vector<2x128xf32> -> vector<2x128xf32>
    %c0_21 = arith.constant 0 : index
    %c0_22 = arith.constant 0 : index
    %36 = vector.load %arg9[%c0_21, %c0_22] : memref<1x128xf32, #tpu.memory_space<vmem>>, vector<1x128xf32>
    %37 = vector.broadcast %36 : vector<1x128xf32> to vector<2x128xf32>
    %38 = arith.addf %35, %37 : vector<2x128xf32>
    %c0_23 = arith.constant 0 : index
    %c0_24 = arith.constant 0 : index
    %39 = vector.load %arg10[%c0_23, %c0_24] : memref<128x128xf32, #tpu.memory_space<vmem>>, vector<128x128xf32>
    %cst_25 = arith.constant dense<0.000000e+00> : vector<2x128xf32>
    %40 = tpu.matmul %38, %39, %cst_25 {dimension_numbers = #tpu.dot_dimension_numbers<[1], [0], [0], [1], [0, 0, 1, 1], [], []>} : vector<2x128xf32>, vector<128x128xf32>, vector<2x128xf32> -> vector<2x128xf32>
    %c0_26 = arith.constant 0 : index
    %c0_27 = arith.constant 0 : index
    %41 = vector.load %arg11[%c0_26, %c0_27] : memref<1x128xf32, #tpu.memory_space<vmem>>, vector<1x128xf32>
    %42 = vector.broadcast %41 : vector<1x128xf32> to vector<2x128xf32>
    %43 = arith.addf %40, %42 : vector<2x128xf32>
    %44 = arith.negf %43 : vector<2x128xf32>
    %45 = math.exp %44 : vector<2x128xf32>
    %cst_28 = arith.constant 1.000000e+00 : f32
    %46 = vector.broadcast %cst_28 : f32 to vector<2x128xf32>
    %47 = arith.addf %46, %45 : vector<2x128xf32>
    %48 = arith.divf %46, %47 : vector<2x128xf32>
    %49 = arith.mulf %43, %48 : vector<2x128xf32>
    %c0_29 = arith.constant 0 : index
    %c0_30 = arith.constant 0 : index
    %50 = vector.load %arg12[%c0_29, %c0_30] : memref<128x256xf32, #tpu.memory_space<vmem>>, vector<128x256xf32>
    %cst_31 = arith.constant dense<0.000000e+00> : vector<2x256xf32>
    %51 = tpu.matmul %49, %50, %cst_31 {dimension_numbers = #tpu.dot_dimension_numbers<[1], [0], [0], [1], [0, 0, 1, 1], [], []>} : vector<2x128xf32>, vector<128x256xf32>, vector<2x256xf32> -> vector<2x256xf32>
    %c0_32 = arith.constant 0 : index
    %c0_33 = arith.constant 0 : index
    %52 = vector.load %arg13[%c0_32, %c0_33] : memref<1x256xf32, #tpu.memory_space<vmem>>, vector<1x256xf32>
    %53 = vector.broadcast %52 : vector<1x256xf32> to vector<2x256xf32>
    %54 = arith.addf %51, %53 : vector<2x256xf32>
    %55 = arith.negf %54 : vector<2x256xf32>
    %56 = math.exp %55 : vector<2x256xf32>
    %cst_34 = arith.constant 1.000000e+00 : f32
    %57 = vector.broadcast %cst_34 : f32 to vector<2x256xf32>
    %58 = arith.addf %57, %56 : vector<2x256xf32>
    %59 = arith.divf %57, %58 : vector<2x256xf32>
    %60 = arith.mulf %54, %59 : vector<2x256xf32>
    %c0_35 = arith.constant 0 : index
    %c0_36 = arith.constant 0 : index
    %61 = vector.load %arg14[%c0_35, %c0_36] : memref<256x384xf32, #tpu.memory_space<vmem>>, vector<256x384xf32>
    %cst_37 = arith.constant dense<0.000000e+00> : vector<2x384xf32>
    %62 = tpu.matmul %60, %61, %cst_37 {dimension_numbers = #tpu.dot_dimension_numbers<[1], [0], [0], [1], [0, 0, 1, 1], [], []>} : vector<2x256xf32>, vector<256x384xf32>, vector<2x384xf32> -> vector<2x384xf32>
    %c0_38 = arith.constant 0 : index
    %c0_39 = arith.constant 0 : index
    %63 = vector.load %arg15[%c0_38, %c0_39] : memref<1x384xf32, #tpu.memory_space<vmem>>, vector<1x384xf32>
    %64 = vector.broadcast %63 : vector<1x384xf32> to vector<2x384xf32>
    %65 = arith.addf %62, %64 : vector<2x384xf32>
    %66 = arith.negf %65 : vector<2x384xf32>
    %67 = math.exp %66 : vector<2x384xf32>
    %cst_40 = arith.constant 1.000000e+00 : f32
    %68 = vector.broadcast %cst_40 : f32 to vector<2x384xf32>
    %69 = arith.addf %68, %67 : vector<2x384xf32>
    %70 = arith.divf %68, %69 : vector<2x384xf32>
    %71 = arith.mulf %65, %70 : vector<2x384xf32>
    %c0_41 = arith.constant 0 : index
    %c0_42 = arith.constant 0 : index
    %72 = vector.load %arg16[%c0_41, %c0_42] : memref<384x640xf32, #tpu.memory_space<vmem>>, vector<384x640xf32>
    %cst_43 = arith.constant dense<0.000000e+00> : vector<2x640xf32>
    %73 = tpu.matmul %71, %72, %cst_43 {dimension_numbers = #tpu.dot_dimension_numbers<[1], [0], [0], [1], [0, 0, 1, 1], [], []>} : vector<2x384xf32>, vector<384x640xf32>, vector<2x640xf32> -> vector<2x640xf32>
    %c0_44 = arith.constant 0 : index
    %c0_45 = arith.constant 0 : index
    %74 = vector.load %arg17[%c0_44, %c0_45] : memref<1x640xf32, #tpu.memory_space<vmem>>, vector<1x640xf32>
    %75 = vector.broadcast %74 : vector<1x640xf32> to vector<2x640xf32>
    %76 = arith.addf %73, %75 : vector<2x640xf32>
    %c0_46 = arith.constant 0 : index
    %c0_47 = arith.constant 0 : index
    %77 = vector.load %arg18[%c0_46, %c0_47] : memref<2x640xf32, #tpu.memory_space<vmem>>, vector<2x640xf32>
    tpu.vector_store %arg18[%c0_46, %c0_47], %76 {strides = array<i32>} : memref<2x640xf32, #tpu.memory_space<vmem>>, vector<2x640xf32>,
    return
  }
  func.func @transform_0(%arg0: i32) -> (i32, i32) {
    %c0_i32 = arith.constant 0 : i32
    %c0_i32_0 = arith.constant 0 : i32
    return %arg0, %c0_i32 : i32, i32
  }
  func.func @transform_1(%arg0: i32) -> (i32, i32) {
    %c0_i32 = arith.constant 0 : i32
    %c0_i32_0 = arith.constant 0 : i32
    %c0_i32_1 = arith.constant 0 : i32
    return %c0_i32, %c0_i32_0 : i32, i32
  }
  func.func @transform_2(%arg0: i32) -> (i32, i32) {
    %c0_i32 = arith.constant 0 : i32
    %c0_i32_0 = arith.constant 0 : i32
    %c0_i32_1 = arith.constant 0 : i32
    return %c0_i32, %c0_i32_0 : i32, i32
  }
  func.func @transform_3(%arg0: i32) -> (i32, i32) {
    %c0_i32 = arith.constant 0 : i32
    %c0_i32_0 = arith.constant 0 : i32
    %c0_i32_1 = arith.constant 0 : i32
    return %c0_i32, %c0_i32_0 : i32, i32
  }
  func.func @transform_4(%arg0: i32) -> (i32, i32) {
    %c0_i32 = arith.constant 0 : i32
    %c0_i32_0 = arith.constant 0 : i32
    %c0_i32_1 = arith.constant 0 : i32
    return %c0_i32, %c0_i32_0 : i32, i32
  }
  func.func @transform_5(%arg0: i32) -> (i32, i32) {
    %c0_i32 = arith.constant 0 : i32
    %c0_i32_0 = arith.constant 0 : i32
    %c0_i32_1 = arith.constant 0 : i32
    return %c0_i32, %c0_i32_0 : i32, i32
  }
  func.func @transform_6(%arg0: i32) -> (i32, i32) {
    %c0_i32 = arith.constant 0 : i32
    %c0_i32_0 = arith.constant 0 : i32
    %c0_i32_1 = arith.constant 0 : i32
    return %c0_i32, %c0_i32_0 : i32, i32
  }
  func.func @transform_7(%arg0: i32) -> (i32, i32) {
    %c0_i32 = arith.constant 0 : i32
    %c0_i32_0 = arith.constant 0 : i32
    %c0_i32_1 = arith.constant 0 : i32
    return %c0_i32, %c0_i32_0 : i32, i32
  }
  func.func @transform_8(%arg0: i32) -> (i32, i32) {
    %c0_i32 = arith.constant 0 : i32
    %c0_i32_0 = arith.constant 0 : i32
    %c0_i32_1 = arith.constant 0 : i32
    return %c0_i32, %c0_i32_0 : i32, i32
  }
  func.func @transform_9(%arg0: i32) -> (i32, i32) {
    %c0_i32 = arith.constant 0 : i32
    %c0_i32_0 = arith.constant 0 : i32
    %c0_i32_1 = arith.constant 0 : i32
    return %c0_i32, %c0_i32_0 : i32, i32
  }
  func.func @transform_10(%arg0: i32) -> (i32, i32) {
    %c0_i32 = arith.constant 0 : i32
    %c0_i32_0 = arith.constant 0 : i32
    %c0_i32_1 = arith.constant 0 : i32
    return %c0_i32, %c0_i32_0 : i32, i32
  }
  func.func @transform_11(%arg0: i32) -> (i32, i32) {
    %c0_i32 = arith.constant 0 : i32
    %c0_i32_0 = arith.constant 0 : i32
    %c0_i32_1 = arith.constant 0 : i32
    return %c0_i32, %c0_i32_0 : i32, i32
  }
  func.func @transform_12(%arg0: i32) -> (i32, i32) {
    %c0_i32 = arith.constant 0 : i32
    %c0_i32_0 = arith.constant 0 : i32
    %c0_i32_1 = arith.constant 0 : i32
    return %c0_i32, %c0_i32_0 : i32, i32
  }
  func.func @transform_13(%arg0: i32) -> (i32, i32) {
    %c0_i32 = arith.constant 0 : i32
    %c0_i32_0 = arith.constant 0 : i32
    %c0_i32_1 = arith.constant 0 : i32
    return %c0_i32, %c0_i32_0 : i32, i32
  }
  func.func @transform_14(%arg0: i32) -> (i32, i32) {
    %c0_i32 = arith.constant 0 : i32
    %c0_i32_0 = arith.constant 0 : i32
    %c0_i32_1 = arith.constant 0 : i32
    return %c0_i32, %c0_i32_0 : i32, i32
  }
  func.func @transform_15(%arg0: i32) -> (i32, i32) {
    %c0_i32 = arith.constant 0 : i32
    %c0_i32_0 = arith.constant 0 : i32
    %c0_i32_1 = arith.constant 0 : i32
    return %c0_i32, %c0_i32_0 : i32, i32
  }
  func.func @transform_16(%arg0: i32) -> (i32, i32) {
    %c0_i32 = arith.constant 0 : i32
    %c0_i32_0 = arith.constant 0 : i32
    %c0_i32_1 = arith.constant 0 : i32
    return %c0_i32, %c0_i32_0 : i32, i32
  }
  func.func @transform_17(%arg0: i32) -> (i32, i32) {
    %c0_i32 = arith.constant 0 : i32
    %c0_i32_0 = arith.constant 0 : i32
    return %arg0, %c0_i32 : i32, i32
  }
}

</mosaic_0001>

<llo_original>
// kernel: cae_forward_fused.1
$region0: #{cae_forward_fused.1}
  #allocation0 [shape = 'u32[]', space=smem, size = 0x4, offset = 0x4, fixed_abs, tag = 'smem constant byte address 0x4 - core index']
  #allocation1 [shape = 'u32[144,128]{1,0:T(1,128)}', space=vmem, size = 0x12000, scoped, tag = 'internal scratch']
  %s0 = inlined_call_operand.vmem [shape: f32[2,1024], index: 0, kind: input, shape index: {}]
  %s1 = inlined_call_operand.hbm [shape: f32[1024,512], index: 1, kind: input, shape index: {}]
  %s2 = inlined_call_operand.hbm [shape: f32[1,512], index: 2, kind: input, shape index: {}]
  %s3 = inlined_call_operand.hbm [shape: f32[512,256], index: 3, kind: input, shape index: {}]
  %s4 = inlined_call_operand.hbm [shape: f32[1,256], index: 4, kind: input, shape index: {}]
  %s5 = inlined_call_operand.hbm [shape: f32[256,128], index: 5, kind: input, shape index: {}]
  %s6 = inlined_call_operand.hbm [shape: f32[1,128], index: 6, kind: input, shape index: {}]
  %s7 = inlined_call_operand.hbm [shape: f32[128,128], index: 7, kind: input, shape index: {}]
  %s8 = inlined_call_operand.hbm [shape: f32[1,128], index: 8, kind: input, shape index: {}]
  %s9 = inlined_call_operand.hbm [shape: f32[128,128], index: 9, kind: input, shape index: {}]
  %s10 = inlined_call_operand.hbm [shape: f32[1,128], index: 10, kind: input, shape index: {}]
  %s11 = inlined_call_operand.hbm [shape: f32[128,256], index: 11, kind: input, shape index: {}]
  %s12 = inlined_call_operand.hbm [shape: f32[1,256], index: 12, kind: input, shape index: {}]
  %s13 = inlined_call_operand.hbm [shape: f32[256,384], index: 13, kind: input, shape index: {}]
  %s14 = inlined_call_operand.hbm [shape: f32[1,384], index: 14, kind: input, shape index: {}]
  %s15 = inlined_call_operand.hbm [shape: f32[384,640], index: 15, kind: input, shape index: {}]
  %s16 = inlined_call_operand.hbm [shape: f32[1,640], index: 16, kind: input, shape index: {}]
  %s17 = inlined_call_operand.vmem [shape: f32[2,640], index: 17, kind: output, shape index: {}]
  %s18 = sld [smem:[#allocation0]]
  $region142: #{cae_forward_fused.1} parent=0
    _
  %s20 = ssub.s32 1, %s18
  %s21 = scalar_select 0, %s20, %s18
  $region1: #{cae_forward_fused.1} parent=0
    #allocation2 [shape = 'u8[2097152]{0}', space=vmem, size = 0x200000, scoped, tag = 'input window, operand 1, single buffered']
    #allocation3 [shape = 's32[1]{0}', space=sflag, size = 0x4, scoped, tag = 'scoped memory for cae_forward_fused.1']
    #allocation4 [shape = 'u8[2048]{0}', space=vmem, size = 0x800, scoped, tag = 'input window, operand 2, single buffered']
    #allocation5 [shape = 's32[1]{0}', space=sflag, size = 0x4, scoped, tag = 'scoped memory for cae_forward_fused.1']
    #allocation6 [shape = 'u8[524288]{0}', space=vmem, size = 0x80000, scoped, tag = 'input window, operand 3, single buffered']
    #allocation7 [shape = 'u8[1024]{0}', space=vmem, size = 0x400, scoped, tag = 'input window, operand 4, single buffered']
    #allocation8 [shape = 's32[1]{0}', space=sflag, size = 0x4, scoped, tag = 'scoped memory for cae_forward_fused.1']
    #allocation9 [shape = 'u8[131072]{0}', space=vmem, size = 0x20000, scoped, tag = 'input window, operand 5, single buffered']
    #allocation10 [shape = 'u8[512]{0}', space=vmem, size = 0x400, scoped, tag = 'input window, operand 6, single buffered']
    #allocation11 [shape = 's32[1]{0}', space=sflag, size = 0x4, scoped, tag = 'scoped memory for cae_forward_fused.1']
    #allocation12 [shape = 'u8[65536]{0}', space=vmem, size = 0x10000, scoped, tag = 'input window, operand 7, single buffered']
    #allocation13 [shape = 'u8[512]{0}', space=vmem, size = 0x400, scoped, tag = 'input window, operand 8, single buffered']
    #allocation14 [shape = 's32[1]{0}', space=sflag, size = 0x4, scoped, tag = 'scoped memory for cae_forward_fused.1']
    #allocation15 [shape = 'u8[65536]{0}', space=vmem, size = 0x10000, scoped, tag = 'input window, operand 9, single buffered']
    #allocation16 [shape = 'u8[512]{0}', space=vmem, size = 0x400, scoped, tag = 'input window, operand 10, single buffered']
    #allocation17 [shape = 's32[1]{0}', space=sflag, size = 0x4, scoped, tag = 'scoped memory for cae_forward_fused.1']
    #allocation18 [shape = 'u8[131072]{0}', space=vmem, size = 0x20000, scoped, tag = 'input window, operand 11, single buffered']
    #allocation19 [shape = 'u8[1024]{0}', space=vmem, size = 0x400, scoped, tag = 'input window, operand 12, single buffered']
    #allocation20 [shape = 's32[1]{0}', space=sflag, size = 0x4, scoped, tag = 'scoped memory for cae_forward_fused.1']
    #allocation21 [shape = 'u8[393216]{0}', space=vmem, size = 0x60000, scoped, tag = 'input window, operand 13, single buffered']
    #allocation22 [shape = 'u8[1536]{0}', space=vmem, size = 0x800, scoped, tag = 'input window, operand 14, single buffered']
    #allocation23 [shape = 's32[1]{0}', space=sflag, size = 0x4, scoped, tag = 'scoped memory for cae_forward_fused.1']
    #allocation24 [shape = 'u8[983040]{0}', space=vmem, size = 0xf0000, scoped, tag = 'input window, operand 15, single buffered']
    #allocation25 [shape = 'u8[2560]{0}', space=vmem, size = 0xc00, scoped, tag = 'input window, operand 16, single buffered']
    #allocation26 [shape = 's32[1]{0}', space=sflag, size = 0x4, scoped, tag = 'scoped memory for cae_forward_fused.1']
    %22 = vsyncpa [#allocation3], 0
    %23 = vsyncpa [#allocation5], 0
    %24 = vsyncpa [#allocation8], 0
    %25 = vsyncpa [#allocation11], 0
    %26 = vsyncpa [#allocation14], 0
    %27 = vsyncpa [#allocation17], 0
    %28 = vsyncpa [#allocation20], 0
    %29 = vsyncpa [#allocation23], 0
    %30 = vsyncpa [#allocation26], 0
    // Predicated region
    $region2: #{cae_forward_fused.1} parent=1 // pred_check
      _
    $region3: #{cae_forward_fused.1} parent=1 // pred_check_branch
      %32 = sbr.rel (0) target = $region5
    $region4: #{cae_forward_fused.1} parent=1 // pred_region
      _
    $region5: #{cae_forward_fused.1} parent=1 // pred_fallthru
      _
    // Predicated region
    $region6: #{cae_forward_fused.1} parent=1 // pred_check
      _
    $region7: #{cae_forward_fused.1} parent=1 // pred_check_branch
      %34 = sbr.rel (0) target = $region9
    $region8: #{cae_forward_fused.1} parent=1 // pred_region
      %s36 = ssub.s32 65536, 65536
      %37 = vsyncadd [#allocation3], %s36
      %s38 = sshll.u32 [#allocation2], 4
      %s39 = int_to_ptr.vmem [resolvable:$true] %s38
      %44 = dma.hbm_to_vmem [thread:$0]  %s1, 65536, %s39, [#allocation3], 512, 512, 32
    $region9: #{cae_forward_fused.1} parent=1 // pred_fallthru
      _
    // Predicated region
    $region10: #{cae_forward_fused.1} parent=1 // pred_check
      _
    $region11: #{cae_forward_fused.1} parent=1 // pred_check_branch
      %46 = sbr.rel (0) target = $region13
    $region12: #{cae_forward_fused.1} parent=1 // pred_region
      %s48 = ssub.s32 64, 64
      %49 = vsyncadd [#allocation5], %s48
      %s51 = sshll.u32 [#allocation4], 4
      %s52 = int_to_ptr.vmem [resolvable:$true] %s51
      %54 = dma.hbm_to_vmem [thread:$0]  %s2, 64, %s52, [#allocation5]
    $region13: #{cae_forward_fused.1} parent=1 // pred_fallthru
      _
    // Predicated region
    $region14: #{cae_forward_fused.1} parent=1 // pred_check
      _
    $region15: #{cae_forward_fused.1} parent=1 // pred_check_branch
      %56 = sbr.rel (0) target = $region17
    $region16: #{cae_forward_fused.1} parent=1 // pred_region
      %s58 = ssub.s32 16384, 16384
      %59 = vsyncadd [#allocation5], %s58
      %s60 = sshll.u32 [#allocation6], 4
      %s61 = int_to_ptr.vmem [resolvable:$true] %s60
      %66 = dma.hbm_to_vmem [thread:$0]  %s3, 16384, %s61, [#allocation5], 256, 256, 16
    $region17: #{cae_forward_fused.1} parent=1 // pred_fallthru
      _
    // Predicated region
    $region18: #{cae_forward_fused.1} parent=1 // pred_check
      _
    $region19: #{cae_forward_fused.1} parent=1 // pred_check_branch
      %68 = sbr.rel (0) target = $region21
    $region20: #{cae_forward_fused.1} parent=1 // pred_region
      %s70 = ssub.s32 32, 32
      %71 = vsyncadd [#allocation8], %s70
      %s73 = sshll.u32 [#allocation7], 4
      %s74 = int_to_ptr.vmem [resolvable:$true] %s73
      %76 = dma.hbm_to_vmem [thread:$0]  %s4, 32, %s74, [#allocation8]
    $region21: #{cae_forward_fused.1} parent=1 // pred_fallthru
      _
    // Predicated region
    $region22: #{cae_forward_fused.1} parent=1 // pred_check
      _
    $region23: #{cae_forward_fused.1} parent=1 // pred_check_branch
      %78 = sbr.rel (0) target = $region25
    $region24: #{cae_forward_fused.1} parent=1 // pred_region
      %s80 = ssub.s32 4096, 4096
      %81 = vsyncadd [#allocation8], %s80
      %s82 = sshll.u32 [#allocation9], 4
      %s83 = int_to_ptr.vmem [resolvable:$true] %s82
      %88 = dma.hbm_to_vmem [thread:$0]  %s5, 4096, %s83, [#allocation8], 128, 128, 8
    $region25: #{cae_forward_fused.1} parent=1 // pred_fallthru
      _
    // Predicated region
    $region26: #{cae_forward_fused.1} parent=1 // pred_check
      _
    $region27: #{cae_forward_fused.1} parent=1 // pred_check_branch
      %90 = sbr.rel (0) target = $region29
    $region28: #{cae_forward_fused.1} parent=1 // pred_region
      %s92 = ssub.s32 16, 16
      %93 = vsyncadd [#allocation11], %s92
      %s95 = sshll.u32 [#allocation10], 4
      %s96 = int_to_ptr.vmem [resolvable:$true] %s95
      %98 = dma.hbm_to_vmem [thread:$0]  %s6, 16, %s96, [#allocation11]
    $region29: #{cae_forward_fused.1} parent=1 // pred_fallthru
      _
    // Predicated region
    $region30: #{cae_forward_fused.1} parent=1 // pred_check
      _
    $region31: #{cae_forward_fused.1} parent=1 // pred_check_branch
      %100 = sbr.rel (0) target = $region33
    $region32: #{cae_forward_fused.1} parent=1 // pred_region
      %s102 = ssub.s32 2048, 2048
      %103 = vsyncadd [#allocation11], %s102
      %s104 = sshll.u32 [#allocation12], 4
      %s105 = int_to_ptr.vmem [resolvable:$true] %s104
      %110 = dma.hbm_to_vmem [thread:$0]  %s7, 2048, %s105, [#allocation11], 128, 128, 8
    $region33: #{cae_forward_fused.1} parent=1 // pred_fallthru
      _
    // Predicated region
    $region34: #{cae_forward_fused.1} parent=1 // pred_check
      _
    $region35: #{cae_forward_fused.1} parent=1 // pred_check_branch
      %112 = sbr.rel (0) target = $region37
    $region36: #{cae_forward_fused.1} parent=1 // pred_region
      %s114 = ssub.s32 16, 16
      %115 = vsyncadd [#allocation14], %s114
      %s117 = sshll.u32 [#allocation13], 4
      %s118 = int_to_ptr.vmem [resolvable:$true] %s117
      %120 = dma.hbm_to_vmem [thread:$0]  %s8, 16, %s118, [#allocation14]
    $region37: #{cae_forward_fused.1} parent=1 // pred_fallthru
      _
    // Predicated region
    $region38: #{cae_forward_fused.1} parent=1 // pred_check
      _
    $region39: #{cae_forward_fused.1} parent=1 // pred_check_branch
      %122 = sbr.rel (0) target = $region41
    $region40: #{cae_forward_fused.1} parent=1 // pred_region
      %s124 = ssub.s32 2048, 2048
      %125 = vsyncadd [#allocation14], %s124
      %s126 = sshll.u32 [#allocation15], 4
      %s127 = int_to_ptr.vmem [resolvable:$true] %s126
      %132 = dma.hbm_to_vmem [thread:$0]  %s9, 2048, %s127, [#allocation14], 128, 128, 8
    $region41: #{cae_forward_fused.1} parent=1 // pred_fallthru
      _
    // Predicated region
    $region42: #{cae_forward_fused.1} parent=1 // pred_check
      _
    $region43: #{cae_forward_fused.1} parent=1 // pred_check_branch
      %134 = sbr.rel (0) target = $region45
    $region44: #{cae_forward_fused.1} parent=1 // pred_region
      %s136 = ssub.s32 16, 16
      %137 = vsyncadd [#allocation17], %s136
      %s139 = sshll.u32 [#allocation16], 4
      %s140 = int_to_ptr.vmem [resolvable:$true] %s139
      %142 = dma.hbm_to_vmem [thread:$0]  %s10, 16, %s140, [#allocation17]
    $region45: #{cae_forward_fused.1} parent=1 // pred_fallthru
      _
    // Predicated region
    $region46: #{cae_forward_fused.1} parent=1 // pred_check
      _
    $region47: #{cae_forward_fused.1} parent=1 // pred_check_branch
      %144 = sbr.rel (0) target = $region49
    $region48: #{cae_forward_fused.1} parent=1 // pred_region
      %s146 = ssub.s32 4096, 4096
      %147 = vsyncadd [#allocation17], %s146
      %s148 = sshll.u32 [#allocation18], 4
      %s149 = int_to_ptr.vmem [resolvable:$true] %s148
      %154 = dma.hbm_to_vmem [thread:$0]  %s11, 4096, %s149, [#allocation17], 256, 256, 16
    $region49: #{cae_forward_fused.1} parent=1 // pred_fallthru
      _
    // Predicated region
    $region50: #{cae_forward_fused.1} parent=1 // pred_check
      _
    $region51: #{cae_forward_fused.1} parent=1 // pred_check_branch
      %156 = sbr.rel (0) target = $region53
    $region52: #{cae_forward_fused.1} parent=1 // pred_region
      %s158 = ssub.s32 32, 32
      %159 = vsyncadd [#allocation20], %s158
      %s161 = sshll.u32 [#allocation19], 4
      %s162 = int_to_ptr.vmem [resolvable:$true] %s161
      %164 = dma.hbm_to_vmem [thread:$0]  %s12, 32, %s162, [#allocation20]
    $region53: #{cae_forward_fused.1} parent=1 // pred_fallthru
      _
    // Predicated region
    $region54: #{cae_forward_fused.1} parent=1 // pred_check
      _
    $region55: #{cae_forward_fused.1} parent=1 // pred_check_branch
      %166 = sbr.rel (0) target = $region57
    $region56: #{cae_forward_fused.1} parent=1 // pred_region
      %s168 = ssub.s32 12288, 12288
      %169 = vsyncadd [#allocation20], %s168
      %s170 = sshll.u32 [#allocation21], 4
      %s171 = int_to_ptr.vmem [resolvable:$true] %s170
      %176 = dma.hbm_to_vmem [thread:$0]  %s13, 12288, %s171, [#allocation20], 384, 384, 24
    $region57: #{cae_forward_fused.1} parent=1 // pred_fallthru
      _
    // Predicated region
    $region58: #{cae_forward_fused.1} parent=1 // pred_check
      _
    $region59: #{cae_forward_fused.1} parent=1 // pred_check_branch
      %178 = sbr.rel (0) target = $region61
    $region60: #{cae_forward_fused.1} parent=1 // pred_region
      %s180 = ssub.s32 48, 48
      %181 = vsyncadd [#allocation23], %s180
      %s183 = sshll.u32 [#allocation22], 4
      %s184 = int_to_ptr.vmem [resolvable:$true] %s183
      %186 = dma.hbm_to_vmem [thread:$0]  %s14, 48, %s184, [#allocation23]
    $region61: #{cae_forward_fused.1} parent=1 // pred_fallthru
      _
    // Predicated region
    $region62: #{cae_forward_fused.1} parent=1 // pred_check
      _
    $region63: #{cae_forward_fused.1} parent=1 // pred_check_branch
      %188 = sbr.rel (0) target = $region65
    $region64: #{cae_forward_fused.1} parent=1 // pred_region
      %s190 = ssub.s32 30720, 30720
      %191 = vsyncadd [#allocation23], %s190
      %s192 = sshll.u32 [#allocation24], 4
      %s193 = int_to_ptr.vmem [resolvable:$true] %s192
      %198 = dma.hbm_to_vmem [thread:$0]  %s15, 30720, %s193, [#allocation23], 640, 640, 40
    $region65: #{cae_forward_fused.1} parent=1 // pred_fallthru
      _
    // Predicated region
    $region66: #{cae_forward_fused.1} parent=1 // pred_check
      _
    $region67: #{cae_forward_fused.1} parent=1 // pred_check_branch
      %200 = sbr.rel (0) target = $region69
    $region68: #{cae_forward_fused.1} parent=1 // pred_region
      %s202 = ssub.s32 80, 80
      %203 = vsyncadd [#allocation26], %s202
      %s205 = sshll.u32 [#allocation25], 4
      %s206 = int_to_ptr.vmem [resolvable:$true] %s205
      %208 = dma.hbm_to_vmem [thread:$0]  %s16, 80, %s206, [#allocation26]
    $region69: #{cae_forward_fused.1} parent=1 // pred_fallthru
      _
    // Predicated region
    $region70: #{cae_forward_fused.1} parent=1 // pred_check
      _
    $region71: #{cae_forward_fused.1} parent=1 // pred_check_branch
      %210 = sbr.rel (0) target = $region73
    $region72: #{cae_forward_fused.1} parent=1 // pred_region
      %211 = dma.done [#allocation3], 65536
    $region73: #{cae_forward_fused.1} parent=1 // pred_fallthru
      _
    // Predicated region
    $region74: #{cae_forward_fused.1} parent=1 // pred_check
      _
    $region75: #{cae_forward_fused.1} parent=1 // pred_check_branch
      %213 = sbr.rel (0) target = $region77
    $region76: #{cae_forward_fused.1} parent=1 // pred_region
      %214 = dma.done [#allocation5], 64
    $region77: #{cae_forward_fused.1} parent=1 // pred_fallthru
      _
    // Predicated region
    $region78: #{cae_forward_fused.1} parent=1 // pred_check
      _
    $region79: #{cae_forward_fused.1} parent=1 // pred_check_branch
      %216 = sbr.rel (0) target = $region81
    $region80: #{cae_forward_fused.1} parent=1 // pred_region
      %217 = dma.done [#allocation5], 16384
    $region81: #{cae_forward_fused.1} parent=1 // pred_fallthru
      _
    // Predicated region
    $region82: #{cae_forward_fused.1} parent=1 // pred_check
      _
    $region83: #{cae_forward_fused.1} parent=1 // pred_check_branch
      %219 = sbr.rel (0) target = $region85
    $region84: #{cae_forward_fused.1} parent=1 // pred_region
      %220 = dma.done [#allocation8], 32
    $region85: #{cae_forward_fused.1} parent=1 // pred_fallthru
      _
    // Predicated region
    $region86: #{cae_forward_fused.1} parent=1 // pred_check
      _
    $region87: #{cae_forward_fused.1} parent=1 // pred_check_branch
      %222 = sbr.rel (0) target = $region89
    $region88: #{cae_forward_fused.1} parent=1 // pred_region
      %223 = dma.done [#allocation8], 4096
    $region89: #{cae_forward_fused.1} parent=1 // pred_fallthru
      _
    // Predicated region
    $region90: #{cae_forward_fused.1} parent=1 // pred_check
      _
    $region91: #{cae_forward_fused.1} parent=1 // pred_check_branch
      %225 = sbr.rel (0) target = $region93
    $region92: #{cae_forward_fused.1} parent=1 // pred_region
      %226 = dma.done [#allocation11], 16
    $region93: #{cae_forward_fused.1} parent=1 // pred_fallthru
      _
    // Predicated region
    $region94: #{cae_forward_fused.1} parent=1 // pred_check
      _
    $region95: #{cae_forward_fused.1} parent=1 // pred_check_branch
      %228 = sbr.rel (0) target = $region97
    $region96: #{cae_forward_fused.1} parent=1 // pred_region
      %229 = dma.done [#allocation11], 2048
    $region97: #{cae_forward_fused.1} parent=1 // pred_fallthru
      _
    // Predicated region
    $region98: #{cae_forward_fused.1} parent=1 // pred_check
      _
    $region99: #{cae_forward_fused.1} parent=1 // pred_check_branch
      %231 = sbr.rel (0) target = $region101
    $region100: #{cae_forward_fused.1} parent=1 // pred_region
      %232 = dma.done [#allocation14], 16
    $region101: #{cae_forward_fused.1} parent=1 // pred_fallthru
      _
    // Predicated region
    $region102: #{cae_forward_fused.1} parent=1 // pred_check
      _
    $region103: #{cae_forward_fused.1} parent=1 // pred_check_branch
      %234 = sbr.rel (0) target = $region105
    $region104: #{cae_forward_fused.1} parent=1 // pred_region
      %235 = dma.done [#allocation14], 2048
    $region105: #{cae_forward_fused.1} parent=1 // pred_fallthru
      _
    // Predicated region
    $region106: #{cae_forward_fused.1} parent=1 // pred_check
      _
    $region107: #{cae_forward_fused.1} parent=1 // pred_check_branch
      %237 = sbr.rel (0) target = $region109
    $region108: #{cae_forward_fused.1} parent=1 // pred_region
      %238 = dma.done [#allocation17], 16
    $region109: #{cae_forward_fused.1} parent=1 // pred_fallthru
      _
    // Predicated region
    $region110: #{cae_forward_fused.1} parent=1 // pred_check
      _
    $region111: #{cae_forward_fused.1} parent=1 // pred_check_branch
      %240 = sbr.rel (0) target = $region113
    $region112: #{cae_forward_fused.1} parent=1 // pred_region
      %241 = dma.done [#allocation17], 4096
    $region113: #{cae_forward_fused.1} parent=1 // pred_fallthru
      _
    // Predicated region
    $region114: #{cae_forward_fused.1} parent=1 // pred_check
      _
    $region115: #{cae_forward_fused.1} parent=1 // pred_check_branch
      %243 = sbr.rel (0) target = $region117
    $region116: #{cae_forward_fused.1} parent=1 // pred_region
      %244 = dma.done [#allocation20], 32
    $region117: #{cae_forward_fused.1} parent=1 // pred_fallthru
      _
    // Predicated region
    $region118: #{cae_forward_fused.1} parent=1 // pred_check
      _
    $region119: #{cae_forward_fused.1} parent=1 // pred_check_branch
      %246 = sbr.rel (0) target = $region121
    $region120: #{cae_forward_fused.1} parent=1 // pred_region
      %247 = dma.done [#allocation20], 12288
    $region121: #{cae_forward_fused.1} parent=1 // pred_fallthru
      _
    // Predicated region
    $region122: #{cae_forward_fused.1} parent=1 // pred_check
      _
    $region123: #{cae_forward_fused.1} parent=1 // pred_check_branch
      %249 = sbr.rel (0) target = $region125
    $region124: #{cae_forward_fused.1} parent=1 // pred_region
      %250 = dma.done [#allocation23], 48
    $region125: #{cae_forward_fused.1} parent=1 // pred_fallthru
      _
    // Predicated region
    $region126: #{cae_forward_fused.1} parent=1 // pred_check
      _
    $region127: #{cae_forward_fused.1} parent=1 // pred_check_branch
      %252 = sbr.rel (0) target = $region129
    $region128: #{cae_forward_fused.1} parent=1 // pred_region
      %253 = dma.done [#allocation23], 30720
    $region129: #{cae_forward_fused.1} parent=1 // pred_fallthru
      _
    // Predicated region
    $region130: #{cae_forward_fused.1} parent=1 // pred_check
      _
    $region131: #{cae_forward_fused.1} parent=1 // pred_check_branch
      %255 = sbr.rel (0) target = $region133
    $region132: #{cae_forward_fused.1} parent=1 // pred_region
      %256 = dma.done [#allocation26], 80
    $region133: #{cae_forward_fused.1} parent=1 // pred_fallthru
      _
    %v257 = vld [vmem:[%s0] sm:$0xff]
    %v258 = vld [vmem:[%s0 + $0x8] sm:$0xff]
    %v259 = vld [vmem:[#allocation2] sm:$0xff]
    %v260 = vld [vmem:[#allocation2 + $0x8] sm:$0xff]
    %v261 = vld [vmem:[#allocation2 + $0x10] sm:$0xff]
    %v262 = vld [vmem:[#allocation2 + $0x18] sm:$0xff]
    %v263 = vld [vmem:[#allocation2 + $0x20] sm:$0xff]
    %v264 = vld [vmem:[#allocation2 + $0x28] sm:$0xff]
    %v265 = vld [vmem:[#allocation2 + $0x30] sm:$0xff]
    %v266 = vld [vmem:[#allocation2 + $0x38] sm:$0xff]
    %v267 = vld [vmem:[#allocation2 + $0x40] sm:$0xff]
    %v268 = vld [vmem:[#allocation2 + $0x48] sm:$0xff]
    %v269 = vld [vmem:[#allocation2 + $0x50] sm:$0xff]
    %v270 = vld [vmem:[#allocation2 + $0x58] sm:$0xff]
    %v271 = vld [vmem:[#allocation2 + $0x60] sm:$0xff]
    %v272 = vld [vmem:[#allocation2 + $0x68] sm:$0xff]
    %v273 = vld [vmem:[#allocation2 + $0x70] sm:$0xff]
    %v274 = vld [vmem:[#allocation2 + $0x78] sm:$0xff]
    %v275 = vld [vmem:[#allocation2 + $0x80] sm:$0xff]
    %v276 = vld [vmem:[#allocation2 + $0x88] sm:$0xff]
    %v277 = vld [vmem:[#allocation2 + $0x90] sm:$0xff]
    %v278 = vld [vmem:[#allocation2 + $0x98] sm:$0xff]
    %v279 = vld [vmem:[#allocation2 + $0xa0] sm:$0xff]
    %v280 = vld [vmem:[#allocation2 + $0xa8] sm:$0xff]
    %v281 = vld [vmem:[#allocation2 + $0xb0] sm:$0xff]
    %v282 = vld [vmem:[#allocation2 + $0xb8] sm:$0xff]
    %v283 = vld [vmem:[#allocation2 + $0xc0] sm:$0xff]
    %v284 = vld [vmem:[#allocation2 + $0xc8] sm:$0xff]
    %v285 = vld [vmem:[#allocation2 + $0xd0] sm:$0xff]
    %v286 = vld [vmem:[#allocation2 + $0xd8] sm:$0xff]
    %v287 = vld [vmem:[#allocation2 + $0xe0] sm:$0xff]
    %v288 = vld [vmem:[#allocation2 + $0xe8] sm:$0xff]
    %v289 = vld [vmem:[#allocation2 + $0xf0] sm:$0xff]
    %v290 = vld [vmem:[#allocation2 + $0xf8] sm:$0xff]
    %v291 = vld [vmem:[#allocation2 + $0x100] sm:$0xff]
    %v292 = vld [vmem:[#allocation2 + $0x108] sm:$0xff]
    %v293 = vld [vmem:[#allocation2 + $0x110] sm:$0xff]
    %v294 = vld [vmem:[#allocation2 + $0x118] sm:$0xff]
    %v295 = vld [vmem:[#allocation2 + $0x120] sm:$0xff]
    %v296 = vld [vmem:[#allocation2 + $0x128] sm:$0xff]
    %v297 = vld [vmem:[#allocation2 + $0x130] sm:$0xff]
    %v298 = vld [vmem:[#allocation2 + $0x138] sm:$0xff]
    %v299 = vld [vmem:[#allocation2 + $0x140] sm:$0xff]
    %v300 = vld [vmem:[#allocation2 + $0x148] sm:$0xff]
    %v301 = vld [vmem:[#allocation2 + $0x150] sm:$0xff]
    %v302 = vld [vmem:[#allocation2 + $0x158] sm:$0xff]
    %v303 = vld [vmem:[#allocation2 + $0x160] sm:$0xff]
    %v304 = vld [vmem:[#allocation2 + $0x168] sm:$0xff]
    %v305 = vld [vmem:[#allocation2 + $0x170] sm:$0xff]
    %v306 = vld [vmem:[#allocation2 + $0x178] sm:$0xff]
    %v307 = vld [vmem:[#allocation2 + $0x180] sm:$0xff]
    %v308 = vld [vmem:[#allocation2 + $0x188] sm:$0xff]
    %v309 = vld [vmem:[#allocation2 + $0x190] sm:$0xff]
    %v310 = vld [vmem:[#allocation2 + $0x198] sm:$0xff]
    %v311 = vld [vmem:[#allocation2 + $0x1a0] sm:$0xff]
    %v312 = vld [vmem:[#allocation2 + $0x1a8] sm:$0xff]
    %v313 = vld [vmem:[#allocation2 + $0x1b0] sm:$0xff]
    %v314 = vld [vmem:[#allocation2 + $0x1b8] sm:$0xff]
    %v315 = vld [vmem:[#allocation2 + $0x1c0] sm:$0xff]
    %v316 = vld [vmem:[#allocation2 + $0x1c8] sm:$0xff]
    %v317 = vld [vmem:[#allocation2 + $0x1d0] sm:$0xff]
    %v318 = vld [vmem:[#allocation2 + $0x1d8] sm:$0xff]
    %v319 = vld [vmem:[#allocation2 + $0x1e0] sm:$0xff]
    %v320 = vld [vmem:[#allocation2 + $0x1e8] sm:$0xff]
    %v321 = vld [vmem:[#allocation2 + $0x1f0] sm:$0xff]
    %v322 = vld [vmem:[#allocation2 + $0x1f8] sm:$0xff]
    %v323 = vld [vmem:[#allocation2 + $0x200] sm:$0xff]
    %v324 = vld [vmem:[#allocation2 + $0x208] sm:$0xff]
    %v325 = vld [vmem:[#allocation2 + $0x210] sm:$0xff]
    %v326 = vld [vmem:[#allocation2 + $0x218] sm:$0xff]
    %v327 = vld [vmem:[#allocation2 + $0x220] sm:$0xff]
    %v328 = vld [vmem:[#allocation2 + $0x228] sm:$0xff]
    %v329 = vld [vmem:[#allocation2 + $0x230] sm:$0xff]
    %v330 = vld [vmem:[#allocation2 + $0x238] sm:$0xff]
    %v331 = vld [vmem:[#allocation2 + $0x240] sm:$0xff]
    %v332 = vld [vmem:[#allocation2 + $0x248] sm:$0xff]
    %v333 = vld [vmem:[#allocation2 + $0x250] sm:$0xff]
    %v334 = vld [vmem:[#allocation2 + $0x258] sm:$0xff]
    %v335 = vld [vmem:[#allocation2 + $0x260] sm:$0xff]
    %v336 = vld [vmem:[#allocation2 + $0x268] sm:$0xff]
    %v337 = vld [vmem:[#allocation2 + $0x270] sm:$0xff]
    %v338 = vld [vmem:[#allocation2 + $0x278] sm:$0xff]
    %v339 = vld [vmem:[#allocation2 + $0x280] sm:$0xff]
    %v340 = vld [vmem:[#allocation2 + $0x288] sm:$0xff]
    %v341 = vld [vmem:[#allocation2 + $0x290] sm:$0xff]
    %v342 = vld [vmem:[#allocation2 + $0x298] sm:$0xff]
    %v343 = vld [vmem:[#allocation2 + $0x2a0] sm:$0xff]
    %v344 = vld [vmem:[#allocation2 + $0x2a8] sm:$0xff]
    %v345 = vld [vmem:[#allocation2 + $0x2b0] sm:$0xff]
    %v346 = vld [vmem:[#allocation2 + $0x2b8] sm:$0xff]
    %v347 = vld [vmem:[#allocation2 + $0x2c0] sm:$0xff]
    %v348 = vld [vmem:[#allocation2 + $0x2c8] sm:$0xff]
    %v349 = vld [vmem:[#allocation2 + $0x2d0] sm:$0xff]
    %v350 = vld [vmem:[#allocation2 + $0x2d8] sm:$0xff]
    %v351 = vld [vmem:[#allocation2 + $0x2e0] sm:$0xff]
    %v352 = vld [vmem:[#allocation2 + $0x2e8] sm:$0xff]
    %v353 = vld [vmem:[#allocation2 + $0x2f0] sm:$0xff]
    %v354 = vld [vmem:[#allocation2 + $0x2f8] sm:$0xff]
    %v355 = vld [vmem:[#allocation2 + $0x300] sm:$0xff]
    %v356 = vld [vmem:[#allocation2 + $0x308] sm:$0xff]
    %v357 = vld [vmem:[#allocation2 + $0x310] sm:$0xff]
    %v358 = vld [vmem:[#allocation2 + $0x318] sm:$0xff]
    %v359 = vld [vmem:[#allocation2 + $0x320] sm:$0xff]
    %v360 = vld [vmem:[#allocation2 + $0x328] sm:$0xff]
    %v361 = vld [vmem:[#allocation2 + $0x330] sm:$0xff]
    %v362 = vld [vmem:[#allocation2 + $0x338] sm:$0xff]
    %v363 = vld [vmem:[#allocation2 + $0x340] sm:$0xff]
    %v364 = vld [vmem:[#allocation2 + $0x348] sm:$0xff]
    %v365 = vld [vmem:[#allocation2 + $0x350] sm:$0xff]
    %v366 = vld [vmem:[#allocation2 + $0x358] sm:$0xff]
    %v367 = vld [vmem:[#allocation2 + $0x360] sm:$0xff]
    %v368 = vld [vmem:[#allocation2 + $0x368] sm:$0xff]
    %v369 = vld [vmem:[#allocation2 + $0x370] sm:$0xff]
    %v370 = vld [vmem:[#allocation2 + $0x378] sm:$0xff]
    %v371 = vld [vmem:[#allocation2 + $0x380] sm:$0xff]
    %v372 = vld [vmem:[#allocation2 + $0x388] sm:$0xff]
    %v373 = vld [vmem:[#allocation2 + $0x390] sm:$0xff]
    %v374 = vld [vmem:[#allocation2 + $0x398] sm:$0xff]
    %v375 = vld [vmem:[#allocation2 + $0x3a0] sm:$0xff]
    %v376 = vld [vmem:[#allocation2 + $0x3a8] sm:$0xff]
    %v377 = vld [vmem:[#allocation2 + $0x3b0] sm:$0xff]
    %v378 = vld [vmem:[#allocation2 + $0x3b8] sm:$0xff]
    %v379 = vld [vmem:[#allocation2 + $0x3c0] sm:$0xff]
    %v380 = vld [vmem:[#allocation2 + $0x3c8] sm:$0xff]
    %v381 = vld [vmem:[#allocation2 + $0x3d0] sm:$0xff]
    %v382 = vld [vmem:[#allocation2 + $0x3d8] sm:$0xff]
    %v383 = vld [vmem:[#allocation2 + $0x3e0] sm:$0xff]
    %v384 = vld [vmem:[#allocation2 + $0x3e8] sm:$0xff]
    %v385 = vld [vmem:[#allocation2 + $0x3f0] sm:$0xff]
    %v386 = vld [vmem:[#allocation2 + $0x3f8] sm:$0xff]
    %v387 = vld [vmem:[#allocation2 + $0x400] sm:$0xff]
    %v388 = vld [vmem:[#allocation2 + $0x408] sm:$0xff]
    %v389 = vld [vmem:[#allocation2 + $0x410] sm:$0xff]
    %v390 = vld [vmem:[#allocation2 + $0x418] sm:$0xff]
    %v391 = vld [vmem:[#allocation2 + $0x420] sm:$0xff]
    %v392 = vld [vmem:[#allocation2 + $0x428] sm:$0xff]
    %v393 = vld [vmem:[#allocation2 + $0x430] sm:$0xff]
    %v394 = vld [vmem:[#allocation2 + $0x438] sm:$0xff]
    %v395 = vld [vmem:[#allocation2 + $0x440] sm:$0xff]
    %v396 = vld [vmem:[#allocation2 + $0x448] sm:$0xff]
    %v397 = vld [vmem:[#allocation2 + $0x450] sm:$0xff]
    %v398 = vld [vmem:[#allocation2 + $0x458] sm:$0xff]
    %v399 = vld [vmem:[#allocation2 + $0x460] sm:$0xff]
    %v400 = vld [vmem:[#allocation2 + $0x468] sm:$0xff]
    %v401 = vld [vmem:[#allocation2 + $0x470] sm:$0xff]
    %v402 = vld [vmem:[#allocation2 + $0x478] sm:$0xff]
    %v403 = vld [vmem:[#allocation2 + $0x480] sm:$0xff]
    %v404 = vld [vmem:[#allocation2 + $0x488] sm:$0xff]
    %v405 = vld [vmem:[#allocation2 + $0x490] sm:$0xff]
    %v406 = vld [vmem:[#allocation2 + $0x498] sm:$0xff]
    %v407 = vld [vmem:[#allocation2 + $0x4a0] sm:$0xff]
    %v408 = vld [vmem:[#allocation2 + $0x4a8] sm:$0xff]
    %v409 = vld [vmem:[#allocation2 + $0x4b0] sm:$0xff]
    %v410 = vld [vmem:[#allocation2 + $0x4b8] sm:$0xff]
    %v411 = vld [vmem:[#allocation2 + $0x4c0] sm:$0xff]
    %v412 = vld [vmem:[#allocation2 + $0x4c8] sm:$0xff]
    %v413 = vld [vmem:[#allocation2 + $0x4d0] sm:$0xff]
    %v414 = vld [vmem:[#allocation2 + $0x4d8] sm:$0xff]
    %v415 = vld [vmem:[#allocation2 + $0x4e0] sm:$0xff]
    %v416 = vld [vmem:[#allocation2 + $0x4e8] sm:$0xff]
    %v417 = vld [vmem:[#allocation2 + $0x4f0] sm:$0xff]
    %v418 = vld [vmem:[#allocation2 + $0x4f8] sm:$0xff]
    %v419 = vld [vmem:[#allocation2 + $0x500] sm:$0xff]
    %v420 = vld [vmem:[#allocation2 + $0x508] sm:$0xff]
    %v421 = vld [vmem:[#allocation2 + $0x510] sm:$0xff]
    %v422 = vld [vmem:[#allocation2 + $0x518] sm:$0xff]
    %v423 = vld [vmem:[#allocation2 + $0x520] sm:$0xff]
    %v424 = vld [vmem:[#allocation2 + $0x528] sm:$0xff]
    %v425 = vld [vmem:[#allocation2 + $0x530] sm:$0xff]
    %v426 = vld [vmem:[#allocation2 + $0x538] sm:$0xff]
    %v427 = vld [vmem:[#allocation2 + $0x540] sm:$0xff]
    %v428 = vld [vmem:[#allocation2 + $0x548] sm:$0xff]
    %v429 = vld [vmem:[#allocation2 + $0x550] sm:$0xff]
    %v430 = vld [vmem:[#allocation2 + $0x558] sm:$0xff]
    %v431 = vld [vmem:[#allocation2 + $0x560] sm:$0xff]
    %v432 = vld [vmem:[#allocation2 + $0x568] sm:$0xff]
    %v433 = vld [vmem:[#allocation2 + $0x570] sm:$0xff]
    %v434 = vld [vmem:[#allocation2 + $0x578] sm:$0xff]
    %v435 = vld [vmem:[#allocation2 + $0x580] sm:$0xff]
    %v436 = vld [vmem:[#allocation2 + $0x588] sm:$0xff]
    %v437 = vld [vmem:[#allocation2 + $0x590] sm:$0xff]
    %v438 = vld [vmem:[#allocation2 + $0x598] sm:$0xff]
    %v439 = vld [vmem:[#allocation2 + $0x5a0] sm:$0xff]
    %v440 = vld [vmem:[#allocation2 + $0x5a8] sm:$0xff]
    %v441 = vld [vmem:[#allocation2 + $0x5b0] sm:$0xff]
    %v442 = vld [vmem:[#allocation2 + $0x5b8] sm:$0xff]
    %v443 = vld [vmem:[#allocation2 + $0x5c0] sm:$0xff]
    %v444 = vld [vmem:[#allocation2 + $0x5c8] sm:$0xff]
    %v445 = vld [vmem:[#allocation2 + $0x5d0] sm:$0xff]
    %v446 = vld [vmem:[#allocation2 + $0x5d8] sm:$0xff]
    %v447 = vld [vmem:[#allocation2 + $0x5e0] sm:$0xff]
    %v448 = vld [vmem:[#allocation2 + $0x5e8] sm:$0xff]
    %v449 = vld [vmem:[#allocation2 + $0x5f0] sm:$0xff]
    %v450 = vld [vmem:[#allocation2 + $0x5f8] sm:$0xff]
    %v451 = vld [vmem:[#allocation2 + $0x600] sm:$0xff]
    %v452 = vld [vmem:[#allocation2 + $0x608] sm:$0xff]
    %v453 = vld [vmem:[#allocation2 + $0x610] sm:$0xff]
    %v454 = vld [vmem:[#allocation2 + $0x618] sm:$0xff]
    %v455 = vld [vmem:[#allocation2 + $0x620] sm:$0xff]
    %v456 = vld [vmem:[#allocation2 + $0x628] sm:$0xff]
    %v457 = vld [vmem:[#allocation2 + $0x630] sm:$0xff]
    %v458 = vld [vmem:[#allocation2 + $0x638] sm:$0xff]
    %v459 = vld [vmem:[#allocation2 + $0x640] sm:$0xff]
    %v460 = vld [vmem:[#allocation2 + $0x648] sm:$0xff]
    %v461 = vld [vmem:[#allocation2 + $0x650] sm:$0xff]
    %v462 = vld [vmem:[#allocation2 + $0x658] sm:$0xff]
    %v463 = vld [vmem:[#allocation2 + $0x660] sm:$0xff]
    %v464 = vld [vmem:[#allocation2 + $0x668] sm:$0xff]
    %v465 = vld [vmem:[#allocation2 + $0x670] sm:$0xff]
    %v466 = vld [vmem:[#allocation2 + $0x678] sm:$0xff]
    %v467 = vld [vmem:[#allocation2 + $0x680] sm:$0xff]
    %v468 = vld [vmem:[#allocation2 + $0x688] sm:$0xff]
    %v469 = vld [vmem:[#allocation2 + $0x690] sm:$0xff]
    %v470 = vld [vmem:[#allocation2 + $0x698] sm:$0xff]
    %v471 = vld [vmem:[#allocation2 + $0x6a0] sm:$0xff]
    %v472 = vld [vmem:[#allocation2 + $0x6a8] sm:$0xff]
    %v473 = vld [vmem:[#allocation2 + $0x6b0] sm:$0xff]
    %v474 = vld [vmem:[#allocation2 + $0x6b8] sm:$0xff]
    %v475 = vld [vmem:[#allocation2 + $0x6c0] sm:$0xff]
    %v476 = vld [vmem:[#allocation2 + $0x6c8] sm:$0xff]
    %v477 = vld [vmem:[#allocation2 + $0x6d0] sm:$0xff]
    %v478 = vld [vmem:[#allocation2 + $0x6d8] sm:$0xff]
    %v479 = vld [vmem:[#allocation2 + $0x6e0] sm:$0xff]
    %v480 = vld [vmem:[#allocation2 + $0x6e8] sm:$0xff]
    %v481 = vld [vmem:[#allocation2 + $0x6f0] sm:$0xff]
    %v482 = vld [vmem:[#allocation2 + $0x6f8] sm:$0xff]
    %v483 = vld [vmem:[#allocation2 + $0x700] sm:$0xff]
    %v484 = vld [vmem:[#allocation2 + $0x708] sm:$0xff]
    %v485 = vld [vmem:[#allocation2 + $0x710] sm:$0xff]
    %v486 = vld [vmem:[#allocation2 + $0x718] sm:$0xff]
    %v487 = vld [vmem:[#allocation2 + $0x720] sm:$0xff]
    %v488 = vld [vmem:[#allocation2 + $0x728] sm:$0xff]
    %v489 = vld [vmem:[#allocation2 + $0x730] sm:$0xff]
    %v490 = vld [vmem:[#allocation2 + $0x738] sm:$0xff]
    %v491 = vld [vmem:[#allocation2 + $0x740] sm:$0xff]
    %v492 = vld [vmem:[#allocation2 + $0x748] sm:$0xff]
    %v493 = vld [vmem:[#allocation2 + $0x750] sm:$0xff]
    %v494 = vld [vmem:[#allocation2 + $0x758] sm:$0xff]
    %v495 = vld [vmem:[#allocation2 + $0x760] sm:$0xff]
    %v496 = vld [vmem:[#allocation2 + $0x768] sm:$0xff]
    %v497 = vld [vmem:[#allocation2 + $0x770] sm:$0xff]
    %v498 = vld [vmem:[#allocation2 + $0x778] sm:$0xff]
    %v499 = vld [vmem:[#allocation2 + $0x780] sm:$0xff]
    %v500 = vld [vmem:[#allocation2 + $0x788] sm:$0xff]
    %v501 = vld [vmem:[#allocation2 + $0x790] sm:$0xff]
    %v502 = vld [vmem:[#allocation2 + $0x798] sm:$0xff]
    %v503 = vld [vmem:[#allocation2 + $0x7a0] sm:$0xff]
    %v504 = vld [vmem:[#allocation2 + $0x7a8] sm:$0xff]
    %v505 = vld [vmem:[#allocation2 + $0x7b0] sm:$0xff]
    %v506 = vld [vmem:[#allocation2 + $0x7b8] sm:$0xff]
    %v507 = vld [vmem:[#allocation2 + $0x7c0] sm:$0xff]
    %v508 = vld [vmem:[#allocation2 + $0x7c8] sm:$0xff]
    %v509 = vld [vmem:[#allocation2 + $0x7d0] sm:$0xff]
    %v510 = vld [vmem:[#allocation2 + $0x7d8] sm:$0xff]
    %v511 = vld [vmem:[#allocation2 + $0x7e0] sm:$0xff]
    %v512 = vld [vmem:[#allocation2 + $0x7e8] sm:$0xff]
    %v513 = vld [vmem:[#allocation2 + $0x7f0] sm:$0xff]
    %v514 = vld [vmem:[#allocation2 + $0x7f8] sm:$0xff]
    %v515 = vld [vmem:[#allocation2 + $0x800] sm:$0xff]
    %v516 = vld [vmem:[#allocation2 + $0x808] sm:$0xff]
    %v517 = vld [vmem:[#allocation2 + $0x810] sm:$0xff]
    %v518 = vld [vmem:[#allocation2 + $0x818] sm:$0xff]
    %v519 = vld [vmem:[#allocation2 + $0x820] sm:$0xff]
    %v520 = vld [vmem:[#allocation2 + $0x828] sm:$0xff]
    %v521 = vld [vmem:[#allocation2 + $0x830] sm:$0xff]
    %v522 = vld [vmem:[#allocation2 + $0x838] sm:$0xff]
    %v523 = vld [vmem:[#allocation2 + $0x840] sm:$0xff]
    %v524 = vld [vmem:[#allocation2 + $0x848] sm:$0xff]
    %v525 = vld [vmem:[#allocation2 + $0x850] sm:$0xff]
    %v526 = vld [vmem:[#allocation2 + $0x858] sm:$0xff]
    %v527 = vld [vmem:[#allocation2 + $0x860] sm:$0xff]
    %v528 = vld [vmem:[#allocation2 + $0x868] sm:$0xff]
    %v529 = vld [vmem:[#allocation2 + $0x870] sm:$0xff]
    %v530 = vld [vmem:[#allocation2 + $0x878] sm:$0xff]
    %v531 = vld [vmem:[#allocation2 + $0x880] sm:$0xff]
    %v532 = vld [vmem:[#allocation2 + $0x888] sm:$0xff]
    %v533 = vld [vmem:[#allocation2 + $0x890] sm:$0xff]
    %v534 = vld [vmem:[#allocation2 + $0x898] sm:$0xff]
    %v535 = vld [vmem:[#allocation2 + $0x8a0] sm:$0xff]
    %v536 = vld [vmem:[#allocation2 + $0x8a8] sm:$0xff]
    %v537 = vld [vmem:[#allocation2 + $0x8b0] sm:$0xff]
    %v538 = vld [vmem:[#allocation2 + $0x8b8] sm:$0xff]
    %v539 = vld [vmem:[#allocation2 + $0x8c0] sm:$0xff]
    %v540 = vld [vmem:[#allocation2 + $0x8c8] sm:$0xff]
    %v541 = vld [vmem:[#allocation2 + $0x8d0] sm:$0xff]
    %v542 = vld [vmem:[#allocation2 + $0x8d8] sm:$0xff]
    %v543 = vld [vmem:[#allocation2 + $0x8e0] sm:$0xff]
    %v544 = vld [vmem:[#allocation2 + $0x8e8] sm:$0xff]
    %v545 = vld [vmem:[#allocation2 + $0x8f0] sm:$0xff]
    %v546 = vld [vmem:[#allocation2 + $0x8f8] sm:$0xff]
    %v547 = vld [vmem:[#allocation2 + $0x900] sm:$0xff]
    %v548 = vld [vmem:[#allocation2 + $0x908] sm:$0xff]
    %v549 = vld [vmem:[#allocation2 + $0x910] sm:$0xff]
    %v550 = vld [vmem:[#allocation2 + $0x918] sm:$0xff]
    %v551 = vld [vmem:[#allocation2 + $0x920] sm:$0xff]
    %v552 = vld [vmem:[#allocation2 + $0x928] sm:$0xff]
    %v553 = vld [vmem:[#allocation2 + $0x930] sm:$0xff]
    %v554 = vld [vmem:[#allocation2 + $0x938] sm:$0xff]
    %v555 = vld [vmem:[#allocation2 + $0x940] sm:$0xff]
    %v556 = vld [vmem:[#allocation2 + $0x948] sm:$0xff]
    %v557 = vld [vmem:[#allocation2 + $0x950] sm:$0xff]
    %v558 = vld [vmem:[#allocation2 + $0x958] sm:$0xff]
    %v559 = vld [vmem:[#allocation2 + $0x960] sm:$0xff]
    %v560 = vld [vmem:[#allocation2 + $0x968] sm:$0xff]
    %v561 = vld [vmem:[#allocation2 + $0x970] sm:$0xff]
    %v562 = vld [vmem:[#allocation2 + $0x978] sm:$0xff]
    %v563 = vld [vmem:[#allocation2 + $0x980] sm:$0xff]
    %v564 = vld [vmem:[#allocation2 + $0x988] sm:$0xff]
    %v565 = vld [vmem:[#allocation2 + $0x990] sm:$0xff]
    %v566 = vld [vmem:[#allocation2 + $0x998] sm:$0xff]
    %v567 = vld [vmem:[#allocation2 + $0x9a0] sm:$0xff]
    %v568 = vld [vmem:[#allocation2 + $0x9a8] sm:$0xff]
    %v569 = vld [vmem:[#allocation2 + $0x9b0] sm:$0xff]
    %v570 = vld [vmem:[#allocation2 + $0x9b8] sm:$0xff]
    %v571 = vld [vmem:[#allocation2 + $0x9c0] sm:$0xff]
    %v572 = vld [vmem:[#allocation2 + $0x9c8] sm:$0xff]
    %v573 = vld [vmem:[#allocation2 + $0x9d0] sm:$0xff]
    %v574 = vld [vmem:[#allocation2 + $0x9d8] sm:$0xff]
    %v575 = vld [vmem:[#allocation2 + $0x9e0] sm:$0xff]
    %v576 = vld [vmem:[#allocation2 + $0x9e8] sm:$0xff]
    %v577 = vld [vmem:[#allocation2 + $0x9f0] sm:$0xff]
    %v578 = vld [vmem:[#allocation2 + $0x9f8] sm:$0xff]
    %v579 = vld [vmem:[#allocation2 + $0xa00] sm:$0xff]
    %v580 = vld [vmem:[#allocation2 + $0xa08] sm:$0xff]
    %v581 = vld [vmem:[#allocation2 + $0xa10] sm:$0xff]
    %v582 = vld [vmem:[#allocation2 + $0xa18] sm:$0xff]
    %v583 = vld [vmem:[#allocation2 + $0xa20] sm:$0xff]
    %v584 = vld [vmem:[#allocation2 + $0xa28] sm:$0xff]
    %v585 = vld [vmem:[#allocation2 + $0xa30] sm:$0xff]
    %v586 = vld [vmem:[#allocation2 + $0xa38] sm:$0xff]
    %v587 = vld [vmem:[#allocation2 + $0xa40] sm:$0xff]
    %v588 = vld [vmem:[#allocation2 + $0xa48] sm:$0xff]
    %v589 = vld [vmem:[#allocation2 + $0xa50] sm:$0xff]
    %v590 = vld [vmem:[#allocation2 + $0xa58] sm:$0xff]
    %v591 = vld [vmem:[#allocation2 + $0xa60] sm:$0xff]
    %v592 = vld [vmem:[#allocation2 + $0xa68] sm:$0xff]
    %v593 = vld [vmem:[#allocation2 + $0xa70] sm:$0xff]
    %v594 = vld [vmem:[#allocation2 + $0xa78] sm:$0xff]
    %v595 = vld [vmem:[#allocation2 + $0xa80] sm:$0xff]
    %v596 = vld [vmem:[#allocation2 + $0xa88] sm:$0xff]
    %v597 = vld [vmem:[#allocation2 + $0xa90] sm:$0xff]
    %v598 = vld [vmem:[#allocation2 + $0xa98] sm:$0xff]
    %v599 = vld [vmem:[#allocation2 + $0xaa0] sm:$0xff]
    %v600 = vld [vmem:[#allocation2 + $0xaa8] sm:$0xff]
    %v601 = vld [vmem:[#allocation2 + $0xab0] sm:$0xff]
    %v602 = vld [vmem:[#allocation2 + $0xab8] sm:$0xff]
    %v603 = vld [vmem:[#allocation2 + $0xac0] sm:$0xff]
    %v604 = vld [vmem:[#allocation2 + $0xac8] sm:$0xff]
    %v605 = vld [vmem:[#allocation2 + $0xad0] sm:$0xff]
    %v606 = vld [vmem:[#allocation2 + $0xad8] sm:$0xff]
    %v607 = vld [vmem:[#allocation2 + $0xae0] sm:$0xff]
    %v608 = vld [vmem:[#allocation2 + $0xae8] sm:$0xff]
    %v609 = vld [vmem:[#allocation2 + $0xaf0] sm:$0xff]
    %v610 = vld [vmem:[#allocation2 + $0xaf8] sm:$0xff]
    %v611 = vld [vmem:[#allocation2 + $0xb00] sm:$0xff]
    %v612 = vld [vmem:[#allocation2 + $0xb08] sm:$0xff]
    %v613 = vld [vmem:[#allocation2 + $0xb10] sm:$0xff]
    %v614 = vld [vmem:[#allocation2 + $0xb18] sm:$0xff]
    %v615 = vld [vmem:[#allocation2 + $0xb20] sm:$0xff]
    %v616 = vld [vmem:[#allocation2 + $0xb28] sm:$0xff]
    %v617 = vld [vmem:[#allocation2 + $0xb30] sm:$0xff]
    %v618 = vld [vmem:[#allocation2 + $0xb38] sm:$0xff]
    %v619 = vld [vmem:[#allocation2 + $0xb40] sm:$0xff]
    %v620 = vld [vmem:[#allocation2 + $0xb48] sm:$0xff]
    %v621 = vld [vmem:[#allocation2 + $0xb50] sm:$0xff]
    %v622 = vld [vmem:[#allocation2 + $0xb58] sm:$0xff]
    %v623 = vld [vmem:[#allocation2 + $0xb60] sm:$0xff]
    %v624 = vld [vmem:[#allocation2 + $0xb68] sm:$0xff]
    %v625 = vld [vmem:[#allocation2 + $0xb70] sm:$0xff]
    %v626 = vld [vmem:[#allocation2 + $0xb78] sm:$0xff]
    %v627 = vld [vmem:[#allocation2 + $0xb80] sm:$0xff]
    %v628 = vld [vmem:[#allocation2 + $0xb88] sm:$0xff]
    %v629 = vld [vmem:[#allocation2 + $0xb90] sm:$0xff]
    %v630 = vld [vmem:[#allocation2 + $0xb98] sm:$0xff]
    %v631 = vld [vmem:[#allocation2 + $0xba0] sm:$0xff]
    %v632 = vld [vmem:[#allocation2 + $0xba8] sm:$0xff]
    %v633 = vld [vmem:[#allocation2 + $0xbb0] sm:$0xff]
    %v634 = vld [vmem:[#allocation2 + $0xbb8] sm:$0xff]
    %v635 = vld [vmem:[#allocation2 + $0xbc0] sm:$0xff]
    %v636 = vld [vmem:[#allocation2 + $0xbc8] sm:$0xff]
    %v637 = vld [vmem:[#allocation2 + $0xbd0] sm:$0xff]
    %v638 = vld [vmem:[#allocation2 + $0xbd8] sm:$0xff]
    %v639 = vld [vmem:[#allocation2 + $0xbe0] sm:$0xff]
    %v640 = vld [vmem:[#allocation2 + $0xbe8] sm:$0xff]
    %v641 = vld [vmem:[#allocation2 + $0xbf0] sm:$0xff]
    %v642 = vld [vmem:[#allocation2 + $0xbf8] sm:$0xff]
    %v643 = vld [vmem:[#allocation2 + $0xc00] sm:$0xff]
    %v644 = vld [vmem:[#allocation2 + $0xc08] sm:$0xff]
    %v645 = vld [vmem:[#allocation2 + $0xc10] sm:$0xff]
    %v646 = vld [vmem:[#allocation2 + $0xc18] sm:$0xff]
    %v647 = vld [vmem:[#allocation2 + $0xc20] sm:$0xff]
    %v648 = vld [vmem:[#allocation2 + $0xc28] sm:$0xff]
    %v649 = vld [vmem:[#allocation2 + $0xc30] sm:$0xff]
    %v650 = vld [vmem:[#allocation2 + $0xc38] sm:$0xff]
    %v651 = vld [vmem:[#allocation2 + $0xc40] sm:$0xff]
    %v652 = vld [vmem:[#allocation2 + $0xc48] sm:$0xff]
    %v653 = vld [vmem:[#allocation2 + $0xc50] sm:$0xff]
    %v654 = vld [vmem:[#allocation2 + $0xc58] sm:$0xff]
    %v655 = vld [vmem:[#allocation2 + $0xc60] sm:$0xff]
    %v656 = vld [vmem:[#allocation2 + $0xc68] sm:$0xff]
    %v657 = vld [vmem:[#allocation2 + $0xc70] sm:$0xff]
    %v658 = vld [vmem:[#allocation2 + $0xc78] sm:$0xff]
    %v659 = vld [vmem:[#allocation2 + $0xc80] sm:$0xff]
    %v660 = vld [vmem:[#allocation2 + $0xc88] sm:$0xff]
    %v661 = vld [vmem:[#allocation2 + $0xc90] sm:$0xff]
    %v662 = vld [vmem:[#allocation2 + $0xc98] sm:$0xff]
    %v663 = vld [vmem:[#allocation2 + $0xca0] sm:$0xff]
    %v664 = vld [vmem:[#allocation2 + $0xca8] sm:$0xff]
    %v665 = vld [vmem:[#allocation2 + $0xcb0] sm:$0xff]
    %v666 = vld [vmem:[#allocation2 + $0xcb8] sm:$0xff]
    %v667 = vld [vmem:[#allocation2 + $0xcc0] sm:$0xff]
    %v668 = vld [vmem:[#allocation2 + $0xcc8] sm:$0xff]
    %v669 = vld [vmem:[#allocation2 + $0xcd0] sm:$0xff]
    %v670 = vld [vmem:[#allocation2 + $0xcd8] sm:$0xff]
    %v671 = vld [vmem:[#allocation2 + $0xce0] sm:$0xff]
    %v672 = vld [vmem:[#allocation2 + $0xce8] sm:$0xff]
    %v673 = vld [vmem:[#allocation2 + $0xcf0] sm:$0xff]
    %v674 = vld [vmem:[#allocation2 + $0xcf8] sm:$0xff]
    %v675 = vld [vmem:[#allocation2 + $0xd00] sm:$0xff]
    %v676 = vld [vmem:[#allocation2 + $0xd08] sm:$0xff]
    %v677 = vld [vmem:[#allocation2 + $0xd10] sm:$0xff]
    %v678 = vld [vmem:[#allocation2 + $0xd18] sm:$0xff]
    %v679 = vld [vmem:[#allocation2 + $0xd20] sm:$0xff]
    %v680 = vld [vmem:[#allocation2 + $0xd28] sm:$0xff]
    %v681 = vld [vmem:[#allocation2 + $0xd30] sm:$0xff]
    %v682 = vld [vmem:[#allocation2 + $0xd38] sm:$0xff]
    %v683 = vld [vmem:[#allocation2 + $0xd40] sm:$0xff]
    %v684 = vld [vmem:[#allocation2 + $0xd48] sm:$0xff]
    %v685 = vld [vmem:[#allocation2 + $0xd50] sm:$0xff]
    %v686 = vld [vmem:[#allocation2 + $0xd58] sm:$0xff]
    %v687 = vld [vmem:[#allocation2 + $0xd60] sm:$0xff]
    %v688 = vld [vmem:[#allocation2 + $0xd68] sm:$0xff]
    %v689 = vld [vmem:[#allocation2 + $0xd70] sm:$0xff]
    %v690 = vld [vmem:[#allocation2 + $0xd78] sm:$0xff]
    %v691 = vld [vmem:[#allocation2 + $0xd80] sm:$0xff]
    %v692 = vld [vmem:[#allocation2 + $0xd88] sm:$0xff]
    %v693 = vld [vmem:[#allocation2 + $0xd90] sm:$0xff]
    %v694 = vld [vmem:[#allocation2 + $0xd98] sm:$0xff]
    %v695 = vld [vmem:[#allocation2 + $0xda0] sm:$0xff]
    %v696 = vld [vmem:[#allocation2 + $0xda8] sm:$0xff]
    %v697 = vld [vmem:[#allocation2 + $0xdb0] sm:$0xff]
    %v698 = vld [vmem:[#allocation2 + $0xdb8] sm:$0xff]
    %v699 = vld [vmem:[#allocation2 + $0xdc0] sm:$0xff]
    %v700 = vld [vmem:[#allocation2 + $0xdc8] sm:$0xff]
    %v701 = vld [vmem:[#allocation2 + $0xdd0] sm:$0xff]
    %v702 = vld [vmem:[#allocation2 + $0xdd8] sm:$0xff]
    %v703 = vld [vmem:[#allocation2 + $0xde0] sm:$0xff]
    %v704 = vld [vmem:[#allocation2 + $0xde8] sm:$0xff]
    %v705 = vld [vmem:[#allocation2 + $0xdf0] sm:$0xff]
    %v706 = vld [vmem:[#allocation2 + $0xdf8] sm:$0xff]
    %v707 = vld [vmem:[#allocation2 + $0xe00] sm:$0xff]
    %v708 = vld [vmem:[#allocation2 + $0xe08] sm:$0xff]
    %v709 = vld [vmem:[#allocation2 + $0xe10] sm:$0xff]
    %v710 = vld [vmem:[#allocation2 + $0xe18] sm:$0xff]
    %v711 = vld [vmem:[#allocation2 + $0xe20] sm:$0xff]
    %v712 = vld [vmem:[#allocation2 + $0xe28] sm:$0xff]
    %v713 = vld [vmem:[#allocation2 + $0xe30] sm:$0xff]
    %v714 = vld [vmem:[#allocation2 + $0xe38] sm:$0xff]
    %v715 = vld [vmem:[#allocation2 + $0xe40] sm:$0xff]
    %v716 = vld [vmem:[#allocation2 + $0xe48] sm:$0xff]
    %v717 = vld [vmem:[#allocation2 + $0xe50] sm:$0xff]
    %v718 = vld [vmem:[#allocation2 + $0xe58] sm:$0xff]
    %v719 = vld [vmem:[#allocation2 + $0xe60] sm:$0xff]
    %v720 = vld [vmem:[#allocation2 + $0xe68] sm:$0xff]
    %v721 = vld [vmem:[#allocation2 + $0xe70] sm:$0xff]
    %v722 = vld [vmem:[#allocation2 + $0xe78] sm:$0xff]
    %v723 = vld [vmem:[#allocation2 + $0xe80] sm:$0xff]
    %v724 = vld [vmem:[#allocation2 + $0xe88] sm:$0xff]
    %v725 = vld [vmem:[#allocation2 + $0xe90] sm:$0xff]
    %v726 = vld [vmem:[#allocation2 + $0xe98] sm:$0xff]
    %v727 = vld [vmem:[#allocation2 + $0xea0] sm:$0xff]
    %v728 = vld [vmem:[#allocation2 + $0xea8] sm:$0xff]
    %v729 = vld [vmem:[#allocation2 + $0xeb0] sm:$0xff]
    %v730 = vld [vmem:[#allocation2 + $0xeb8] sm:$0xff]
    %v731 = vld [vmem:[#allocation2 + $0xec0] sm:$0xff]
    %v732 = vld [vmem:[#allocation2 + $0xec8] sm:$0xff]
    %v733 = vld [vmem:[#allocation2 + $0xed0] sm:$0xff]
    %v734 = vld [vmem:[#allocation2 + $0xed8] sm:$0xff]
    %v735 = vld [vmem:[#allocation2 + $0xee0] sm:$0xff]
    %v736 = vld [vmem:[#allocation2 + $0xee8] sm:$0xff]
    %v737 = vld [vmem:[#allocation2 + $0xef0] sm:$0xff]
    %v738 = vld [vmem:[#allocation2 + $0xef8] sm:$0xff]
    %v739 = vld [vmem:[#allocation2 + $0xf00] sm:$0xff]
    %v740 = vld [vmem:[#allocation2 + $0xf08] sm:$0xff]
    %v741 = vld [vmem:[#allocation2 + $0xf10] sm:$0xff]
    %v742 = vld [vmem:[#allocation2 + $0xf18] sm:$0xff]
    %v743 = vld [vmem:[#allocation2 + $0xf20] sm:$0xff]
    %v744 = vld [vmem:[#allocation2 + $0xf28] sm:$0xff]
    %v745 = vld [vmem:[#allocation2 + $0xf30] sm:$0xff]
    %v746 = vld [vmem:[#allocation2 + $0xf38] sm:$0xff]
    %v747 = vld [vmem:[#allocation2 + $0xf40] sm:$0xff]
    %v748 = vld [vmem:[#allocation2 + $0xf48] sm:$0xff]
    %v749 = vld [vmem:[#allocation2 + $0xf50] sm:$0xff]
    %v750 = vld [vmem:[#allocation2 + $0xf58] sm:$0xff]
    %v751 = vld [vmem:[#allocation2 + $0xf60] sm:$0xff]
    %v752 = vld [vmem:[#allocation2 + $0xf68] sm:$0xff]
    %v753 = vld [vmem:[#allocation2 + $0xf70] sm:$0xff]
    %v754 = vld [vmem:[#allocation2 + $0xf78] sm:$0xff]
    %v755 = vld [vmem:[#allocation2 + $0xf80] sm:$0xff]
    %v756 = vld [vmem:[#allocation2 + $0xf88] sm:$0xff]
    %v757 = vld [vmem:[#allocation2 + $0xf90] sm:$0xff]
    %v758 = vld [vmem:[#allocation2 + $0xf98] sm:$0xff]
    %v759 = vld [vmem:[#allocation2 + $0xfa0] sm:$0xff]
    %v760 = vld [vmem:[#allocation2 + $0xfa8] sm:$0xff]
    %v761 = vld [vmem:[#allocation2 + $0xfb0] sm:$0xff]
    %v762 = vld [vmem:[#allocation2 + $0xfb8] sm:$0xff]
    %v763 = vld [vmem:[#allocation2 + $0xfc0] sm:$0xff]
    %v764 = vld [vmem:[#allocation2 + $0xfc8] sm:$0xff]
    %v765 = vld [vmem:[#allocation2 + $0xfd0] sm:$0xff]
    %v766 = vld [vmem:[#allocation2 + $0xfd8] sm:$0xff]
    %v767 = vld [vmem:[#allocation2 + $0xfe0] sm:$0xff]
    %v768 = vld [vmem:[#allocation2 + $0xfe8] sm:$0xff]
    %v769 = vld [vmem:[#allocation2 + $0xff0] sm:$0xff]
    %v770 = vld [vmem:[#allocation2 + $0xff8] sm:$0xff]
    %v771 = vld [vmem:[#allocation4] sm:$0xf]
    %v773 = vlaneseq
    %v774 = vshrl.u32 %v773, 7
    %v775 = vsub.s32 0, %v774
    %v776 = vrot.slane %v771, %v775
    %v777 = vlaneseq
    %v778 = vshrl.u32 %v777, 7
    %v779 = vsub.s32 1, %v778
    %v780 = vrot.slane %v771, %v779
    %v781 = vlaneseq
    %v782 = vshrl.u32 %v781, 7
    %v783 = vsub.s32 2, %v782
    %v784 = vrot.slane %v771, %v783
    %v785 = vlaneseq
    %v786 = vshrl.u32 %v785, 7
    %v787 = vsub.s32 3, %v786
    %v788 = vrot.slane %v771, %v787
    %v795 = vcombine.high %v257, %v257
    %v797 = vunpack.c.l.s4 1983009808
    %v798 = vunpack.c.0.s8 %v797
    %v799 = vlaneseq
    %v800 = vshrl.u32 %v799, 7
    %v801 = vsub.s32 %v798, %v800
    %v802 = vrot.slane %v257, %v801
    %v804 = vunpack.c.l.s4 1983009808
    %v805 = vunpack.c.0.s8 %v804
    %v806 = vlaneseq
    %v807 = vshrl.u32 %v806, 7
    %v808 = vsub.s32 %v805, %v807
    %v809 = vrot.slane %v795, %v808
    %v810 = vcombine.high %v802, %v802
    %v811 = vcombine.high %v809, %v809
    %v812 = vcombine.high %v258, %v258
    %v814 = vunpack.c.l.s4 1983009808
    %v815 = vunpack.c.0.s8 %v814
    %v816 = vlaneseq
    %v817 = vshrl.u32 %v816, 7
    %v818 = vsub.s32 %v815, %v817
    %v819 = vrot.slane %v258, %v818
    %v821 = vunpack.c.l.s4 1983009808
    %v822 = vunpack.c.0.s8 %v821
    %v823 = vlaneseq
    %v824 = vshrl.u32 %v823, 7
    %v825 = vsub.s32 %v822, %v824
    %v826 = vrot.slane %v812, %v825
    %v827 = vcombine.high %v819, %v819
    %v828 = vcombine.high %v826, %v826
    %837 = vmatprep.subr.mxu0 %v260
    %838 = vmatpush1.msra.mxu0 %v259
    %839 = vmatprep.subr.mxu0 %v264
    %840 = vmatpush1.msra.mxu0 %v263
    %841 = vmatprep.subr.mxu0 %v268
    %842 = vmatpush1.msra.mxu0 %v267
    %843 = vmatprep.subr.mxu0 %v272
    %844 = vmatpush1.msra.mxu0 %v271
    %845 = vmatprep.subr.mxu0 %v276
    %846 = vmatpush1.msra.mxu0 %v275
    %847 = vmatprep.subr.mxu0 %v280
    %848 = vmatpush1.msra.mxu0 %v279
    %849 = vmatprep.subr.mxu0 %v284
    %850 = vmatpush1.msra.mxu0 %v283
    %851 = vmatprep.subr.mxu0 %v288
    %852 = vmatpush1.msra.mxu0 %v287
    %853 = vmatprep.subr.mxu0 %v292
    %854 = vmatpush1.msra.mxu0 %v291
    %855 = vmatprep.subr.mxu0 %v296
    %856 = vmatpush1.msra.mxu0 %v295
    %857 = vmatprep.subr.mxu0 %v300
    %858 = vmatpush1.msra.mxu0 %v299
    %859 = vmatprep.subr.mxu0 %v304
    %860 = vmatpush1.msra.mxu0 %v303
    %861 = vmatprep.subr.mxu0 %v308
    %862 = vmatpush1.msra.mxu0 %v307
    %863 = vmatprep.subr.mxu0 %v312
    %864 = vmatpush1.msra.mxu0 %v311
    %865 = vmatprep.subr.mxu0 %v316
    %866 = vmatpush1.msra.mxu0 %v315
    %867 = vmatprep.subr.mxu0 %v320
    %868 = vmatpush1.msra.mxu0 %v319
    %869 = vmatprep.subr.mxu0 %v324
    %870 = vmatpush1.msra.mxu0 %v323
    %871 = vmatprep.subr.mxu0 %v328
    %872 = vmatpush1.msra.mxu0 %v327
    %873 = vmatprep.subr.mxu0 %v332
    %874 = vmatpush1.msra.mxu0 %v331
    %875 = vmatprep.subr.mxu0 %v336
    %876 = vmatpush1.msra.mxu0 %v335
    %877 = vmatprep.subr.mxu0 %v340
    %878 = vmatpush1.msra.mxu0 %v339
    %879 = vmatprep.subr.mxu0 %v344
    %880 = vmatpush1.msra.mxu0 %v343
    %881 = vmatprep.subr.mxu0 %v348
    %882 = vmatpush1.msra.mxu0 %v347
    %883 = vmatprep.subr.mxu0 %v352
    %884 = vmatpush1.msra.mxu0 %v351
    %885 = vmatprep.subr.mxu0 %v356
    %886 = vmatpush1.msra.mxu0 %v355
    %887 = vmatprep.subr.mxu0 %v360
    %888 = vmatpush1.msra.mxu0 %v359
    %889 = vmatprep.subr.mxu0 %v364
    %890 = vmatpush1.msra.mxu0 %v363
    %891 = vmatprep.subr.mxu0 %v368
    %892 = vmatpush1.msra.mxu0 %v367
    %893 = vmatprep.subr.mxu0 %v372
    %894 = vmatpush1.msra.mxu0 %v371
    %895 = vmatprep.subr.mxu0 %v376
    %896 = vmatpush1.msra.mxu0 %v375
    %897 = vmatprep.subr.mxu0 %v380
    %898 = vmatpush1.msra.mxu0 %v379
    %899 = vmatprep.subr.mxu0 %v384
    %900 = vmatpush1.msra.mxu0 %v383
    %901 = vmatprep.mubr.f32.mxu0 %v810
    %902 = vmatmul.mubr.f32.gmra.mrb[0].mxu0 %v802
    %v903 = vpop.f32.mrb[0].mxu0
    %v904 = vadd.f32 %v776, %v903
    %v905 = vpop.f32.mrb[0].mxu0
    %v906 = vadd.f32 %v780, %v905
    %907 = vdwg.mxu0
    %908 = vmatprep.subr.mxu0 %v388
    %909 = vmatpush1.msra.mxu0 %v387
    %910 = vmatprep.subr.mxu0 %v392
    %911 = vmatpush1.msra.mxu0 %v391
    %912 = vmatprep.subr.mxu0 %v396
    %913 = vmatpush1.msra.mxu0 %v395
    %914 = vmatprep.subr.mxu0 %v400
    %915 = vmatpush1.msra.mxu0 %v399
    %916 = vmatprep.subr.mxu0 %v404
    %917 = vmatpush1.msra.mxu0 %v403
    %918 = vmatprep.subr.mxu0 %v408
    %919 = vmatpush1.msra.mxu0 %v407
    %920 = vmatprep.subr.mxu0 %v412
    %921 = vmatpush1.msra.mxu0 %v411
    %922 = vmatprep.subr.mxu0 %v416
    %923 = vmatpush1.msra.mxu0 %v415
    %924 = vmatprep.subr.mxu0 %v420
    %925 = vmatpush1.msra.mxu0 %v419
    %926 = vmatprep.subr.mxu0 %v424
    %927 = vmatpush1.msra.mxu0 %v423
    %928 = vmatprep.subr.mxu0 %v428
    %929 = vmatpush1.msra.mxu0 %v427
    %930 = vmatprep.subr.mxu0 %v432
    %931 = vmatpush1.msra.mxu0 %v431
    %932 = vmatprep.subr.mxu0 %v436
    %933 = vmatpush1.msra.mxu0 %v435
    %934 = vmatprep.subr.mxu0 %v440
    %935 = vmatpush1.msra.mxu0 %v439
    %936 = vmatprep.subr.mxu0 %v444
    %937 = vmatpush1.msra.mxu0 %v443
    %938 = vmatprep.subr.mxu0 %v448
    %939 = vmatpush1.msra.mxu0 %v447
    %940 = vmatprep.subr.mxu0 %v452
    %941 = vmatpush1.msra.mxu0 %v451
    %942 = vmatprep.subr.mxu0 %v456
    %943 = vmatpush1.msra.mxu0 %v455
    %944 = vmatprep.subr.mxu0 %v460
    %945 = vmatpush1.msra.mxu0 %v459
    %946 = vmatprep.subr.mxu0 %v464
    %947 = vmatpush1.msra.mxu0 %v463
    %948 = vmatprep.subr.mxu0 %v468
    %949 = vmatpush1.msra.mxu0 %v467
    %950 = vmatprep.subr.mxu0 %v472
    %951 = vmatpush1.msra.mxu0 %v471
    %952 = vmatprep.subr.mxu0 %v476
    %953 = vmatpush1.msra.mxu0 %v475
    %954 = vmatprep.subr.mxu0 %v480
    %955 = vmatpush1.msra.mxu0 %v479
    %956 = vmatprep.subr.mxu0 %v484
    %957 = vmatpush1.msra.mxu0 %v483
    %958 = vmatprep.subr.mxu0 %v488
    %959 = vmatpush1.msra.mxu0 %v487
    %960 = vmatprep.subr.mxu0 %v492
    %961 = vmatpush1.msra.mxu0 %v491
    %962 = vmatprep.subr.mxu0 %v496
    %963 = vmatpush1.msra.mxu0 %v495
    %964 = vmatprep.subr.mxu0 %v500
    %965 = vmatpush1.msra.mxu0 %v499
    %966 = vmatprep.subr.mxu0 %v504
    %967 = vmatpush1.msra.mxu0 %v503
    %968 = vmatprep.subr.mxu0 %v508
    %969 = vmatpush1.msra.mxu0 %v507
    %970 = vmatprep.subr.mxu0 %v512
    %971 = vmatpush1.msra.mxu0 %v511
    %972 = vmatprep.mubr.f32.mxu0 %v811
    %973 = vmatmul.mubr.f32.gmra.mrb[0].mxu0 %v809
    %v974 = vpop.f32.mrb[0].mxu0
    %v975 = vadd.f32 %v904, %v974
    %v976 = vpop.f32.mrb[0].mxu0
    %v977 = vadd.f32 %v906, %v976
    %978 = vdwg.mxu0
    %979 = vmatprep.subr.mxu0 %v516
    %980 = vmatpush1.msra.mxu0 %v515
    %981 = vmatprep.subr.mxu0 %v520
    %982 = vmatpush1.msra.mxu0 %v519
    %983 = vmatprep.subr.mxu0 %v524
    %984 = vmatpush1.msra.mxu0 %v523
    %985 = vmatprep.subr.mxu0 %v528
    %986 = vmatpush1.msra.mxu0 %v527
    %987 = vmatprep.subr.mxu0 %v532
    %988 = vmatpush1.msra.mxu0 %v531
    %989 = vmatprep.subr.mxu0 %v536
    %990 = vmatpush1.msra.mxu0 %v535
    %991 = vmatprep.subr.mxu0 %v540
    %992 = vmatpush1.msra.mxu0 %v539
    %993 = vmatprep.subr.mxu0 %v544
    %994 = vmatpush1.msra.mxu0 %v543
    %995 = vmatprep.subr.mxu0 %v548
    %996 = vmatpush1.msra.mxu0 %v547
    %997 = vmatprep.subr.mxu0 %v552
    %998 = vmatpush1.msra.mxu0 %v551
    %999 = vmatprep.subr.mxu0 %v556
    %1000 = vmatpush1.msra.mxu0 %v555
    %1001 = vmatprep.subr.mxu0 %v560
    %1002 = vmatpush1.msra.mxu0 %v559
    %1003 = vmatprep.subr.mxu0 %v564
    %1004 = vmatpush1.msra.mxu0 %v563
    %1005 = vmatprep.subr.mxu0 %v568
    %1006 = vmatpush1.msra.mxu0 %v567
    %1007 = vmatprep.subr.mxu0 %v572
    %1008 = vmatpush1.msra.mxu0 %v571
    %1009 = vmatprep.subr.mxu0 %v576
    %1010 = vmatpush1.msra.mxu0 %v575
    %1011 = vmatprep.subr.mxu0 %v580
    %1012 = vmatpush1.msra.mxu0 %v579
    %1013 = vmatprep.subr.mxu0 %v584
    %1014 = vmatpush1.msra.mxu0 %v583
    %1015 = vmatprep.subr.mxu0 %v588
    %1016 = vmatpush1.msra.mxu0 %v587
    %1017 = vmatprep.subr.mxu0 %v592
    %1018 = vmatpush1.msra.mxu0 %v591
    %1019 = vmatprep.subr.mxu0 %v596
    %1020 = vmatpush1.msra.mxu0 %v595
    %1021 = vmatprep.subr.mxu0 %v600
    %1022 = vmatpush1.msra.mxu0 %v599
    %1023 = vmatprep.subr.mxu0 %v604
    %1024 = vmatpush1.msra.mxu0 %v603
    %1025 = vmatprep.subr.mxu0 %v608
    %1026 = vmatpush1.msra.mxu0 %v607
    %1027 = vmatprep.subr.mxu0 %v612
    %1028 = vmatpush1.msra.mxu0 %v611
    %1029 = vmatprep.subr.mxu0 %v616
    %1030 = vmatpush1.msra.mxu0 %v615
    %1031 = vmatprep.subr.mxu0 %v620
    %1032 = vmatpush1.msra.mxu0 %v619
    %1033 = vmatprep.subr.mxu0 %v624
    %1034 = vmatpush1.msra.mxu0 %v623
    %1035 = vmatprep.subr.mxu0 %v628
    %1036 = vmatpush1.msra.mxu0 %v627
    %1037 = vmatprep.subr.mxu0 %v632
    %1038 = vmatpush1.msra.mxu0 %v631
    %1039 = vmatprep.subr.mxu0 %v636
    %1040 = vmatpush1.msra.mxu0 %v635
    %1041 = vmatprep.subr.mxu0 %v640
    %1042 = vmatpush1.msra.mxu0 %v639
    %1043 = vmatprep.mubr.f32.mxu0 %v827
    %1044 = vmatmul.mubr.f32.gmra.mrb[0].mxu0 %v819
    %v1045 = vpop.f32.mrb[0].mxu0
    %v1046 = vadd.f32 %v975, %v1045
    %v1047 = vpop.f32.mrb[0].mxu0
    %v1048 = vadd.f32 %v977, %v1047
    %1049 = vdwg.mxu0
    %1050 = vmatprep.subr.mxu0 %v644
    %1051 = vmatpush1.msra.mxu0 %v643
    %1052 = vmatprep.subr.mxu0 %v648
    %1053 = vmatpush1.msra.mxu0 %v647
    %1054 = vmatprep.subr.mxu0 %v652
    %1055 = vmatpush1.msra.mxu0 %v651
    %1056 = vmatprep.subr.mxu0 %v656
    %1057 = vmatpush1.msra.mxu0 %v655
    %1058 = vmatprep.subr.mxu0 %v660
    %1059 = vmatpush1.msra.mxu0 %v659
    %1060 = vmatprep.subr.mxu0 %v664
    %1061 = vmatpush1.msra.mxu0 %v663
    %1062 = vmatprep.subr.mxu0 %v668
    %1063 = vmatpush1.msra.mxu0 %v667
    %1064 = vmatprep.subr.mxu0 %v672
    %1065 = vmatpush1.msra.mxu0 %v671
    %1066 = vmatprep.subr.mxu0 %v676
    %1067 = vmatpush1.msra.mxu0 %v675
    %1068 = vmatprep.subr.mxu0 %v680
    %1069 = vmatpush1.msra.mxu0 %v679
    %1070 = vmatprep.subr.mxu0 %v684
    %1071 = vmatpush1.msra.mxu0 %v683
    %1072 = vmatprep.subr.mxu0 %v688
    %1073 = vmatpush1.msra.mxu0 %v687
    %1074 = vmatprep.subr.mxu0 %v692
    %1075 = vmatpush1.msra.mxu0 %v691
    %1076 = vmatprep.subr.mxu0 %v696
    %1077 = vmatpush1.msra.mxu0 %v695
    %1078 = vmatprep.subr.mxu0 %v700
    %1079 = vmatpush1.msra.mxu0 %v699
    %1080 = vmatprep.subr.mxu0 %v704
    %1081 = vmatpush1.msra.mxu0 %v703
    %1082 = vmatprep.subr.mxu0 %v708
    %1083 = vmatpush1.msra.mxu0 %v707
    %1084 = vmatprep.subr.mxu0 %v712
    %1085 = vmatpush1.msra.mxu0 %v711
    %1086 = vmatprep.subr.mxu0 %v716
    %1087 = vmatpush1.msra.mxu0 %v715
    %1088 = vmatprep.subr.mxu0 %v720
    %1089 = vmatpush1.msra.mxu0 %v719
    %1090 = vmatprep.subr.mxu0 %v724
    %1091 = vmatpush1.msra.mxu0 %v723
    %1092 = vmatprep.subr.mxu0 %v728
    %1093 = vmatpush1.msra.mxu0 %v727
    %1094 = vmatprep.subr.mxu0 %v732
    %1095 = vmatpush1.msra.mxu0 %v731
    %1096 = vmatprep.subr.mxu0 %v736
    %1097 = vmatpush1.msra.mxu0 %v735
    %1098 = vmatprep.subr.mxu0 %v740
    %1099 = vmatpush1.msra.mxu0 %v739
    %1100 = vmatprep.subr.mxu0 %v744
    %1101 = vmatpush1.msra.mxu0 %v743
    %1102 = vmatprep.subr.mxu0 %v748
    %1103 = vmatpush1.msra.mxu0 %v747
    %1104 = vmatprep.subr.mxu0 %v752
    %1105 = vmatpush1.msra.mxu0 %v751
    %1106 = vmatprep.subr.mxu0 %v756
    %1107 = vmatpush1.msra.mxu0 %v755
    %1108 = vmatprep.subr.mxu0 %v760
    %1109 = vmatpush1.msra.mxu0 %v759
    %1110 = vmatprep.subr.mxu0 %v764
    %1111 = vmatpush1.msra.mxu0 %v763
    %1112 = vmatprep.subr.mxu0 %v768
    %1113 = vmatpush1.msra.mxu0 %v767
    %1114 = vmatprep.mubr.f32.mxu0 %v828
    %1115 = vmatmul.mubr.f32.gmra.mrb[0].mxu0 %v826
    %v1116 = vpop.f32.mrb[0].mxu0
    %v1117 = vadd.f32 %v1046, %v1116
    %v1118 = vpop.f32.mrb[0].mxu0
    %v1119 = vadd.f32 %v1048, %v1118
    %1120 = vdwg.mxu0
    %1121 = vmatprep.subr.mxu0 %v262
    %1122 = vmatpush1.msra.mxu0 %v261
    %1123 = vmatprep.subr.mxu0 %v266
    %1124 = vmatpush1.msra.mxu0 %v265
    %1125 = vmatprep.subr.mxu0 %v270
    %1126 = vmatpush1.msra.mxu0 %v269
    %1127 = vmatprep.subr.mxu0 %v274
    %1128 = vmatpush1.msra.mxu0 %v273
    %1129 = vmatprep.subr.mxu0 %v278
    %1130 = vmatpush1.msra.mxu0 %v277
    %1131 = vmatprep.subr.mxu0 %v282
    %1132 = vmatpush1.msra.mxu0 %v281
    %1133 = vmatprep.subr.mxu0 %v286
    %1134 = vmatpush1.msra.mxu0 %v285
    %1135 = vmatprep.subr.mxu0 %v290
    %1136 = vmatpush1.msra.mxu0 %v289
    %1137 = vmatprep.subr.mxu0 %v294
    %1138 = vmatpush1.msra.mxu0 %v293
    %1139 = vmatprep.subr.mxu0 %v298
    %1140 = vmatpush1.msra.mxu0 %v297
    %1141 = vmatprep.subr.mxu0 %v302
    %1142 = vmatpush1.msra.mxu0 %v301
    %1143 = vmatprep.subr.mxu0 %v306
    %1144 = vmatpush1.msra.mxu0 %v305
    %1145 = vmatprep.subr.mxu0 %v310
    %1146 = vmatpush1.msra.mxu0 %v309
    %1147 = vmatprep.subr.mxu0 %v314
    %1148 = vmatpush1.msra.mxu0 %v313
    %1149 = vmatprep.subr.mxu0 %v318
    %1150 = vmatpush1.msra.mxu0 %v317
    %1151 = vmatprep.subr.mxu0 %v322
    %1152 = vmatpush1.msra.mxu0 %v321
    %1153 = vmatprep.subr.mxu0 %v326
    %1154 = vmatpush1.msra.mxu0 %v325
    %1155 = vmatprep.subr.mxu0 %v330
    %1156 = vmatpush1.msra.mxu0 %v329
    %1157 = vmatprep.subr.mxu0 %v334
    %1158 = vmatpush1.msra.mxu0 %v333
    %1159 = vmatprep.subr.mxu0 %v338
    %1160 = vmatpush1.msra.mxu0 %v337
    %1161 = vmatprep.subr.mxu0 %v342
    %1162 = vmatpush1.msra.mxu0 %v341
    %1163 = vmatprep.subr.mxu0 %v346
    %1164 = vmatpush1.msra.mxu0 %v345
    %1165 = vmatprep.subr.mxu0 %v350
    %1166 = vmatpush1.msra.mxu0 %v349
    %1167 = vmatprep.subr.mxu0 %v354
    %1168 = vmatpush1.msra.mxu0 %v353
    %1169 = vmatprep.subr.mxu0 %v358
    %1170 = vmatpush1.msra.mxu0 %v357
    %1171 = vmatprep.subr.mxu0 %v362
    %1172 = vmatpush1.msra.mxu0 %v361
    %1173 = vmatprep.subr.mxu0 %v366
    %1174 = vmatpush1.msra.mxu0 %v365
    %1175 = vmatprep.subr.mxu0 %v370
    %1176 = vmatpush1.msra.mxu0 %v369
    %1177 = vmatprep.subr.mxu0 %v374
    %1178 = vmatpush1.msra.mxu0 %v373
    %1179 = vmatprep.subr.mxu0 %v378
    %1180 = vmatpush1.msra.mxu0 %v377
    %1181 = vmatprep.subr.mxu0 %v382
    %1182 = vmatpush1.msra.mxu0 %v381
    %1183 = vmatprep.subr.mxu0 %v386
    %1184 = vmatpush1.msra.mxu0 %v385
    %1185 = vmatprep.mubr.f32.mxu0 %v810
    %1186 = vmatmul.mubr.f32.gmra.mrb[0].mxu0 %v802
    %v1187 = vpop.f32.mrb[0].mxu0
    %v1188 = vadd.f32 %v784, %v1187
    %v1189 = vpop.f32.mrb[0].mxu0
    %v1190 = vadd.f32 %v788, %v1189
    %1191 = vdwg.mxu0
    %1192 = vmatprep.subr.mxu0 %v390
    %1193 = vmatpush1.msra.mxu0 %v389
    %1194 = vmatprep.subr.mxu0 %v394
    %1195 = vmatpush1.msra.mxu0 %v393
    %1196 = vmatprep.subr.mxu0 %v398
    %1197 = vmatpush1.msra.mxu0 %v397
    %1198 = vmatprep.subr.mxu0 %v402
    %1199 = vmatpush1.msra.mxu0 %v401
    %1200 = vmatprep.subr.mxu0 %v406
    %1201 = vmatpush1.msra.mxu0 %v405
    %1202 = vmatprep.subr.mxu0 %v410
    %1203 = vmatpush1.msra.mxu0 %v409
    %1204 = vmatprep.subr.mxu0 %v414
    %1205 = vmatpush1.msra.mxu0 %v413
    %1206 = vmatprep.subr.mxu0 %v418
    %1207 = vmatpush1.msra.mxu0 %v417
    %1208 = vmatprep.subr.mxu0 %v422
    %1209 = vmatpush1.msra.mxu0 %v421
    %1210 = vmatprep.subr.mxu0 %v426
    %1211 = vmatpush1.msra.mxu0 %v425
    %1212 = vmatprep.subr.mxu0 %v430
    %1213 = vmatpush1.msra.mxu0 %v429
    %1214 = vmatprep.subr.mxu0 %v434
    %1215 = vmatpush1.msra.mxu0 %v433
    %1216 = vmatprep.subr.mxu0 %v438
    %1217 = vmatpush1.msra.mxu0 %v437
    %1218 = vmatprep.subr.mxu0 %v442
    %1219 = vmatpush1.msra.mxu0 %v441
    %1220 = vmatprep.subr.mxu0 %v446
    %1221 = vmatpush1.msra.mxu0 %v445
    %1222 = vmatprep.subr.mxu0 %v450
    %1223 = vmatpush1.msra.mxu0 %v449
    %1224 = vmatprep.subr.mxu0 %v454
    %1225 = vmatpush1.msra.mxu0 %v453
    %1226 = vmatprep.subr.mxu0 %v458
    %1227 = vmatpush1.msra.mxu0 %v457
    %1228 = vmatprep.subr.mxu0 %v462
    %1229 = vmatpush1.msra.mxu0 %v461
    %1230 = vmatprep.subr.mxu0 %v466
    %1231 = vmatpush1.msra.mxu0 %v465
    %1232 = vmatprep.subr.mxu0 %v470
    %1233 = vmatpush1.msra.mxu0 %v469
    %1234 = vmatprep.subr.mxu0 %v474
    %1235 = vmatpush1.msra.mxu0 %v473
    %1236 = vmatprep.subr.mxu0 %v478
    %1237 = vmatpush1.msra.mxu0 %v477
    %1238 = vmatprep.subr.mxu0 %v482
    %1239 = vmatpush1.msra.mxu0 %v481
    %1240 = vmatprep.subr.mxu0 %v486
    %1241 = vmatpush1.msra.mxu0 %v485
    %1242 = vmatprep.subr.mxu0 %v490
    %1243 = vmatpush1.msra.mxu0 %v489
    %1244 = vmatprep.subr.mxu0 %v494
    %1245 = vmatpush1.msra.mxu0 %v493
    %1246 = vmatprep.subr.mxu0 %v498
    %1247 = vmatpush1.msra.mxu0 %v497
    %1248 = vmatprep.subr.mxu0 %v502
    %1249 = vmatpush1.msra.mxu0 %v501
    %1250 = vmatprep.subr.mxu0 %v506
    %1251 = vmatpush1.msra.mxu0 %v505
    %1252 = vmatprep.subr.mxu0 %v510
    %1253 = vmatpush1.msra.mxu0 %v509
    %1254 = vmatprep.subr.mxu0 %v514
    %1255 = vmatpush1.msra.mxu0 %v513
    %1256 = vmatprep.mubr.f32.mxu0 %v811
    %1257 = vmatmul.mubr.f32.gmra.mrb[0].mxu0 %v809
    %v1258 = vpop.f32.mrb[0].mxu0
    %v1259 = vadd.f32 %v1188, %v1258
    %v1260 = vpop.f32.mrb[0].mxu0
    %v1261 = vadd.f32 %v1190, %v1260
    %1262 = vdwg.mxu0
    %1263 = vmatprep.subr.mxu0 %v518
    %1264 = vmatpush1.msra.mxu0 %v517
    %1265 = vmatprep.subr.mxu0 %v522
    %1266 = vmatpush1.msra.mxu0 %v521
    %1267 = vmatprep.subr.mxu0 %v526
    %1268 = vmatpush1.msra.mxu0 %v525
    %1269 = vmatprep.subr.mxu0 %v530
    %1270 = vmatpush1.msra.mxu0 %v529
    %1271 = vmatprep.subr.mxu0 %v534
    %1272 = vmatpush1.msra.mxu0 %v533
    %1273 = vmatprep.subr.mxu0 %v538
    %1274 = vmatpush1.msra.mxu0 %v537
    %1275 = vmatprep.subr.mxu0 %v542
    %1276 = vmatpush1.msra.mxu0 %v541
    %1277 = vmatprep.subr.mxu0 %v546
    %1278 = vmatpush1.msra.mxu0 %v545
    %1279 = vmatprep.subr.mxu0 %v550
    %1280 = vmatpush1.msra.mxu0 %v549
    %1281 = vmatprep.subr.mxu0 %v554
    %1282 = vmatpush1.msra.mxu0 %v553
    %1283 = vmatprep.subr.mxu0 %v558
    %1284 = vmatpush1.msra.mxu0 %v557
    %1285 = vmatprep.subr.mxu0 %v562
    %1286 = vmatpush1.msra.mxu0 %v561
    %1287 = vmatprep.subr.mxu0 %v566
    %1288 = vmatpush1.msra.mxu0 %v565
    %1289 = vmatprep.subr.mxu0 %v570
    %1290 = vmatpush1.msra.mxu0 %v569
    %1291 = vmatprep.subr.mxu0 %v574
    %1292 = vmatpush1.msra.mxu0 %v573
    %1293 = vmatprep.subr.mxu0 %v578
    %1294 = vmatpush1.msra.mxu0 %v577
    %1295 = vmatprep.subr.mxu0 %v582
    %1296 = vmatpush1.msra.mxu0 %v581
    %1297 = vmatprep.subr.mxu0 %v586
    %1298 = vmatpush1.msra.mxu0 %v585
    %1299 = vmatprep.subr.mxu0 %v590
    %1300 = vmatpush1.msra.mxu0 %v589
    %1301 = vmatprep.subr.mxu0 %v594
    %1302 = vmatpush1.msra.mxu0 %v593
    %1303 = vmatprep.subr.mxu0 %v598
    %1304 = vmatpush1.msra.mxu0 %v597
    %1305 = vmatprep.subr.mxu0 %v602
    %1306 = vmatpush1.msra.mxu0 %v601
    %1307 = vmatprep.subr.mxu0 %v606
    %1308 = vmatpush1.msra.mxu0 %v605
    %1309 = vmatprep.subr.mxu0 %v610
    %1310 = vmatpush1.msra.mxu0 %v609
    %1311 = vmatprep.subr.mxu0 %v614
    %1312 = vmatpush1.msra.mxu0 %v613
    %1313 = vmatprep.subr.mxu0 %v618
    %1314 = vmatpush1.msra.mxu0 %v617
    %1315 = vmatprep.subr.mxu0 %v622
    %1316 = vmatpush1.msra.mxu0 %v621
    %1317 = vmatprep.subr.mxu0 %v626
    %1318 = vmatpush1.msra.mxu0 %v625
    %1319 = vmatprep.subr.mxu0 %v630
    %1320 = vmatpush1.msra.mxu0 %v629
    %1321 = vmatprep.subr.mxu0 %v634
    %1322 = vmatpush1.msra.mxu0 %v633
    %1323 = vmatprep.subr.mxu0 %v638
    %1324 = vmatpush1.msra.mxu0 %v637
    %1325 = vmatprep.subr.mxu0 %v642
    %1326 = vmatpush1.msra.mxu0 %v641
    %1327 = vmatprep.mubr.f32.mxu0 %v827
    %1328 = vmatmul.mubr.f32.gmra.mrb[0].mxu0 %v819
    %v1329 = vpop.f32.mrb[0].mxu0
    %v1330 = vadd.f32 %v1259, %v1329
    %v1331 = vpop.f32.mrb[0].mxu0
    %v1332 = vadd.f32 %v1261, %v1331
    %1333 = vdwg.mxu0
    %1334 = vmatprep.subr.mxu0 %v646
    %1335 = vmatpush1.msra.mxu0 %v645
    %1336 = vmatprep.subr.mxu0 %v650
    %1337 = vmatpush1.msra.mxu0 %v649
    %1338 = vmatprep.subr.mxu0 %v654
    %1339 = vmatpush1.msra.mxu0 %v653
    %1340 = vmatprep.subr.mxu0 %v658
    %1341 = vmatpush1.msra.mxu0 %v657
    %1342 = vmatprep.subr.mxu0 %v662
    %1343 = vmatpush1.msra.mxu0 %v661
    %1344 = vmatprep.subr.mxu0 %v666
    %1345 = vmatpush1.msra.mxu0 %v665
    %1346 = vmatprep.subr.mxu0 %v670
    %1347 = vmatpush1.msra.mxu0 %v669
    %1348 = vmatprep.subr.mxu0 %v674
    %1349 = vmatpush1.msra.mxu0 %v673
    %1350 = vmatprep.subr.mxu0 %v678
    %1351 = vmatpush1.msra.mxu0 %v677
    %1352 = vmatprep.subr.mxu0 %v682
    %1353 = vmatpush1.msra.mxu0 %v681
    %1354 = vmatprep.subr.mxu0 %v686
    %1355 = vmatpush1.msra.mxu0 %v685
    %1356 = vmatprep.subr.mxu0 %v690
    %1357 = vmatpush1.msra.mxu0 %v689
    %1358 = vmatprep.subr.mxu0 %v694
    %1359 = vmatpush1.msra.mxu0 %v693
    %1360 = vmatprep.subr.mxu0 %v698
    %1361 = vmatpush1.msra.mxu0 %v697
    %1362 = vmatprep.subr.mxu0 %v702
    %1363 = vmatpush1.msra.mxu0 %v701
    %1364 = vmatprep.subr.mxu0 %v706
    %1365 = vmatpush1.msra.mxu0 %v705
    %1366 = vmatprep.subr.mxu0 %v710
    %1367 = vmatpush1.msra.mxu0 %v709
    %1368 = vmatprep.subr.mxu0 %v714
    %1369 = vmatpush1.msra.mxu0 %v713
    %1370 = vmatprep.subr.mxu0 %v718
    %1371 = vmatpush1.msra.mxu0 %v717
    %1372 = vmatprep.subr.mxu0 %v722
    %1373 = vmatpush1.msra.mxu0 %v721
    %1374 = vmatprep.subr.mxu0 %v726
    %1375 = vmatpush1.msra.mxu0 %v725
    %1376 = vmatprep.subr.mxu0 %v730
    %1377 = vmatpush1.msra.mxu0 %v729
    %1378 = vmatprep.subr.mxu0 %v734
    %1379 = vmatpush1.msra.mxu0 %v733
    %1380 = vmatprep.subr.mxu0 %v738
    %1381 = vmatpush1.msra.mxu0 %v737
    %1382 = vmatprep.subr.mxu0 %v742
    %1383 = vmatpush1.msra.mxu0 %v741
    %1384 = vmatprep.subr.mxu0 %v746
    %1385 = vmatpush1.msra.mxu0 %v745
    %1386 = vmatprep.subr.mxu0 %v750
    %1387 = vmatpush1.msra.mxu0 %v749
    %1388 = vmatprep.subr.mxu0 %v754
    %1389 = vmatpush1.msra.mxu0 %v753
    %1390 = vmatprep.subr.mxu0 %v758
    %1391 = vmatpush1.msra.mxu0 %v757
    %1392 = vmatprep.subr.mxu0 %v762
    %1393 = vmatpush1.msra.mxu0 %v761
    %1394 = vmatprep.subr.mxu0 %v766
    %1395 = vmatpush1.msra.mxu0 %v765
    %1396 = vmatprep.subr.mxu0 %v770
    %1397 = vmatpush1.msra.mxu0 %v769
    %1398 = vmatprep.mubr.f32.mxu0 %v828
    %1399 = vmatmul.mubr.f32.gmra.mrb[0].mxu0 %v826
    %v1400 = vpop.f32.mrb[0].mxu0
    %v1401 = vadd.f32 %v1330, %v1400
    %v1402 = vpop.f32.mrb[0].mxu0
    %v1403 = vadd.f32 %v1332, %v1402
    %1404 = vdwg.mxu0
    %v1405 = vxor.u32 %v1117, 2147483648
    %v1406 = vxor.u32 %v1119, 2147483648
    %v1407 = vxor.u32 %v1401, 2147483648
    %v1408 = vxor.u32 %v1403, 2147483648
    %v1409 = vmul.f32 %v1405, 1.442695
    %v1410 = vpow.pop %v1409
    %v1411 = vmul.f32 %v1406, 1.442695
    %v1412 = vpow.pop %v1411
    %v1413 = vmul.f32 %v1407, 1.442695
    %v1414 = vpow.pop %v1413
    %v1415 = vmul.f32 %v1408, 1.442695
    %v1416 = vpow.pop %v1415
    %v1417 = vadd.f32 %v1410, 1.0
    %v1418 = vadd.f32 %v1412, 1.0
    %v1419 = vadd.f32 %v1414, 1.0
    %v1420 = vadd.f32 %v1416, 1.0
    %v1421 = vrcp.pop %v1417
    %v1422 = vmul.f32 1.0, %v1421
    %v1423 = vrcp.pop %v1418
    %v1424 = vmul.f32 1.0, %v1423
    %v1425 = vrcp.pop %v1419
    %v1426 = vmul.f32 1.0, %v1425
    %v1427 = vrcp.pop %v1420
    %v1428 = vmul.f32 1.0, %v1427
    %v1429 = vmul.f32 %v1117, %v1422
    %v1430 = vmul.f32 %v1119, %v1424
    %v1431 = vmul.f32 %v1401, %v1426
    %v1432 = vmul.f32 %v1403, %v1428
    %v1433 = vld [vmem:[#allocation6] sm:$0xff]
    %v1434 = vld [vmem:[#allocation6 + $0x8] sm:$0xff]
    %v1435 = vld [vmem:[#allocation6 + $0x10] sm:$0xff]
    %v1436 = vld [vmem:[#allocation6 + $0x18] sm:$0xff]
    %v1437 = vld [vmem:[#allocation6 + $0x20] sm:$0xff]
    %v1438 = vld [vmem:[#allocation6 + $0x28] sm:$0xff]
    %v1439 = vld [vmem:[#allocation6 + $0x30] sm:$0xff]
    %v1440 = vld [vmem:[#allocation6 + $0x38] sm:$0xff]
    %v1441 = vld [vmem:[#allocation6 + $0x40] sm:$0xff]
    %v1442 = vld [vmem:[#allocation6 + $0x48] sm:$0xff]
    %v1443 = vld [vmem:[#allocation6 + $0x50] sm:$0xff]
    %v1444 = vld [vmem:[#allocation6 + $0x58] sm:$0xff]
    %v1445 = vld [vmem:[#allocation6 + $0x60] sm:$0xff]
    %v1446 = vld [vmem:[#allocation6 + $0x68] sm:$0xff]
    %v1447 = vld [vmem:[#allocation6 + $0x70] sm:$0xff]
    %v1448 = vld [vmem:[#allocation6 + $0x78] sm:$0xff]
    %v1449 = vld [vmem:[#allocation6 + $0x80] sm:$0xff]
    %v1450 = vld [vmem:[#allocation6 + $0x88] sm:$0xff]
    %v1451 = vld [vmem:[#allocation6 + $0x90] sm:$0xff]
    %v1452 = vld [vmem:[#allocation6 + $0x98] sm:$0xff]
    %v1453 = vld [vmem:[#allocation6 + $0xa0] sm:$0xff]
    %v1454 = vld [vmem:[#allocation6 + $0xa8] sm:$0xff]
    %v1455 = vld [vmem:[#allocation6 + $0xb0] sm:$0xff]
    %v1456 = vld [vmem:[#allocation6 + $0xb8] sm:$0xff]
    %v1457 = vld [vmem:[#allocation6 + $0xc0] sm:$0xff]
    %v1458 = vld [vmem:[#allocation6 + $0xc8] sm:$0xff]
    %v1459 = vld [vmem:[#allocation6 + $0xd0] sm:$0xff]
    %v1460 = vld [vmem:[#allocation6 + $0xd8] sm:$0xff]
    %v1461 = vld [vmem:[#allocation6 + $0xe0] sm:$0xff]
    %v1462 = vld [vmem:[#allocation6 + $0xe8] sm:$0xff]
    %v1463 = vld [vmem:[#allocation6 + $0xf0] sm:$0xff]
    %v1464 = vld [vmem:[#allocation6 + $0xf8] sm:$0xff]
    %v1465 = vld [vmem:[#allocation6 + $0x100] sm:$0xff]
    %v1466 = vld [vmem:[#allocation6 + $0x108] sm:$0xff]
    %v1467 = vld [vmem:[#allocation6 + $0x110] sm:$0xff]
    %v1468 = vld [vmem:[#allocation6 + $0x118] sm:$0xff]
    %v1469 = vld [vmem:[#allocation6 + $0x120] sm:$0xff]
    %v1470 = vld [vmem:[#allocation6 + $0x128] sm:$0xff]
    %v1471 = vld [vmem:[#allocation6 + $0x130] sm:$0xff]
    %v1472 = vld [vmem:[#allocation6 + $0x138] sm:$0xff]
    %v1473 = vld [vmem:[#allocation6 + $0x140] sm:$0xff]
    %v1474 = vld [vmem:[#allocation6 + $0x148] sm:$0xff]
    %v1475 = vld [vmem:[#allocation6 + $0x150] sm:$0xff]
    %v1476 = vld [vmem:[#allocation6 + $0x158] sm:$0xff]
    %v1477 = vld [vmem:[#allocation6 + $0x160] sm:$0xff]
    %v1478 = vld [vmem:[#allocation6 + $0x168] sm:$0xff]
    %v1479 = vld [vmem:[#allocation6 + $0x170] sm:$0xff]
    %v1480 = vld [vmem:[#allocation6 + $0x178] sm:$0xff]
    %v1481 = vld [vmem:[#allocation6 + $0x180] sm:$0xff]
    %v1482 = vld [vmem:[#allocation6 + $0x188] sm:$0xff]
    %v1483 = vld [vmem:[#allocation6 + $0x190] sm:$0xff]
    %v1484 = vld [vmem:[#allocation6 + $0x198] sm:$0xff]
    %v1485 = vld [vmem:[#allocation6 + $0x1a0] sm:$0xff]
    %v1486 = vld [vmem:[#allocation6 + $0x1a8] sm:$0xff]
    %v1487 = vld [vmem:[#allocation6 + $0x1b0] sm:$0xff]
    %v1488 = vld [vmem:[#allocation6 + $0x1b8] sm:$0xff]
    %v1489 = vld [vmem:[#allocation6 + $0x1c0] sm:$0xff]
    %v1490 = vld [vmem:[#allocation6 + $0x1c8] sm:$0xff]
    %v1491 = vld [vmem:[#allocation6 + $0x1d0] sm:$0xff]
    %v1492 = vld [vmem:[#allocation6 + $0x1d8] sm:$0xff]
    %v1493 = vld [vmem:[#allocation6 + $0x1e0] sm:$0xff]
    %v1494 = vld [vmem:[#allocation6 + $0x1e8] sm:$0xff]
    %v1495 = vld [vmem:[#allocation6 + $0x1f0] sm:$0xff]
    %v1496 = vld [vmem:[#allocation6 + $0x1f8] sm:$0xff]
    %v1497 = vld [vmem:[#allocation6 + $0x200] sm:$0xff]
    %v1498 = vld [vmem:[#allocation6 + $0x208] sm:$0xff]
    %v1499 = vld [vmem:[#allocation6 + $0x210] sm:$0xff]
    %v1500 = vld [vmem:[#allocation6 + $0x218] sm:$0xff]
    %v1501 = vld [vmem:[#allocation6 + $0x220] sm:$0xff]
    %v1502 = vld [vmem:[#allocation6 + $0x228] sm:$0xff]
    %v1503 = vld [vmem:[#allocation6 + $0x230] sm:$0xff]
    %v1504 = vld [vmem:[#allocation6 + $0x238] sm:$0xff]
    %v1505 = vld [vmem:[#allocation6 + $0x240] sm:$0xff]
    %v1506 = vld [vmem:[#allocation6 + $0x248] sm:$0xff]
    %v1507 = vld [vmem:[#allocation6 + $0x250] sm:$0xff]
    %v1508 = vld [vmem:[#allocation6 + $0x258] sm:$0xff]
    %v1509 = vld [vmem:[#allocation6 + $0x260] sm:$0xff]
    %v1510 = vld [vmem:[#allocation6 + $0x268] sm:$0xff]
    %v1511 = vld [vmem:[#allocation6 + $0x270] sm:$0xff]
    %v1512 = vld [vmem:[#allocation6 + $0x278] sm:$0xff]
    %v1513 = vld [vmem:[#allocation6 + $0x280] sm:$0xff]
    %v1514 = vld [vmem:[#allocation6 + $0x288] sm:$0xff]
    %v1515 = vld [vmem:[#allocation6 + $0x290] sm:$0xff]
    %v1516 = vld [vmem:[#allocation6 + $0x298] sm:$0xff]
    %v1517 = vld [vmem:[#allocation6 + $0x2a0] sm:$0xff]
    %v1518 = vld [vmem:[#allocation6 + $0x2a8] sm:$0xff]
    %v1519 = vld [vmem:[#allocation6 + $0x2b0] sm:$0xff]
    %v1520 = vld [vmem:[#allocation6 + $0x2b8] sm:$0xff]
    %v1521 = vld [vmem:[#allocation6 + $0x2c0] sm:$0xff]
    %v1522 = vld [vmem:[#allocation6 + $0x2c8] sm:$0xff]
    %v1523 = vld [vmem:[#allocation6 + $0x2d0] sm:$0xff]
    %v1524 = vld [vmem:[#allocation6 + $0x2d8] sm:$0xff]
    %v1525 = vld [vmem:[#allocation6 + $0x2e0] sm:$0xff]
    %v1526 = vld [vmem:[#allocation6 + $0x2e8] sm:$0xff]
    %v1527 = vld [vmem:[#allocation6 + $0x2f0] sm:$0xff]
    %v1528 = vld [vmem:[#allocation6 + $0x2f8] sm:$0xff]
    %v1529 = vld [vmem:[#allocation6 + $0x300] sm:$0xff]
    %v1530 = vld [vmem:[#allocation6 + $0x308] sm:$0xff]
    %v1531 = vld [vmem:[#allocation6 + $0x310] sm:$0xff]
    %v1532 = vld [vmem:[#allocation6 + $0x318] sm:$0xff]
    %v1533 = vld [vmem:[#allocation6 + $0x320] sm:$0xff]
    %v1534 = vld [vmem:[#allocation6 + $0x328] sm:$0xff]
    %v1535 = vld [vmem:[#allocation6 + $0x330] sm:$0xff]
    %v1536 = vld [vmem:[#allocation6 + $0x338] sm:$0xff]
    %v1537 = vld [vmem:[#allocation6 + $0x340] sm:$0xff]
    %v1538 = vld [vmem:[#allocation6 + $0x348] sm:$0xff]
    %v1539 = vld [vmem:[#allocation6 + $0x350] sm:$0xff]
    %v1540 = vld [vmem:[#allocation6 + $0x358] sm:$0xff]
    %v1541 = vld [vmem:[#allocation6 + $0x360] sm:$0xff]
    %v1542 = vld [vmem:[#allocation6 + $0x368] sm:$0xff]
    %v1543 = vld [vmem:[#allocation6 + $0x370] sm:$0xff]
    %v1544 = vld [vmem:[#allocation6 + $0x378] sm:$0xff]
    %v1545 = vld [vmem:[#allocation6 + $0x380] sm:$0xff]
    %v1546 = vld [vmem:[#allocation6 + $0x388] sm:$0xff]
    %v1547 = vld [vmem:[#allocation6 + $0x390] sm:$0xff]
    %v1548 = vld [vmem:[#allocation6 + $0x398] sm:$0xff]
    %v1549 = vld [vmem:[#allocation6 + $0x3a0] sm:$0xff]
    %v1550 = vld [vmem:[#allocation6 + $0x3a8] sm:$0xff]
    %v1551 = vld [vmem:[#allocation6 + $0x3b0] sm:$0xff]
    %v1552 = vld [vmem:[#allocation6 + $0x3b8] sm:$0xff]
    %v1553 = vld [vmem:[#allocation6 + $0x3c0] sm:$0xff]
    %v1554 = vld [vmem:[#allocation6 + $0x3c8] sm:$0xff]
    %v1555 = vld [vmem:[#allocation6 + $0x3d0] sm:$0xff]
    %v1556 = vld [vmem:[#allocation6 + $0x3d8] sm:$0xff]
    %v1557 = vld [vmem:[#allocation6 + $0x3e0] sm:$0xff]
    %v1558 = vld [vmem:[#allocation6 + $0x3e8] sm:$0xff]
    %v1559 = vld [vmem:[#allocation6 + $0x3f0] sm:$0xff]
    %v1560 = vld [vmem:[#allocation6 + $0x3f8] sm:$0xff]
    %v1561 = vld [vmem:[#allocation7] sm:$0x3]
    %v1563 = vlaneseq
    %v1564 = vshrl.u32 %v1563, 7
    %v1565 = vsub.s32 0, %v1564
    %v1566 = vrot.slane %v1561, %v1565
    %v1567 = vlaneseq
    %v1568 = vshrl.u32 %v1567, 7
    %v1569 = vsub.s32 1, %v1568
    %v1570 = vrot.slane %v1561, %v1569
    %1573 = vmatprep.subr.mxu0 %v1434
    %1574 = vmatpush1.msra.mxu0 %v1433
    %1575 = vmatprep.subr.mxu0 %v1436
    %1576 = vmatpush1.msra.mxu0 %v1435
    %1577 = vmatprep.subr.mxu0 %v1438
    %1578 = vmatpush1.msra.mxu0 %v1437
    %1579 = vmatprep.subr.mxu0 %v1440
    %1580 = vmatpush1.msra.mxu0 %v1439
    %1581 = vmatprep.subr.mxu0 %v1442
    %1582 = vmatpush1.msra.mxu0 %v1441
    %1583 = vmatprep.subr.mxu0 %v1444
    %1584 = vmatpush1.msra.mxu0 %v1443
    %1585 = vmatprep.subr.mxu0 %v1446
    %1586 = vmatpush1.msra.mxu0 %v1445
    %1587 = vmatprep.subr.mxu0 %v1448
    %1588 = vmatpush1.msra.mxu0 %v1447
    %1589 = vmatprep.subr.mxu0 %v1450
    %1590 = vmatpush1.msra.mxu0 %v1449
    %1591 = vmatprep.subr.mxu0 %v1452
    %1592 = vmatpush1.msra.mxu0 %v1451
    %1593 = vmatprep.subr.mxu0 %v1454
    %1594 = vmatpush1.msra.mxu0 %v1453
    %1595 = vmatprep.subr.mxu0 %v1456
    %1596 = vmatpush1.msra.mxu0 %v1455
    %1597 = vmatprep.subr.mxu0 %v1458
    %1598 = vmatpush1.msra.mxu0 %v1457
    %1599 = vmatprep.subr.mxu0 %v1460
    %1600 = vmatpush1.msra.mxu0 %v1459
    %1601 = vmatprep.subr.mxu0 %v1462
    %1602 = vmatpush1.msra.mxu0 %v1461
    %1603 = vmatprep.subr.mxu0 %v1464
    %1604 = vmatpush1.msra.mxu0 %v1463
    %1605 = vmatprep.subr.mxu0 %v1466
    %1606 = vmatpush1.msra.mxu0 %v1465
    %1607 = vmatprep.subr.mxu0 %v1468
    %1608 = vmatpush1.msra.mxu0 %v1467
    %1609 = vmatprep.subr.mxu0 %v1470
    %1610 = vmatpush1.msra.mxu0 %v1469
    %1611 = vmatprep.subr.mxu0 %v1472
    %1612 = vmatpush1.msra.mxu0 %v1471
    %1613 = vmatprep.subr.mxu0 %v1474
    %1614 = vmatpush1.msra.mxu0 %v1473
    %1615 = vmatprep.subr.mxu0 %v1476
    %1616 = vmatpush1.msra.mxu0 %v1475
    %1617 = vmatprep.subr.mxu0 %v1478
    %1618 = vmatpush1.msra.mxu0 %v1477
    %1619 = vmatprep.subr.mxu0 %v1480
    %1620 = vmatpush1.msra.mxu0 %v1479
    %1621 = vmatprep.subr.mxu0 %v1482
    %1622 = vmatpush1.msra.mxu0 %v1481
    %1623 = vmatprep.subr.mxu0 %v1484
    %1624 = vmatpush1.msra.mxu0 %v1483
    %1625 = vmatprep.subr.mxu0 %v1486
    %1626 = vmatpush1.msra.mxu0 %v1485
    %1627 = vmatprep.subr.mxu0 %v1488
    %1628 = vmatpush1.msra.mxu0 %v1487
    %1629 = vmatprep.subr.mxu0 %v1490
    %1630 = vmatpush1.msra.mxu0 %v1489
    %1631 = vmatprep.subr.mxu0 %v1492
    %1632 = vmatpush1.msra.mxu0 %v1491
    %1633 = vmatprep.subr.mxu0 %v1494
    %1634 = vmatpush1.msra.mxu0 %v1493
    %1635 = vmatprep.subr.mxu0 %v1496
    %1636 = vmatpush1.msra.mxu0 %v1495
    %1637 = vmatprep.mubr.f32.mxu0 %v1430
    %1638 = vmatmul.mubr.f32.gmra.mrb[0].mxu0 %v1429
    %v1639 = vpop.f32.mrb[0].mxu0
    %v1640 = vadd.f32 %v1566, %v1639
    %v1641 = vpop.f32.mrb[0].mxu0
    %v1642 = vadd.f32 %v1570, %v1641
    %1643 = vdwg.mxu0
    %1644 = vmatprep.subr.mxu0 %v1498
    %1645 = vmatpush1.msra.mxu0 %v1497
    %1646 = vmatprep.subr.mxu0 %v1500
    %1647 = vmatpush1.msra.mxu0 %v1499
    %1648 = vmatprep.subr.mxu0 %v1502
    %1649 = vmatpush1.msra.mxu0 %v1501
    %1650 = vmatprep.subr.mxu0 %v1504
    %1651 = vmatpush1.msra.mxu0 %v1503
    %1652 = vmatprep.subr.mxu0 %v1506
    %1653 = vmatpush1.msra.mxu0 %v1505
    %1654 = vmatprep.subr.mxu0 %v1508
    %1655 = vmatpush1.msra.mxu0 %v1507
    %1656 = vmatprep.subr.mxu0 %v1510
    %1657 = vmatpush1.msra.mxu0 %v1509
    %1658 = vmatprep.subr.mxu0 %v1512
    %1659 = vmatpush1.msra.mxu0 %v1511
    %1660 = vmatprep.subr.mxu0 %v1514
    %1661 = vmatpush1.msra.mxu0 %v1513
    %1662 = vmatprep.subr.mxu0 %v1516
    %1663 = vmatpush1.msra.mxu0 %v1515
    %1664 = vmatprep.subr.mxu0 %v1518
    %1665 = vmatpush1.msra.mxu0 %v1517
    %1666 = vmatprep.subr.mxu0 %v1520
    %1667 = vmatpush1.msra.mxu0 %v1519
    %1668 = vmatprep.subr.mxu0 %v1522
    %1669 = vmatpush1.msra.mxu0 %v1521
    %1670 = vmatprep.subr.mxu0 %v1524
    %1671 = vmatpush1.msra.mxu0 %v1523
    %1672 = vmatprep.subr.mxu0 %v1526
    %1673 = vmatpush1.msra.mxu0 %v1525
    %1674 = vmatprep.subr.mxu0 %v1528
    %1675 = vmatpush1.msra.mxu0 %v1527
    %1676 = vmatprep.subr.mxu0 %v1530
    %1677 = vmatpush1.msra.mxu0 %v1529
    %1678 = vmatprep.subr.mxu0 %v1532
    %1679 = vmatpush1.msra.mxu0 %v1531
    %1680 = vmatprep.subr.mxu0 %v1534
    %1681 = vmatpush1.msra.mxu0 %v1533
    %1682 = vmatprep.subr.mxu0 %v1536
    %1683 = vmatpush1.msra.mxu0 %v1535
    %1684 = vmatprep.subr.mxu0 %v1538
    %1685 = vmatpush1.msra.mxu0 %v1537
    %1686 = vmatprep.subr.mxu0 %v1540
    %1687 = vmatpush1.msra.mxu0 %v1539
    %1688 = vmatprep.subr.mxu0 %v1542
    %1689 = vmatpush1.msra.mxu0 %v1541
    %1690 = vmatprep.subr.mxu0 %v1544
    %1691 = vmatpush1.msra.mxu0 %v1543
    %1692 = vmatprep.subr.mxu0 %v1546
    %1693 = vmatpush1.msra.mxu0 %v1545
    %1694 = vmatprep.subr.mxu0 %v1548
    %1695 = vmatpush1.msra.mxu0 %v1547
    %1696 = vmatprep.subr.mxu0 %v1550
    %1697 = vmatpush1.msra.mxu0 %v1549
    %1698 = vmatprep.subr.mxu0 %v1552
    %1699 = vmatpush1.msra.mxu0 %v1551
    %1700 = vmatprep.subr.mxu0 %v1554
    %1701 = vmatpush1.msra.mxu0 %v1553
    %1702 = vmatprep.subr.mxu0 %v1556
    %1703 = vmatpush1.msra.mxu0 %v1555
    %1704 = vmatprep.subr.mxu0 %v1558
    %1705 = vmatpush1.msra.mxu0 %v1557
    %1706 = vmatprep.subr.mxu0 %v1560
    %1707 = vmatpush1.msra.mxu0 %v1559
    %1708 = vmatprep.mubr.f32.mxu0 %v1432
    %1709 = vmatmul.mubr.f32.gmra.mrb[0].mxu0 %v1431
    %v1710 = vpop.f32.mrb[0].mxu0
    %v1711 = vadd.f32 %v1640, %v1710
    %v1712 = vpop.f32.mrb[0].mxu0
    %v1713 = vadd.f32 %v1642, %v1712
    %1714 = vdwg.mxu0
    %v1715 = vxor.u32 %v1711, 2147483648
    %v1716 = vxor.u32 %v1713, 2147483648
    %v1717 = vmul.f32 %v1715, 1.442695
    %v1718 = vpow.pop %v1717
    %v1719 = vmul.f32 %v1716, 1.442695
    %v1720 = vpow.pop %v1719
    %v1721 = vadd.f32 %v1718, 1.0
    %v1722 = vadd.f32 %v1720, 1.0
    %v1723 = vrcp.pop %v1721
    %v1724 = vmul.f32 1.0, %v1723
    %v1725 = vrcp.pop %v1722
    %v1726 = vmul.f32 1.0, %v1725
    %v1727 = vmul.f32 %v1711, %v1724
    %v1728 = vmul.f32 %v1713, %v1726
    %v1729 = vld [vmem:[#allocation9] sm:$0xff]
    %v1730 = vld [vmem:[#allocation9 + $0x8] sm:$0xff]
    %v1731 = vld [vmem:[#allocation9 + $0x10] sm:$0xff]
    %v1732 = vld [vmem:[#allocation9 + $0x18] sm:$0xff]
    %v1733 = vld [vmem:[#allocation9 + $0x20] sm:$0xff]
    %v1734 = vld [vmem:[#allocation9 + $0x28] sm:$0xff]
    %v1735 = vld [vmem:[#allocation9 + $0x30] sm:$0xff]
    %v1736 = vld [vmem:[#allocation9 + $0x38] sm:$0xff]
    %v1737 = vld [vmem:[#allocation9 + $0x40] sm:$0xff]
    %v1738 = vld [vmem:[#allocation9 + $0x48] sm:$0xff]
    %v1739 = vld [vmem:[#allocation9 + $0x50] sm:$0xff]
    %v1740 = vld [vmem:[#allocation9 + $0x58] sm:$0xff]
    %v1741 = vld [vmem:[#allocation9 + $0x60] sm:$0xff]
    %v1742 = vld [vmem:[#allocation9 + $0x68] sm:$0xff]
    %v1743 = vld [vmem:[#allocation9 + $0x70] sm:$0xff]
    %v1744 = vld [vmem:[#allocation9 + $0x78] sm:$0xff]
    %v1745 = vld [vmem:[#allocation9 + $0x80] sm:$0xff]
    %v1746 = vld [vmem:[#allocation9 + $0x88] sm:$0xff]
    %v1747 = vld [vmem:[#allocation9 + $0x90] sm:$0xff]
    %v1748 = vld [vmem:[#allocation9 + $0x98] sm:$0xff]
    %v1749 = vld [vmem:[#allocation9 + $0xa0] sm:$0xff]
    %v1750 = vld [vmem:[#allocation9 + $0xa8] sm:$0xff]
    %v1751 = vld [vmem:[#allocation9 + $0xb0] sm:$0xff]
    %v1752 = vld [vmem:[#allocation9 + $0xb8] sm:$0xff]
    %v1753 = vld [vmem:[#allocation9 + $0xc0] sm:$0xff]
    %v1754 = vld [vmem:[#allocation9 + $0xc8] sm:$0xff]
    %v1755 = vld [vmem:[#allocation9 + $0xd0] sm:$0xff]
    %v1756 = vld [vmem:[#allocation9 + $0xd8] sm:$0xff]
    %v1757 = vld [vmem:[#allocation9 + $0xe0] sm:$0xff]
    %v1758 = vld [vmem:[#allocation9 + $0xe8] sm:$0xff]
    %v1759 = vld [vmem:[#allocation9 + $0xf0] sm:$0xff]
    %v1760 = vld [vmem:[#allocation9 + $0xf8] sm:$0xff]
    %v1761 = vld [vmem:[#allocation10] sm:$0x1]
    %v1763 = vlaneseq
    %v1764 = vshrl.u32 %v1763, 7
    %v1765 = vsub.s32 0, %v1764
    %v1766 = vrot.slane %v1761, %v1765
    %1768 = vmatprep.subr.mxu0 0.0
    %1769 = vmatpush1.msra.mxu0 %v1729
    %1770 = vmatprep.subr.mxu0 0.0
    %1771 = vmatpush1.msra.mxu0 %v1730
    %1772 = vmatprep.subr.mxu0 0.0
    %1773 = vmatpush1.msra.mxu0 %v1731
    %1774 = vmatprep.subr.mxu0 0.0
    %1775 = vmatpush1.msra.mxu0 %v1732
    %1776 = vmatprep.subr.mxu0 0.0
    %1777 = vmatpush1.msra.mxu0 %v1733
    %1778 = vmatprep.subr.mxu0 0.0
    %1779 = vmatpush1.msra.mxu0 %v1734
    %1780 = vmatprep.subr.mxu0 0.0
    %1781 = vmatpush1.msra.mxu0 %v1735
    %1782 = vmatprep.subr.mxu0 0.0
    %1783 = vmatpush1.msra.mxu0 %v1736
    %1784 = vmatprep.subr.mxu0 0.0
    %1785 = vmatpush1.msra.mxu0 %v1737
    %1786 = vmatprep.subr.mxu0 0.0
    %1787 = vmatpush1.msra.mxu0 %v1738
    %1788 = vmatprep.subr.mxu0 0.0
    %1789 = vmatpush1.msra.mxu0 %v1739
    %1790 = vmatprep.subr.mxu0 0.0
    %1791 = vmatpush1.msra.mxu0 %v1740
    %1792 = vmatprep.subr.mxu0 0.0
    %1793 = vmatpush1.msra.mxu0 %v1741
    %1794 = vmatprep.subr.mxu0 0.0
    %1795 = vmatpush1.msra.mxu0 %v1742
    %1796 = vmatprep.subr.mxu0 0.0
    %1797 = vmatpush1.msra.mxu0 %v1743
    %1798 = vmatprep.subr.mxu0 0.0
    %1799 = vmatpush1.msra.mxu0 %v1744
    %1800 = vmatprep.subr.mxu0 0.0
    %1801 = vmatpush1.msra.mxu0 %v1745
    %1802 = vmatprep.subr.mxu0 0.0
    %1803 = vmatpush1.msra.mxu0 %v1746
    %1804 = vmatprep.subr.mxu0 0.0
    %1805 = vmatpush1.msra.mxu0 %v1747
    %1806 = vmatprep.subr.mxu0 0.0
    %1807 = vmatpush1.msra.mxu0 %v1748
    %1808 = vmatprep.subr.mxu0 0.0
    %1809 = vmatpush1.msra.mxu0 %v1749
    %1810 = vmatprep.subr.mxu0 0.0
    %1811 = vmatpush1.msra.mxu0 %v1750
    %1812 = vmatprep.subr.mxu0 0.0
    %1813 = vmatpush1.msra.mxu0 %v1751
    %1814 = vmatprep.subr.mxu0 0.0
    %1815 = vmatpush1.msra.mxu0 %v1752
    %1816 = vmatprep.subr.mxu0 0.0
    %1817 = vmatpush1.msra.mxu0 %v1753
    %1818 = vmatprep.subr.mxu0 0.0
    %1819 = vmatpush1.msra.mxu0 %v1754
    %1820 = vmatprep.subr.mxu0 0.0
    %1821 = vmatpush1.msra.mxu0 %v1755
    %1822 = vmatprep.subr.mxu0 0.0
    %1823 = vmatpush1.msra.mxu0 %v1756
    %1824 = vmatprep.subr.mxu0 0.0
    %1825 = vmatpush1.msra.mxu0 %v1757
    %1826 = vmatprep.subr.mxu0 0.0
    %1827 = vmatpush1.msra.mxu0 %v1758
    %1828 = vmatprep.subr.mxu0 0.0
    %1829 = vmatpush1.msra.mxu0 %v1759
    %1830 = vmatprep.subr.mxu0 0.0
    %1831 = vmatpush1.msra.mxu0 %v1760
    %1832 = vmatprep.mubr.f32.mxu0 %v1728
    %1833 = vmatmul.mubr.f32.gmra.mrb[0].mxu0 %v1727
    %v1834 = vpop.f32.mrb[0].mxu0
    %v1835 = vadd.f32 %v1766, %v1834
    %v1836 = vpop.f32.mrb[0].mxu0
    %1837 = vdwg.mxu0
    %v1838 = vxor.u32 %v1835, 2147483648
    %v1839 = vmul.f32 %v1838, 1.442695
    %v1840 = vpow.pop %v1839
    %v1841 = vadd.f32 %v1840, 1.0
    %v1842 = vrcp.pop %v1841
    %v1843 = vmul.f32 1.0, %v1842
    %v1844 = vmul.f32 %v1835, %v1843
    %v1845 = vld [vmem:[#allocation12] sm:$0xff]
    %v1846 = vld [vmem:[#allocation12 + $0x8] sm:$0xff]
    %v1847 = vld [vmem:[#allocation12 + $0x10] sm:$0xff]
    %v1848 = vld [vmem:[#allocation12 + $0x18] sm:$0xff]
    %v1849 = vld [vmem:[#allocation12 + $0x20] sm:$0xff]
    %v1850 = vld [vmem:[#allocation12 + $0x28] sm:$0xff]
    %v1851 = vld [vmem:[#allocation12 + $0x30] sm:$0xff]
    %v1852 = vld [vmem:[#allocation12 + $0x38] sm:$0xff]
    %v1853 = vld [vmem:[#allocation12 + $0x40] sm:$0xff]
    %v1854 = vld [vmem:[#allocation12 + $0x48] sm:$0xff]
    %v1855 = vld [vmem:[#allocation12 + $0x50] sm:$0xff]
    %v1856 = vld [vmem:[#allocation12 + $0x58] sm:$0xff]
    %v1857 = vld [vmem:[#allocation12 + $0x60] sm:$0xff]
    %v1858 = vld [vmem:[#allocation12 + $0x68] sm:$0xff]
    %v1859 = vld [vmem:[#allocation12 + $0x70] sm:$0xff]
    %v1860 = vld [vmem:[#allocation12 + $0x78] sm:$0xff]
    %v1861 = vld [vmem:[#allocation13] sm:$0x1]
    %v1863 = vlaneseq
    %v1864 = vshrl.u32 %v1863, 7
    %v1865 = vsub.s32 0, %v1864
    %v1866 = vrot.slane %v1861, %v1865
    %1868 = vmatprep.subr.mxu0 0.0
    %1869 = vmatpush1.msra.mxu0 %v1845
    %1870 = vmatprep.subr.mxu0 0.0
    %1871 = vmatpush1.msra.mxu0 %v1846
    %1872 = vmatprep.subr.mxu0 0.0
    %1873 = vmatpush1.msra.mxu0 %v1847
    %1874 = vmatprep.subr.mxu0 0.0
    %1875 = vmatpush1.msra.mxu0 %v1848
    %1876 = vmatprep.subr.mxu0 0.0
    %1877 = vmatpush1.msra.mxu0 %v1849
    %1878 = vmatprep.subr.mxu0 0.0
    %1879 = vmatpush1.msra.mxu0 %v1850
    %1880 = vmatprep.subr.mxu0 0.0
    %1881 = vmatpush1.msra.mxu0 %v1851
    %1882 = vmatprep.subr.mxu0 0.0
    %1883 = vmatpush1.msra.mxu0 %v1852
    %1884 = vmatprep.subr.mxu0 0.0
    %1885 = vmatpush1.msra.mxu0 %v1853
    %1886 = vmatprep.subr.mxu0 0.0
    %1887 = vmatpush1.msra.mxu0 %v1854
    %1888 = vmatprep.subr.mxu0 0.0
    %1889 = vmatpush1.msra.mxu0 %v1855
    %1890 = vmatprep.subr.mxu0 0.0
    %1891 = vmatpush1.msra.mxu0 %v1856
    %1892 = vmatprep.subr.mxu0 0.0
    %1893 = vmatpush1.msra.mxu0 %v1857
    %1894 = vmatprep.subr.mxu0 0.0
    %1895 = vmatpush1.msra.mxu0 %v1858
    %1896 = vmatprep.subr.mxu0 0.0
    %1897 = vmatpush1.msra.mxu0 %v1859
    %1898 = vmatprep.subr.mxu0 0.0
    %1899 = vmatpush1.msra.mxu0 %v1860
    %1900 = vmatprep.subr.mxu0 0.0
    %1901 = vmatpush1.msra.mxu0 0.0
    %1902 = vmatprep.subr.mxu0 0.0
    %1903 = vmatpush1.msra.mxu0 0.0
    %1904 = vmatprep.subr.mxu0 0.0
    %1905 = vmatpush1.msra.mxu0 0.0
    %1906 = vmatprep.subr.mxu0 0.0
    %1907 = vmatpush1.msra.mxu0 0.0
    %1908 = vmatprep.subr.mxu0 0.0
    %1909 = vmatpush1.msra.mxu0 0.0
    %1910 = vmatprep.subr.mxu0 0.0
    %1911 = vmatpush1.msra.mxu0 0.0
    %1912 = vmatprep.subr.mxu0 0.0
    %1913 = vmatpush1.msra.mxu0 0.0
    %1914 = vmatprep.subr.mxu0 0.0
    %1915 = vmatpush1.msra.mxu0 0.0
    %1916 = vmatprep.subr.mxu0 0.0
    %1917 = vmatpush1.msra.mxu0 0.0
    %1918 = vmatprep.subr.mxu0 0.0
    %1919 = vmatpush1.msra.mxu0 0.0
    %1920 = vmatprep.subr.mxu0 0.0
    %1921 = vmatpush1.msra.mxu0 0.0
    %1922 = vmatprep.subr.mxu0 0.0
    %1923 = vmatpush1.msra.mxu0 0.0
    %1924 = vmatprep.subr.mxu0 0.0
    %1925 = vmatpush1.msra.mxu0 0.0
    %1926 = vmatprep.subr.mxu0 0.0
    %1927 = vmatpush1.msra.mxu0 0.0
    %1928 = vmatprep.subr.mxu0 0.0
    %1929 = vmatpush1.msra.mxu0 0.0
    %1930 = vmatprep.subr.mxu0 0.0
    %1931 = vmatpush1.msra.mxu0 0.0
    %1932 = vmatprep.mubr.f32.mxu0 0.0
    %1933 = vmatmul.mubr.f32.gmra.mrb[0].mxu0 %v1844
    %v1934 = vpop.f32.mrb[0].mxu0
    %v1935 = vadd.f32 %v1866, %v1934
    %v1936 = vpop.f32.mrb[0].mxu0
    %1937 = vdwg.mxu0
    %v1938 = vld [vmem:[#allocation15] sm:$0xff]
    %v1939 = vld [vmem:[#allocation15 + $0x8] sm:$0xff]
    %v1940 = vld [vmem:[#allocation15 + $0x10] sm:$0xff]
    %v1941 = vld [vmem:[#allocation15 + $0x18] sm:$0xff]
    %v1942 = vld [vmem:[#allocation15 + $0x20] sm:$0xff]
    %v1943 = vld [vmem:[#allocation15 + $0x28] sm:$0xff]
    %v1944 = vld [vmem:[#allocation15 + $0x30] sm:$0xff]
    %v1945 = vld [vmem:[#allocation15 + $0x38] sm:$0xff]
    %v1946 = vld [vmem:[#allocation15 + $0x40] sm:$0xff]
    %v1947 = vld [vmem:[#allocation15 + $0x48] sm:$0xff]
    %v1948 = vld [vmem:[#allocation15 + $0x50] sm:$0xff]
    %v1949 = vld [vmem:[#allocation15 + $0x58] sm:$0xff]
    %v1950 = vld [vmem:[#allocation15 + $0x60] sm:$0xff]
    %v1951 = vld [vmem:[#allocation15 + $0x68] sm:$0xff]
    %v1952 = vld [vmem:[#allocation15 + $0x70] sm:$0xff]
    %v1953 = vld [vmem:[#allocation15 + $0x78] sm:$0xff]
    %v1954 = vld [vmem:[#allocation16] sm:$0x1]
    %v1956 = vlaneseq
    %v1957 = vshrl.u32 %v1956, 7
    %v1958 = vsub.s32 0, %v1957
    %v1959 = vrot.slane %v1954, %v1958
    %1961 = vmatprep.subr.mxu0 0.0
    %1962 = vmatpush1.msra.mxu0 %v1938
    %1963 = vmatprep.subr.mxu0 0.0
    %1964 = vmatpush1.msra.mxu0 %v1939
    %1965 = vmatprep.subr.mxu0 0.0
    %1966 = vmatpush1.msra.mxu0 %v1940
    %1967 = vmatprep.subr.mxu0 0.0
    %1968 = vmatpush1.msra.mxu0 %v1941
    %1969 = vmatprep.subr.mxu0 0.0
    %1970 = vmatpush1.msra.mxu0 %v1942
    %1971 = vmatprep.subr.mxu0 0.0
    %1972 = vmatpush1.msra.mxu0 %v1943
    %1973 = vmatprep.subr.mxu0 0.0
    %1974 = vmatpush1.msra.mxu0 %v1944
    %1975 = vmatprep.subr.mxu0 0.0
    %1976 = vmatpush1.msra.mxu0 %v1945
    %1977 = vmatprep.subr.mxu0 0.0
    %1978 = vmatpush1.msra.mxu0 %v1946
    %1979 = vmatprep.subr.mxu0 0.0
    %1980 = vmatpush1.msra.mxu0 %v1947
    %1981 = vmatprep.subr.mxu0 0.0
    %1982 = vmatpush1.msra.mxu0 %v1948
    %1983 = vmatprep.subr.mxu0 0.0
    %1984 = vmatpush1.msra.mxu0 %v1949
    %1985 = vmatprep.subr.mxu0 0.0
    %1986 = vmatpush1.msra.mxu0 %v1950
    %1987 = vmatprep.subr.mxu0 0.0
    %1988 = vmatpush1.msra.mxu0 %v1951
    %1989 = vmatprep.subr.mxu0 0.0
    %1990 = vmatpush1.msra.mxu0 %v1952
    %1991 = vmatprep.subr.mxu0 0.0
    %1992 = vmatpush1.msra.mxu0 %v1953
    %1993 = vmatprep.subr.mxu0 0.0
    %1994 = vmatpush1.msra.mxu0 0.0
    %1995 = vmatprep.subr.mxu0 0.0
    %1996 = vmatpush1.msra.mxu0 0.0
    %1997 = vmatprep.subr.mxu0 0.0
    %1998 = vmatpush1.msra.mxu0 0.0
    %1999 = vmatprep.subr.mxu0 0.0
    %2000 = vmatpush1.msra.mxu0 0.0
    %2001 = vmatprep.subr.mxu0 0.0
    %2002 = vmatpush1.msra.mxu0 0.0
    %2003 = vmatprep.subr.mxu0 0.0
    %2004 = vmatpush1.msra.mxu0 0.0
    %2005 = vmatprep.subr.mxu0 0.0
    %2006 = vmatpush1.msra.mxu0 0.0
    %2007 = vmatprep.subr.mxu0 0.0
    %2008 = vmatpush1.msra.mxu0 0.0
    %2009 = vmatprep.subr.mxu0 0.0
    %2010 = vmatpush1.msra.mxu0 0.0
    %2011 = vmatprep.subr.mxu0 0.0
    %2012 = vmatpush1.msra.mxu0 0.0
    %2013 = vmatprep.subr.mxu0 0.0
    %2014 = vmatpush1.msra.mxu0 0.0
    %2015 = vmatprep.subr.mxu0 0.0
    %2016 = vmatpush1.msra.mxu0 0.0
    %2017 = vmatprep.subr.mxu0 0.0
    %2018 = vmatpush1.msra.mxu0 0.0
    %2019 = vmatprep.subr.mxu0 0.0
    %2020 = vmatpush1.msra.mxu0 0.0
    %2021 = vmatprep.subr.mxu0 0.0
    %2022 = vmatpush1.msra.mxu0 0.0
    %2023 = vmatprep.subr.mxu0 0.0
    %2024 = vmatpush1.msra.mxu0 0.0
    %2025 = vmatprep.mubr.f32.mxu0 0.0
    %2026 = vmatmul.mubr.f32.gmra.mrb[0].mxu0 %v1935
    %v2027 = vpop.f32.mrb[0].mxu0
    %v2028 = vadd.f32 %v1959, %v2027
    %v2029 = vpop.f32.mrb[0].mxu0
    %2030 = vdwg.mxu0
    %v2031 = vxor.u32 %v2028, 2147483648
    %v2032 = vmul.f32 %v2031, 1.442695
    %v2033 = vpow.pop %v2032
    %v2034 = vadd.f32 %v2033, 1.0
    %v2035 = vrcp.pop %v2034
    %v2036 = vmul.f32 1.0, %v2035
    %v2037 = vmul.f32 %v2028, %v2036
    %v2038 = vld [vmem:[#allocation18] sm:$0xff]
    %v2039 = vld [vmem:[#allocation18 + $0x8] sm:$0xff]
    %v2040 = vld [vmem:[#allocation18 + $0x10] sm:$0xff]
    %v2041 = vld [vmem:[#allocation18 + $0x18] sm:$0xff]
    %v2042 = vld [vmem:[#allocation18 + $0x20] sm:$0xff]
    %v2043 = vld [vmem:[#allocation18 + $0x28] sm:$0xff]
    %v2044 = vld [vmem:[#allocation18 + $0x30] sm:$0xff]
    %v2045 = vld [vmem:[#allocation18 + $0x38] sm:$0xff]
    %v2046 = vld [vmem:[#allocation18 + $0x40] sm:$0xff]
    %v2047 = vld [vmem:[#allocation18 + $0x48] sm:$0xff]
    %v2048 = vld [vmem:[#allocation18 + $0x50] sm:$0xff]
    %v2049 = vld [vmem:[#allocation18 + $0x58] sm:$0xff]
    %v2050 = vld [vmem:[#allocation18 + $0x60] sm:$0xff]
    %v2051 = vld [vmem:[#allocation18 + $0x68] sm:$0xff]
    %v2052 = vld [vmem:[#allocation18 + $0x70] sm:$0xff]
    %v2053 = vld [vmem:[#allocation18 + $0x78] sm:$0xff]
    %v2054 = vld [vmem:[#allocation18 + $0x80] sm:$0xff]
    %v2055 = vld [vmem:[#allocation18 + $0x88] sm:$0xff]
    %v2056 = vld [vmem:[#allocation18 + $0x90] sm:$0xff]
    %v2057 = vld [vmem:[#allocation18 + $0x98] sm:$0xff]
    %v2058 = vld [vmem:[#allocation18 + $0xa0] sm:$0xff]
    %v2059 = vld [vmem:[#allocation18 + $0xa8] sm:$0xff]
    %v2060 = vld [vmem:[#allocation18 + $0xb0] sm:$0xff]
    %v2061 = vld [vmem:[#allocation18 + $0xb8] sm:$0xff]
    %v2062 = vld [vmem:[#allocation18 + $0xc0] sm:$0xff]
    %v2063 = vld [vmem:[#allocation18 + $0xc8] sm:$0xff]
    %v2064 = vld [vmem:[#allocation18 + $0xd0] sm:$0xff]
    %v2065 = vld [vmem:[#allocation18 + $0xd8] sm:$0xff]
    %v2066 = vld [vmem:[#allocation18 + $0xe0] sm:$0xff]
    %v2067 = vld [vmem:[#allocation18 + $0xe8] sm:$0xff]
    %v2068 = vld [vmem:[#allocation18 + $0xf0] sm:$0xff]
    %v2069 = vld [vmem:[#allocation18 + $0xf8] sm:$0xff]
    %v2070 = vld [vmem:[#allocation19] sm:$0x3]
    %v2072 = vlaneseq
    %v2073 = vshrl.u32 %v2072, 7
    %v2074 = vsub.s32 0, %v2073
    %v2075 = vrot.slane %v2070, %v2074
    %v2076 = vlaneseq
    %v2077 = vshrl.u32 %v2076, 7
    %v2078 = vsub.s32 1, %v2077
    %v2079 = vrot.slane %v2070, %v2078
    %2082 = vmatprep.subr.mxu0 %v2039
    %2083 = vmatpush1.msra.mxu0 %v2038
    %2084 = vmatprep.subr.mxu0 %v2041
    %2085 = vmatpush1.msra.mxu0 %v2040
    %2086 = vmatprep.subr.mxu0 %v2043
    %2087 = vmatpush1.msra.mxu0 %v2042
    %2088 = vmatprep.subr.mxu0 %v2045
    %2089 = vmatpush1.msra.mxu0 %v2044
    %2090 = vmatprep.subr.mxu0 %v2047
    %2091 = vmatpush1.msra.mxu0 %v2046
    %2092 = vmatprep.subr.mxu0 %v2049
    %2093 = vmatpush1.msra.mxu0 %v2048
    %2094 = vmatprep.subr.mxu0 %v2051
    %2095 = vmatpush1.msra.mxu0 %v2050
    %2096 = vmatprep.subr.mxu0 %v2053
    %2097 = vmatpush1.msra.mxu0 %v2052
    %2098 = vmatprep.subr.mxu0 %v2055
    %2099 = vmatpush1.msra.mxu0 %v2054
    %2100 = vmatprep.subr.mxu0 %v2057
    %2101 = vmatpush1.msra.mxu0 %v2056
    %2102 = vmatprep.subr.mxu0 %v2059
    %2103 = vmatpush1.msra.mxu0 %v2058
    %2104 = vmatprep.subr.mxu0 %v2061
    %2105 = vmatpush1.msra.mxu0 %v2060
    %2106 = vmatprep.subr.mxu0 %v2063
    %2107 = vmatpush1.msra.mxu0 %v2062
    %2108 = vmatprep.subr.mxu0 %v2065
    %2109 = vmatpush1.msra.mxu0 %v2064
    %2110 = vmatprep.subr.mxu0 %v2067
    %2111 = vmatpush1.msra.mxu0 %v2066
    %2112 = vmatprep.subr.mxu0 %v2069
    %2113 = vmatpush1.msra.mxu0 %v2068
    %2114 = vmatprep.subr.mxu0 0.0
    %2115 = vmatpush1.msra.mxu0 0.0
    %2116 = vmatprep.subr.mxu0 0.0
    %2117 = vmatpush1.msra.mxu0 0.0
    %2118 = vmatprep.subr.mxu0 0.0
    %2119 = vmatpush1.msra.mxu0 0.0
    %2120 = vmatprep.subr.mxu0 0.0
    %2121 = vmatpush1.msra.mxu0 0.0
    %2122 = vmatprep.subr.mxu0 0.0
    %2123 = vmatpush1.msra.mxu0 0.0
    %2124 = vmatprep.subr.mxu0 0.0
    %2125 = vmatpush1.msra.mxu0 0.0
    %2126 = vmatprep.subr.mxu0 0.0
    %2127 = vmatpush1.msra.mxu0 0.0
    %2128 = vmatprep.subr.mxu0 0.0
    %2129 = vmatpush1.msra.mxu0 0.0
    %2130 = vmatprep.subr.mxu0 0.0
    %2131 = vmatpush1.msra.mxu0 0.0
    %2132 = vmatprep.subr.mxu0 0.0
    %2133 = vmatpush1.msra.mxu0 0.0
    %2134 = vmatprep.subr.mxu0 0.0
    %2135 = vmatpush1.msra.mxu0 0.0
    %2136 = vmatprep.subr.mxu0 0.0
    %2137 = vmatpush1.msra.mxu0 0.0
    %2138 = vmatprep.subr.mxu0 0.0
    %2139 = vmatpush1.msra.mxu0 0.0
    %2140 = vmatprep.subr.mxu0 0.0
    %2141 = vmatpush1.msra.mxu0 0.0
    %2142 = vmatprep.subr.mxu0 0.0
    %2143 = vmatpush1.msra.mxu0 0.0
    %2144 = vmatprep.subr.mxu0 0.0
    %2145 = vmatpush1.msra.mxu0 0.0
    %2146 = vmatprep.mubr.f32.mxu0 0.0
    %2147 = vmatmul.mubr.f32.gmra.mrb[0].mxu0 %v2037
    %v2148 = vpop.f32.mrb[0].mxu0
    %v2149 = vadd.f32 %v2075, %v2148
    %v2150 = vpop.f32.mrb[0].mxu0
    %v2151 = vadd.f32 %v2079, %v2150
    %2152 = vdwg.mxu0
    %v2153 = vxor.u32 %v2149, 2147483648
    %v2154 = vxor.u32 %v2151, 2147483648
    %v2155 = vmul.f32 %v2153, 1.442695
    %v2156 = vpow.pop %v2155
    %v2157 = vmul.f32 %v2154, 1.442695
    %v2158 = vpow.pop %v2157
    %v2159 = vadd.f32 %v2156, 1.0
    %v2160 = vadd.f32 %v2158, 1.0
    %v2161 = vrcp.pop %v2159
    %v2162 = vmul.f32 1.0, %v2161
    %v2163 = vrcp.pop %v2160
    %v2164 = vmul.f32 1.0, %v2163
    %v2165 = vmul.f32 %v2149, %v2162
    %v2166 = vmul.f32 %v2151, %v2164
    %v2167 = vld [vmem:[#allocation21] sm:$0xff]
    %v2168 = vld [vmem:[#allocation21 + $0x8] sm:$0xff]
    %v2169 = vld [vmem:[#allocation21 + $0x10] sm:$0xff]
    %v2170 = vld [vmem:[#allocation21 + $0x18] sm:$0xff]
    %v2171 = vld [vmem:[#allocation21 + $0x20] sm:$0xff]
    %v2172 = vld [vmem:[#allocation21 + $0x28] sm:$0xff]
    %v2173 = vld [vmem:[#allocation21 + $0x30] sm:$0xff]
    %v2174 = vld [vmem:[#allocation21 + $0x38] sm:$0xff]
    %v2175 = vld [vmem:[#allocation21 + $0x40] sm:$0xff]
    %v2176 = vld [vmem:[#allocation21 + $0x48] sm:$0xff]
    %v2177 = vld [vmem:[#allocation21 + $0x50] sm:$0xff]
    %v2178 = vld [vmem:[#allocation21 + $0x58] sm:$0xff]
    %v2179 = vld [vmem:[#allocation21 + $0x60] sm:$0xff]
    %v2180 = vld [vmem:[#allocation21 + $0x68] sm:$0xff]
    %v2181 = vld [vmem:[#allocation21 + $0x70] sm:$0xff]
    %v2182 = vld [vmem:[#allocation21 + $0x78] sm:$0xff]
    %v2183 = vld [vmem:[#allocation21 + $0x80] sm:$0xff]
    %v2184 = vld [vmem:[#allocation21 + $0x88] sm:$0xff]
    %v2185 = vld [vmem:[#allocation21 + $0x90] sm:$0xff]
    %v2186 = vld [vmem:[#allocation21 + $0x98] sm:$0xff]
    %v2187 = vld [vmem:[#allocation21 + $0xa0] sm:$0xff]
    %v2188 = vld [vmem:[#allocation21 + $0xa8] sm:$0xff]
    %v2189 = vld [vmem:[#allocation21 + $0xb0] sm:$0xff]
    %v2190 = vld [vmem:[#allocation21 + $0xb8] sm:$0xff]
    %v2191 = vld [vmem:[#allocation21 + $0xc0] sm:$0xff]
    %v2192 = vld [vmem:[#allocation21 + $0xc8] sm:$0xff]
    %v2193 = vld [vmem:[#allocation21 + $0xd0] sm:$0xff]
    %v2194 = vld [vmem:[#allocation21 + $0xd8] sm:$0xff]
    %v2195 = vld [vmem:[#allocation21 + $0xe0] sm:$0xff]
    %v2196 = vld [vmem:[#allocation21 + $0xe8] sm:$0xff]
    %v2197 = vld [vmem:[#allocation21 + $0xf0] sm:$0xff]
    %v2198 = vld [vmem:[#allocation21 + $0xf8] sm:$0xff]
    %v2199 = vld [vmem:[#allocation21 + $0x100] sm:$0xff]
    %v2200 = vld [vmem:[#allocation21 + $0x108] sm:$0xff]
    %v2201 = vld [vmem:[#allocation21 + $0x110] sm:$0xff]
    %v2202 = vld [vmem:[#allocation21 + $0x118] sm:$0xff]
    %v2203 = vld [vmem:[#allocation21 + $0x120] sm:$0xff]
    %v2204 = vld [vmem:[#allocation21 + $0x128] sm:$0xff]
    %v2205 = vld [vmem:[#allocation21 + $0x130] sm:$0xff]
    %v2206 = vld [vmem:[#allocation21 + $0x138] sm:$0xff]
    %v2207 = vld [vmem:[#allocation21 + $0x140] sm:$0xff]
    %v2208 = vld [vmem:[#allocation21 + $0x148] sm:$0xff]
    %v2209 = vld [vmem:[#allocation21 + $0x150] sm:$0xff]
    %v2210 = vld [vmem:[#allocation21 + $0x158] sm:$0xff]
    %v2211 = vld [vmem:[#allocation21 + $0x160] sm:$0xff]
    %v2212 = vld [vmem:[#allocation21 + $0x168] sm:$0xff]
    %v2213 = vld [vmem:[#allocation21 + $0x170] sm:$0xff]
    %v2214 = vld [vmem:[#allocation21 + $0x178] sm:$0xff]
    %v2215 = vld [vmem:[#allocation21 + $0x180] sm:$0xff]
    %v2216 = vld [vmem:[#allocation21 + $0x188] sm:$0xff]
    %v2217 = vld [vmem:[#allocation21 + $0x190] sm:$0xff]
    %v2218 = vld [vmem:[#allocation21 + $0x198] sm:$0xff]
    %v2219 = vld [vmem:[#allocation21 + $0x1a0] sm:$0xff]
    %v2220 = vld [vmem:[#allocation21 + $0x1a8] sm:$0xff]
    %v2221 = vld [vmem:[#allocation21 + $0x1b0] sm:$0xff]
    %v2222 = vld [vmem:[#allocation21 + $0x1b8] sm:$0xff]
    %v2223 = vld [vmem:[#allocation21 + $0x1c0] sm:$0xff]
    %v2224 = vld [vmem:[#allocation21 + $0x1c8] sm:$0xff]
    %v2225 = vld [vmem:[#allocation21 + $0x1d0] sm:$0xff]
    %v2226 = vld [vmem:[#allocation21 + $0x1d8] sm:$0xff]
    %v2227 = vld [vmem:[#allocation21 + $0x1e0] sm:$0xff]
    %v2228 = vld [vmem:[#allocation21 + $0x1e8] sm:$0xff]
    %v2229 = vld [vmem:[#allocation21 + $0x1f0] sm:$0xff]
    %v2230 = vld [vmem:[#allocation21 + $0x1f8] sm:$0xff]
    %v2231 = vld [vmem:[#allocation21 + $0x200] sm:$0xff]
    %v2232 = vld [vmem:[#allocation21 + $0x208] sm:$0xff]
    %v2233 = vld [vmem:[#allocation21 + $0x210] sm:$0xff]
    %v2234 = vld [vmem:[#allocation21 + $0x218] sm:$0xff]
    %v2235 = vld [vmem:[#allocation21 + $0x220] sm:$0xff]
    %v2236 = vld [vmem:[#allocation21 + $0x228] sm:$0xff]
    %v2237 = vld [vmem:[#allocation21 + $0x230] sm:$0xff]
    %v2238 = vld [vmem:[#allocation21 + $0x238] sm:$0xff]
    %v2239 = vld [vmem:[#allocation21 + $0x240] sm:$0xff]
    %v2240 = vld [vmem:[#allocation21 + $0x248] sm:$0xff]
    %v2241 = vld [vmem:[#allocation21 + $0x250] sm:$0xff]
    %v2242 = vld [vmem:[#allocation21 + $0x258] sm:$0xff]
    %v2243 = vld [vmem:[#allocation21 + $0x260] sm:$0xff]
    %v2244 = vld [vmem:[#allocation21 + $0x268] sm:$0xff]
    %v2245 = vld [vmem:[#allocation21 + $0x270] sm:$0xff]
    %v2246 = vld [vmem:[#allocation21 + $0x278] sm:$0xff]
    %v2247 = vld [vmem:[#allocation21 + $0x280] sm:$0xff]
    %v2248 = vld [vmem:[#allocation21 + $0x288] sm:$0xff]
    %v2249 = vld [vmem:[#allocation21 + $0x290] sm:$0xff]
    %v2250 = vld [vmem:[#allocation21 + $0x298] sm:$0xff]
    %v2251 = vld [vmem:[#allocation21 + $0x2a0] sm:$0xff]
    %v2252 = vld [vmem:[#allocation21 + $0x2a8] sm:$0xff]
    %v2253 = vld [vmem:[#allocation21 + $0x2b0] sm:$0xff]
    %v2254 = vld [vmem:[#allocation21 + $0x2b8] sm:$0xff]
    %v2255 = vld [vmem:[#allocation21 + $0x2c0] sm:$0xff]
    %v2256 = vld [vmem:[#allocation21 + $0x2c8] sm:$0xff]
    %v2257 = vld [vmem:[#allocation21 + $0x2d0] sm:$0xff]
    %v2258 = vld [vmem:[#allocation21 + $0x2d8] sm:$0xff]
    %v2259 = vld [vmem:[#allocation21 + $0x2e0] sm:$0xff]
    %v2260 = vld [vmem:[#allocation21 + $0x2e8] sm:$0xff]
    %v2261 = vld [vmem:[#allocation21 + $0x2f0] sm:$0xff]
    %v2262 = vld [vmem:[#allocation21 + $0x2f8] sm:$0xff]
    %v2263 = vld [vmem:[#allocation22] sm:$0x7]
    %v2265 = vlaneseq
    %v2266 = vshrl.u32 %v2265, 7
    %v2267 = vsub.s32 0, %v2266
    %v2268 = vrot.slane %v2263, %v2267
    %v2269 = vlaneseq
    %v2270 = vshrl.u32 %v2269, 7
    %v2271 = vsub.s32 1, %v2270
    %v2272 = vrot.slane %v2263, %v2271
    %v2273 = vlaneseq
    %v2274 = vshrl.u32 %v2273, 7
    %v2275 = vsub.s32 2, %v2274
    %v2276 = vrot.slane %v2263, %v2275
    %2280 = vmatprep.subr.mxu0 %v2168
    %2281 = vmatpush1.msra.mxu0 %v2167
    %2282 = vmatprep.subr.mxu0 %v2171
    %2283 = vmatpush1.msra.mxu0 %v2170
    %2284 = vmatprep.subr.mxu0 %v2174
    %2285 = vmatpush1.msra.mxu0 %v2173
    %2286 = vmatprep.subr.mxu0 %v2177
    %2287 = vmatpush1.msra.mxu0 %v2176
    %2288 = vmatprep.subr.mxu0 %v2180
    %2289 = vmatpush1.msra.mxu0 %v2179
    %2290 = vmatprep.subr.mxu0 %v2183
    %2291 = vmatpush1.msra.mxu0 %v2182
    %2292 = vmatprep.subr.mxu0 %v2186
    %2293 = vmatpush1.msra.mxu0 %v2185
    %2294 = vmatprep.subr.mxu0 %v2189
    %2295 = vmatpush1.msra.mxu0 %v2188
    %2296 = vmatprep.subr.mxu0 %v2192
    %2297 = vmatpush1.msra.mxu0 %v2191
    %2298 = vmatprep.subr.mxu0 %v2195
    %2299 = vmatpush1.msra.mxu0 %v2194
    %2300 = vmatprep.subr.mxu0 %v2198
    %2301 = vmatpush1.msra.mxu0 %v2197
    %2302 = vmatprep.subr.mxu0 %v2201
    %2303 = vmatpush1.msra.mxu0 %v2200
    %2304 = vmatprep.subr.mxu0 %v2204
    %2305 = vmatpush1.msra.mxu0 %v2203
    %2306 = vmatprep.subr.mxu0 %v2207
    %2307 = vmatpush1.msra.mxu0 %v2206
    %2308 = vmatprep.subr.mxu0 %v2210
    %2309 = vmatpush1.msra.mxu0 %v2209
    %2310 = vmatprep.subr.mxu0 %v2213
    %2311 = vmatpush1.msra.mxu0 %v2212
    %2312 = vmatprep.subr.mxu0 %v2216
    %2313 = vmatpush1.msra.mxu0 %v2215
    %2314 = vmatprep.subr.mxu0 %v2219
    %2315 = vmatpush1.msra.mxu0 %v2218
    %2316 = vmatprep.subr.mxu0 %v2222
    %2317 = vmatpush1.msra.mxu0 %v2221
    %2318 = vmatprep.subr.mxu0 %v2225
    %2319 = vmatpush1.msra.mxu0 %v2224
    %2320 = vmatprep.subr.mxu0 %v2228
    %2321 = vmatpush1.msra.mxu0 %v2227
    %2322 = vmatprep.subr.mxu0 %v2231
    %2323 = vmatpush1.msra.mxu0 %v2230
    %2324 = vmatprep.subr.mxu0 %v2234
    %2325 = vmatpush1.msra.mxu0 %v2233
    %2326 = vmatprep.subr.mxu0 %v2237
    %2327 = vmatpush1.msra.mxu0 %v2236
    %2328 = vmatprep.subr.mxu0 %v2240
    %2329 = vmatpush1.msra.mxu0 %v2239
    %2330 = vmatprep.subr.mxu0 %v2243
    %2331 = vmatpush1.msra.mxu0 %v2242
    %2332 = vmatprep.subr.mxu0 %v2246
    %2333 = vmatpush1.msra.mxu0 %v2245
    %2334 = vmatprep.subr.mxu0 %v2249
    %2335 = vmatpush1.msra.mxu0 %v2248
    %2336 = vmatprep.subr.mxu0 %v2252
    %2337 = vmatpush1.msra.mxu0 %v2251
    %2338 = vmatprep.subr.mxu0 %v2255
    %2339 = vmatpush1.msra.mxu0 %v2254
    %2340 = vmatprep.subr.mxu0 %v2258
    %2341 = vmatpush1.msra.mxu0 %v2257
    %2342 = vmatprep.subr.mxu0 %v2261
    %2343 = vmatpush1.msra.mxu0 %v2260
    %2344 = vmatprep.mubr.f32.mxu0 %v2166
    %2345 = vmatmul.mubr.f32.gmra.mrb[0].mxu0 %v2165
    %v2346 = vpop.f32.mrb[0].mxu0
    %v2347 = vadd.f32 %v2268, %v2346
    %v2348 = vpop.f32.mrb[0].mxu0
    %v2349 = vadd.f32 %v2272, %v2348
    %2350 = vdwg.mxu0
    %2351 = vmatprep.subr.mxu0 0.0
    %2352 = vmatpush1.msra.mxu0 %v2169
    %2353 = vmatprep.subr.mxu0 0.0
    %2354 = vmatpush1.msra.mxu0 %v2172
    %2355 = vmatprep.subr.mxu0 0.0
    %2356 = vmatpush1.msra.mxu0 %v2175
    %2357 = vmatprep.subr.mxu0 0.0
    %2358 = vmatpush1.msra.mxu0 %v2178
    %2359 = vmatprep.subr.mxu0 0.0
    %2360 = vmatpush1.msra.mxu0 %v2181
    %2361 = vmatprep.subr.mxu0 0.0
    %2362 = vmatpush1.msra.mxu0 %v2184
    %2363 = vmatprep.subr.mxu0 0.0
    %2364 = vmatpush1.msra.mxu0 %v2187
    %2365 = vmatprep.subr.mxu0 0.0
    %2366 = vmatpush1.msra.mxu0 %v2190
    %2367 = vmatprep.subr.mxu0 0.0
    %2368 = vmatpush1.msra.mxu0 %v2193
    %2369 = vmatprep.subr.mxu0 0.0
    %2370 = vmatpush1.msra.mxu0 %v2196
    %2371 = vmatprep.subr.mxu0 0.0
    %2372 = vmatpush1.msra.mxu0 %v2199
    %2373 = vmatprep.subr.mxu0 0.0
    %2374 = vmatpush1.msra.mxu0 %v2202
    %2375 = vmatprep.subr.mxu0 0.0
    %2376 = vmatpush1.msra.mxu0 %v2205
    %2377 = vmatprep.subr.mxu0 0.0
    %2378 = vmatpush1.msra.mxu0 %v2208
    %2379 = vmatprep.subr.mxu0 0.0
    %2380 = vmatpush1.msra.mxu0 %v2211
    %2381 = vmatprep.subr.mxu0 0.0
    %2382 = vmatpush1.msra.mxu0 %v2214
    %2383 = vmatprep.subr.mxu0 0.0
    %2384 = vmatpush1.msra.mxu0 %v2217
    %2385 = vmatprep.subr.mxu0 0.0
    %2386 = vmatpush1.msra.mxu0 %v2220
    %2387 = vmatprep.subr.mxu0 0.0
    %2388 = vmatpush1.msra.mxu0 %v2223
    %2389 = vmatprep.subr.mxu0 0.0
    %2390 = vmatpush1.msra.mxu0 %v2226
    %2391 = vmatprep.subr.mxu0 0.0
    %2392 = vmatpush1.msra.mxu0 %v2229
    %2393 = vmatprep.subr.mxu0 0.0
    %2394 = vmatpush1.msra.mxu0 %v2232
    %2395 = vmatprep.subr.mxu0 0.0
    %2396 = vmatpush1.msra.mxu0 %v2235
    %2397 = vmatprep.subr.mxu0 0.0
    %2398 = vmatpush1.msra.mxu0 %v2238
    %2399 = vmatprep.subr.mxu0 0.0
    %2400 = vmatpush1.msra.mxu0 %v2241
    %2401 = vmatprep.subr.mxu0 0.0
    %2402 = vmatpush1.msra.mxu0 %v2244
    %2403 = vmatprep.subr.mxu0 0.0
    %2404 = vmatpush1.msra.mxu0 %v2247
    %2405 = vmatprep.subr.mxu0 0.0
    %2406 = vmatpush1.msra.mxu0 %v2250
    %2407 = vmatprep.subr.mxu0 0.0
    %2408 = vmatpush1.msra.mxu0 %v2253
    %2409 = vmatprep.subr.mxu0 0.0
    %2410 = vmatpush1.msra.mxu0 %v2256
    %2411 = vmatprep.subr.mxu0 0.0
    %2412 = vmatpush1.msra.mxu0 %v2259
    %2413 = vmatprep.subr.mxu0 0.0
    %2414 = vmatpush1.msra.mxu0 %v2262
    %2415 = vmatprep.mubr.f32.mxu0 %v2166
    %2416 = vmatmul.mubr.f32.gmra.mrb[0].mxu0 %v2165
    %v2417 = vpop.f32.mrb[0].mxu0
    %v2418 = vadd.f32 %v2276, %v2417
    %v2419 = vpop.f32.mrb[0].mxu0
    %2420 = vdwg.mxu0
    %v2421 = vxor.u32 %v2347, 2147483648
    %v2422 = vxor.u32 %v2349, 2147483648
    %v2423 = vxor.u32 %v2418, 2147483648
    %v2424 = vmul.f32 %v2421, 1.442695
    %v2425 = vpow.pop %v2424
    %v2426 = vmul.f32 %v2422, 1.442695
    %v2427 = vpow.pop %v2426
    %v2428 = vmul.f32 %v2423, 1.442695
    %v2429 = vpow.pop %v2428
    %v2430 = vadd.f32 %v2425, 1.0
    %v2431 = vadd.f32 %v2427, 1.0
    %v2432 = vadd.f32 %v2429, 1.0
    %v2433 = vrcp.pop %v2430
    %v2434 = vmul.f32 1.0, %v2433
    %v2435 = vrcp.pop %v2431
    %v2436 = vmul.f32 1.0, %v2435
    %v2437 = vrcp.pop %v2432
    %v2438 = vmul.f32 1.0, %v2437
    %v2439 = vmul.f32 %v2347, %v2434
    %v2440 = vmul.f32 %v2349, %v2436
    %v2441 = vmul.f32 %v2418, %v2438
    %v2442 = vld [vmem:[#allocation24] sm:$0xff]
    %v2443 = vld [vmem:[#allocation24 + $0x8] sm:$0xff]
    %v2444 = vld [vmem:[#allocation24 + $0x10] sm:$0xff]
    %v2445 = vld [vmem:[#allocation24 + $0x18] sm:$0xff]
    %v2446 = vld [vmem:[#allocation24 + $0x20] sm:$0xff]
    %v2447 = vld [vmem:[#allocation24 + $0x28] sm:$0xff]
    %v2448 = vld [vmem:[#allocation24 + $0x30] sm:$0xff]
    %v2449 = vld [vmem:[#allocation24 + $0x38] sm:$0xff]
    %v2450 = vld [vmem:[#allocation24 + $0x40] sm:$0xff]
    %v2451 = vld [vmem:[#allocation24 + $0x48] sm:$0xff]
    %v2452 = vld [vmem:[#allocation24 + $0x50] sm:$0xff]
    %v2453 = vld [vmem:[#allocation24 + $0x58] sm:$0xff]
    %v2454 = vld [vmem:[#allocation24 + $0x60] sm:$0xff]
    %v2455 = vld [vmem:[#allocation24 + $0x68] sm:$0xff]
    %v2456 = vld [vmem:[#allocation24 + $0x70] sm:$0xff]
    %v2457 = vld [vmem:[#allocation24 + $0x78] sm:$0xff]
    %v2458 = vld [vmem:[#allocation24 + $0x80] sm:$0xff]
    %v2459 = vld [vmem:[#allocation24 + $0x88] sm:$0xff]
    %v2460 = vld [vmem:[#allocation24 + $0x90] sm:$0xff]
    %v2461 = vld [vmem:[#allocation24 + $0x98] sm:$0xff]
    %v2462 = vld [vmem:[#allocation24 + $0xa0] sm:$0xff]
    %v2463 = vld [vmem:[#allocation24 + $0xa8] sm:$0xff]
    %v2464 = vld [vmem:[#allocation24 + $0xb0] sm:$0xff]
    %v2465 = vld [vmem:[#allocation24 + $0xb8] sm:$0xff]
    %v2466 = vld [vmem:[#allocation24 + $0xc0] sm:$0xff]
    %v2467 = vld [vmem:[#allocation24 + $0xc8] sm:$0xff]
    %v2468 = vld [vmem:[#allocation24 + $0xd0] sm:$0xff]
    %v2469 = vld [vmem:[#allocation24 + $0xd8] sm:$0xff]
    %v2470 = vld [vmem:[#allocation24 + $0xe0] sm:$0xff]
    %v2471 = vld [vmem:[#allocation24 + $0xe8] sm:$0xff]
    %v2472 = vld [vmem:[#allocation24 + $0xf0] sm:$0xff]
    %v2473 = vld [vmem:[#allocation24 + $0xf8] sm:$0xff]
    %v2474 = vld [vmem:[#allocation24 + $0x100] sm:$0xff]
    %v2475 = vld [vmem:[#allocation24 + $0x108] sm:$0xff]
    %v2476 = vld [vmem:[#allocation24 + $0x110] sm:$0xff]
    %v2477 = vld [vmem:[#allocation24 + $0x118] sm:$0xff]
    %v2478 = vld [vmem:[#allocation24 + $0x120] sm:$0xff]
    %v2479 = vld [vmem:[#allocation24 + $0x128] sm:$0xff]
    %v2480 = vld [vmem:[#allocation24 + $0x130] sm:$0xff]
    %v2481 = vld [vmem:[#allocation24 + $0x138] sm:$0xff]
    %v2482 = vld [vmem:[#allocation24 + $0x140] sm:$0xff]
    %v2483 = vld [vmem:[#allocation24 + $0x148] sm:$0xff]
    %v2484 = vld [vmem:[#allocation24 + $0x150] sm:$0xff]
    %v2485 = vld [vmem:[#allocation24 + $0x158] sm:$0xff]
    %v2486 = vld [vmem:[#allocation24 + $0x160] sm:$0xff]
    %v2487 = vld [vmem:[#allocation24 + $0x168] sm:$0xff]
    %v2488 = vld [vmem:[#allocation24 + $0x170] sm:$0xff]
    %v2489 = vld [vmem:[#allocation24 + $0x178] sm:$0xff]
    %v2490 = vld [vmem:[#allocation24 + $0x180] sm:$0xff]
    %v2491 = vld [vmem:[#allocation24 + $0x188] sm:$0xff]
    %v2492 = vld [vmem:[#allocation24 + $0x190] sm:$0xff]
    %v2493 = vld [vmem:[#allocation24 + $0x198] sm:$0xff]
    %v2494 = vld [vmem:[#allocation24 + $0x1a0] sm:$0xff]
    %v2495 = vld [vmem:[#allocation24 + $0x1a8] sm:$0xff]
    %v2496 = vld [vmem:[#allocation24 + $0x1b0] sm:$0xff]
    %v2497 = vld [vmem:[#allocation24 + $0x1b8] sm:$0xff]
    %v2498 = vld [vmem:[#allocation24 + $0x1c0] sm:$0xff]
    %v2499 = vld [vmem:[#allocation24 + $0x1c8] sm:$0xff]
    %v2500 = vld [vmem:[#allocation24 + $0x1d0] sm:$0xff]
    %v2501 = vld [vmem:[#allocation24 + $0x1d8] sm:$0xff]
    %v2502 = vld [vmem:[#allocation24 + $0x1e0] sm:$0xff]
    %v2503 = vld [vmem:[#allocation24 + $0x1e8] sm:$0xff]
    %v2504 = vld [vmem:[#allocation24 + $0x1f0] sm:$0xff]
    %v2505 = vld [vmem:[#allocation24 + $0x1f8] sm:$0xff]
    %v2506 = vld [vmem:[#allocation24 + $0x200] sm:$0xff]
    %v2507 = vld [vmem:[#allocation24 + $0x208] sm:$0xff]
    %v2508 = vld [vmem:[#allocation24 + $0x210] sm:$0xff]
    %v2509 = vld [vmem:[#allocation24 + $0x218] sm:$0xff]
    %v2510 = vld [vmem:[#allocation24 + $0x220] sm:$0xff]
    %v2511 = vld [vmem:[#allocation24 + $0x228] sm:$0xff]
    %v2512 = vld [vmem:[#allocation24 + $0x230] sm:$0xff]
    %v2513 = vld [vmem:[#allocation24 + $0x238] sm:$0xff]
    %v2514 = vld [vmem:[#allocation24 + $0x240] sm:$0xff]
    %v2515 = vld [vmem:[#allocation24 + $0x248] sm:$0xff]
    %v2516 = vld [vmem:[#allocation24 + $0x250] sm:$0xff]
    %v2517 = vld [vmem:[#allocation24 + $0x258] sm:$0xff]
    %v2518 = vld [vmem:[#allocation24 + $0x260] sm:$0xff]
    %v2519 = vld [vmem:[#allocation24 + $0x268] sm:$0xff]
    %v2520 = vld [vmem:[#allocation24 + $0x270] sm:$0xff]
    %v2521 = vld [vmem:[#allocation24 + $0x278] sm:$0xff]
    %v2522 = vld [vmem:[#allocation24 + $0x280] sm:$0xff]
    %v2523 = vld [vmem:[#allocation24 + $0x288] sm:$0xff]
    %v2524 = vld [vmem:[#allocation24 + $0x290] sm:$0xff]
    %v2525 = vld [vmem:[#allocation24 + $0x298] sm:$0xff]
    %v2526 = vld [vmem:[#allocation24 + $0x2a0] sm:$0xff]
    %v2527 = vld [vmem:[#allocation24 + $0x2a8] sm:$0xff]
    %v2528 = vld [vmem:[#allocation24 + $0x2b0] sm:$0xff]
    %v2529 = vld [vmem:[#allocation24 + $0x2b8] sm:$0xff]
    %v2530 = vld [vmem:[#allocation24 + $0x2c0] sm:$0xff]
    %v2531 = vld [vmem:[#allocation24 + $0x2c8] sm:$0xff]
    %v2532 = vld [vmem:[#allocation24 + $0x2d0] sm:$0xff]
    %v2533 = vld [vmem:[#allocation24 + $0x2d8] sm:$0xff]
    %v2534 = vld [vmem:[#allocation24 + $0x2e0] sm:$0xff]
    %v2535 = vld [vmem:[#allocation24 + $0x2e8] sm:$0xff]
    %v2536 = vld [vmem:[#allocation24 + $0x2f0] sm:$0xff]
    %v2537 = vld [vmem:[#allocation24 + $0x2f8] sm:$0xff]
    %v2538 = vld [vmem:[#allocation24 + $0x300] sm:$0xff]
    %v2539 = vld [vmem:[#allocation24 + $0x308] sm:$0xff]
    %v2540 = vld [vmem:[#allocation24 + $0x310] sm:$0xff]
    %v2541 = vld [vmem:[#allocation24 + $0x318] sm:$0xff]
    %v2542 = vld [vmem:[#allocation24 + $0x320] sm:$0xff]
    %v2543 = vld [vmem:[#allocation24 + $0x328] sm:$0xff]
    %v2544 = vld [vmem:[#allocation24 + $0x330] sm:$0xff]
    %v2545 = vld [vmem:[#allocation24 + $0x338] sm:$0xff]
    %v2546 = vld [vmem:[#allocation24 + $0x340] sm:$0xff]
    %v2547 = vld [vmem:[#allocation24 + $0x348] sm:$0xff]
    %v2548 = vld [vmem:[#allocation24 + $0x350] sm:$0xff]
    %v2549 = vld [vmem:[#allocation24 + $0x358] sm:$0xff]
    %v2550 = vld [vmem:[#allocation24 + $0x360] sm:$0xff]
    %v2551 = vld [vmem:[#allocation24 + $0x368] sm:$0xff]
    %v2552 = vld [vmem:[#allocation24 + $0x370] sm:$0xff]
    %v2553 = vld [vmem:[#allocation24 + $0x378] sm:$0xff]
    %v2554 = vld [vmem:[#allocation24 + $0x380] sm:$0xff]
    %v2555 = vld [vmem:[#allocation24 + $0x388] sm:$0xff]
    %v2556 = vld [vmem:[#allocation24 + $0x390] sm:$0xff]
    %v2557 = vld [vmem:[#allocation24 + $0x398] sm:$0xff]
    %v2558 = vld [vmem:[#allocation24 + $0x3a0] sm:$0xff]
    %v2559 = vld [vmem:[#allocation24 + $0x3a8] sm:$0xff]
    %v2560 = vld [vmem:[#allocation24 + $0x3b0] sm:$0xff]
    %v2561 = vld [vmem:[#allocation24 + $0x3b8] sm:$0xff]
    %v2562 = vld [vmem:[#allocation24 + $0x3c0] sm:$0xff]
    %v2563 = vld [vmem:[#allocation24 + $0x3c8] sm:$0xff]
    %v2564 = vld [vmem:[#allocation24 + $0x3d0] sm:$0xff]
    %v2565 = vld [vmem:[#allocation24 + $0x3d8] sm:$0xff]
    %v2566 = vld [vmem:[#allocation24 + $0x3e0] sm:$0xff]
    %v2567 = vld [vmem:[#allocation24 + $0x3e8] sm:$0xff]
    %v2568 = vld [vmem:[#allocation24 + $0x3f0] sm:$0xff]
    %v2569 = vld [vmem:[#allocation24 + $0x3f8] sm:$0xff]
    %v2570 = vld [vmem:[#allocation24 + $0x400] sm:$0xff]
    %v2571 = vld [vmem:[#allocation24 + $0x408] sm:$0xff]
    %v2572 = vld [vmem:[#allocation24 + $0x410] sm:$0xff]
    %v2573 = vld [vmem:[#allocation24 + $0x418] sm:$0xff]
    %v2574 = vld [vmem:[#allocation24 + $0x420] sm:$0xff]
    %v2575 = vld [vmem:[#allocation24 + $0x428] sm:$0xff]
    %v2576 = vld [vmem:[#allocation24 + $0x430] sm:$0xff]
    %v2577 = vld [vmem:[#allocation24 + $0x438] sm:$0xff]
    %v2578 = vld [vmem:[#allocation24 + $0x440] sm:$0xff]
    %v2579 = vld [vmem:[#allocation24 + $0x448] sm:$0xff]
    %v2580 = vld [vmem:[#allocation24 + $0x450] sm:$0xff]
    %v2581 = vld [vmem:[#allocation24 + $0x458] sm:$0xff]
    %v2582 = vld [vmem:[#allocation24 + $0x460] sm:$0xff]
    %v2583 = vld [vmem:[#allocation24 + $0x468] sm:$0xff]
    %v2584 = vld [vmem:[#allocation24 + $0x470] sm:$0xff]
    %v2585 = vld [vmem:[#allocation24 + $0x478] sm:$0xff]
    %v2586 = vld [vmem:[#allocation24 + $0x480] sm:$0xff]
    %v2587 = vld [vmem:[#allocation24 + $0x488] sm:$0xff]
    %v2588 = vld [vmem:[#allocation24 + $0x490] sm:$0xff]
    %v2589 = vld [vmem:[#allocation24 + $0x498] sm:$0xff]
    %v2590 = vld [vmem:[#allocation24 + $0x4a0] sm:$0xff]
    %v2591 = vld [vmem:[#allocation24 + $0x4a8] sm:$0xff]
    %v2592 = vld [vmem:[#allocation24 + $0x4b0] sm:$0xff]
    %v2593 = vld [vmem:[#allocation24 + $0x4b8] sm:$0xff]
    %v2594 = vld [vmem:[#allocation24 + $0x4c0] sm:$0xff]
    %v2595 = vld [vmem:[#allocation24 + $0x4c8] sm:$0xff]
    %v2596 = vld [vmem:[#allocation24 + $0x4d0] sm:$0xff]
    %v2597 = vld [vmem:[#allocation24 + $0x4d8] sm:$0xff]
    %v2598 = vld [vmem:[#allocation24 + $0x4e0] sm:$0xff]
    %v2599 = vld [vmem:[#allocation24 + $0x4e8] sm:$0xff]
    %v2600 = vld [vmem:[#allocation24 + $0x4f0] sm:$0xff]
    %v2601 = vld [vmem:[#allocation24 + $0x4f8] sm:$0xff]
    %v2602 = vld [vmem:[#allocation24 + $0x500] sm:$0xff]
    %v2603 = vld [vmem:[#allocation24 + $0x508] sm:$0xff]
    %v2604 = vld [vmem:[#allocation24 + $0x510] sm:$0xff]
    %v2605 = vld [vmem:[#allocation24 + $0x518] sm:$0xff]
    %v2606 = vld [vmem:[#allocation24 + $0x520] sm:$0xff]
    %v2607 = vld [vmem:[#allocation24 + $0x528] sm:$0xff]
    %v2608 = vld [vmem:[#allocation24 + $0x530] sm:$0xff]
    %v2609 = vld [vmem:[#allocation24 + $0x538] sm:$0xff]
    %v2610 = vld [vmem:[#allocation24 + $0x540] sm:$0xff]
    %v2611 = vld [vmem:[#allocation24 + $0x548] sm:$0xff]
    %v2612 = vld [vmem:[#allocation24 + $0x550] sm:$0xff]
    %v2613 = vld [vmem:[#allocation24 + $0x558] sm:$0xff]
    %v2614 = vld [vmem:[#allocation24 + $0x560] sm:$0xff]
    %v2615 = vld [vmem:[#allocation24 + $0x568] sm:$0xff]
    %v2616 = vld [vmem:[#allocation24 + $0x570] sm:$0xff]
    %v2617 = vld [vmem:[#allocation24 + $0x578] sm:$0xff]
    %v2618 = vld [vmem:[#allocation24 + $0x580] sm:$0xff]
    %v2619 = vld [vmem:[#allocation24 + $0x588] sm:$0xff]
    %v2620 = vld [vmem:[#allocation24 + $0x590] sm:$0xff]
    %v2621 = vld [vmem:[#allocation24 + $0x598] sm:$0xff]
    %v2622 = vld [vmem:[#allocation24 + $0x5a0] sm:$0xff]
    %v2623 = vld [vmem:[#allocation24 + $0x5a8] sm:$0xff]
    %v2624 = vld [vmem:[#allocation24 + $0x5b0] sm:$0xff]
    %v2625 = vld [vmem:[#allocation24 + $0x5b8] sm:$0xff]
    %v2626 = vld [vmem:[#allocation24 + $0x5c0] sm:$0xff]
    %v2627 = vld [vmem:[#allocation24 + $0x5c8] sm:$0xff]
    %v2628 = vld [vmem:[#allocation24 + $0x5d0] sm:$0xff]
    %v2629 = vld [vmem:[#allocation24 + $0x5d8] sm:$0xff]
    %v2630 = vld [vmem:[#allocation24 + $0x5e0] sm:$0xff]
    %v2631 = vld [vmem:[#allocation24 + $0x5e8] sm:$0xff]
    %v2632 = vld [vmem:[#allocation24 + $0x5f0] sm:$0xff]
    %v2633 = vld [vmem:[#allocation24 + $0x5f8] sm:$0xff]
    %v2634 = vld [vmem:[#allocation24 + $0x600] sm:$0xff]
    %v2635 = vld [vmem:[#allocation24 + $0x608] sm:$0xff]
    %v2636 = vld [vmem:[#allocation24 + $0x610] sm:$0xff]
    %v2637 = vld [vmem:[#allocation24 + $0x618] sm:$0xff]
    %v2638 = vld [vmem:[#allocation24 + $0x620] sm:$0xff]
    %v2639 = vld [vmem:[#allocation24 + $0x628] sm:$0xff]
    %v2640 = vld [vmem:[#allocation24 + $0x630] sm:$0xff]
    %v2641 = vld [vmem:[#allocation24 + $0x638] sm:$0xff]
    %v2642 = vld [vmem:[#allocation24 + $0x640] sm:$0xff]
    %v2643 = vld [vmem:[#allocation24 + $0x648] sm:$0xff]
    %v2644 = vld [vmem:[#allocation24 + $0x650] sm:$0xff]
    %v2645 = vld [vmem:[#allocation24 + $0x658] sm:$0xff]
    %v2646 = vld [vmem:[#allocation24 + $0x660] sm:$0xff]
    %v2647 = vld [vmem:[#allocation24 + $0x668] sm:$0xff]
    %v2648 = vld [vmem:[#allocation24 + $0x670] sm:$0xff]
    %v2649 = vld [vmem:[#allocation24 + $0x678] sm:$0xff]
    %v2650 = vld [vmem:[#allocation24 + $0x680] sm:$0xff]
    %v2651 = vld [vmem:[#allocation24 + $0x688] sm:$0xff]
    %v2652 = vld [vmem:[#allocation24 + $0x690] sm:$0xff]
    %v2653 = vld [vmem:[#allocation24 + $0x698] sm:$0xff]
    %v2654 = vld [vmem:[#allocation24 + $0x6a0] sm:$0xff]
    %v2655 = vld [vmem:[#allocation24 + $0x6a8] sm:$0xff]
    %v2656 = vld [vmem:[#allocation24 + $0x6b0] sm:$0xff]
    %v2657 = vld [vmem:[#allocation24 + $0x6b8] sm:$0xff]
    %v2658 = vld [vmem:[#allocation24 + $0x6c0] sm:$0xff]
    %v2659 = vld [vmem:[#allocation24 + $0x6c8] sm:$0xff]
    %v2660 = vld [vmem:[#allocation24 + $0x6d0] sm:$0xff]
    %v2661 = vld [vmem:[#allocation24 + $0x6d8] sm:$0xff]
    %v2662 = vld [vmem:[#allocation24 + $0x6e0] sm:$0xff]
    %v2663 = vld [vmem:[#allocation24 + $0x6e8] sm:$0xff]
    %v2664 = vld [vmem:[#allocation24 + $0x6f0] sm:$0xff]
    %v2665 = vld [vmem:[#allocation24 + $0x6f8] sm:$0xff]
    %v2666 = vld [vmem:[#allocation24 + $0x700] sm:$0xff]
    %v2667 = vld [vmem:[#allocation24 + $0x708] sm:$0xff]
    %v2668 = vld [vmem:[#allocation24 + $0x710] sm:$0xff]
    %v2669 = vld [vmem:[#allocation24 + $0x718] sm:$0xff]
    %v2670 = vld [vmem:[#allocation24 + $0x720] sm:$0xff]
    %v2671 = vld [vmem:[#allocation24 + $0x728] sm:$0xff]
    %v2672 = vld [vmem:[#allocation24 + $0x730] sm:$0xff]
    %v2673 = vld [vmem:[#allocation24 + $0x738] sm:$0xff]
    %v2674 = vld [vmem:[#allocation24 + $0x740] sm:$0xff]
    %v2675 = vld [vmem:[#allocation24 + $0x748] sm:$0xff]
    %v2676 = vld [vmem:[#allocation24 + $0x750] sm:$0xff]
    %v2677 = vld [vmem:[#allocation24 + $0x758] sm:$0xff]
    %v2678 = vld [vmem:[#allocation24 + $0x760] sm:$0xff]
    %v2679 = vld [vmem:[#allocation24 + $0x768] sm:$0xff]
    %v2680 = vld [vmem:[#allocation24 + $0x770] sm:$0xff]
    %v2681 = vld [vmem:[#allocation24 + $0x778] sm:$0xff]
    %v2682 = vld [vmem:[#allocation25] sm:$0x1f]
    %v2684 = vlaneseq
    %v2685 = vshrl.u32 %v2684, 7
    %v2686 = vsub.s32 0, %v2685
    %v2687 = vrot.slane %v2682, %v2686
    %v2688 = vlaneseq
    %v2689 = vshrl.u32 %v2688, 7
    %v2690 = vsub.s32 1, %v2689
    %v2691 = vrot.slane %v2682, %v2690
    %v2692 = vlaneseq
    %v2693 = vshrl.u32 %v2692, 7
    %v2694 = vsub.s32 2, %v2693
    %v2695 = vrot.slane %v2682, %v2694
    %v2696 = vlaneseq
    %v2697 = vshrl.u32 %v2696, 7
    %v2698 = vsub.s32 3, %v2697
    %v2699 = vrot.slane %v2682, %v2698
    %v2700 = vlaneseq
    %v2701 = vshrl.u32 %v2700, 7
    %v2702 = vsub.s32 4, %v2701
    %v2703 = vrot.slane %v2682, %v2702
    %2709 = vmatprep.subr.mxu0 %v2443
    %2710 = vmatpush1.msra.mxu0 %v2442
    %2711 = vmatprep.subr.mxu0 %v2448
    %2712 = vmatpush1.msra.mxu0 %v2447
    %2713 = vmatprep.subr.mxu0 %v2453
    %2714 = vmatpush1.msra.mxu0 %v2452
    %2715 = vmatprep.subr.mxu0 %v2458
    %2716 = vmatpush1.msra.mxu0 %v2457
    %2717 = vmatprep.subr.mxu0 %v2463
    %2718 = vmatpush1.msra.mxu0 %v2462
    %2719 = vmatprep.subr.mxu0 %v2468
    %2720 = vmatpush1.msra.mxu0 %v2467
    %2721 = vmatprep.subr.mxu0 %v2473
    %2722 = vmatpush1.msra.mxu0 %v2472
    %2723 = vmatprep.subr.mxu0 %v2478
    %2724 = vmatpush1.msra.mxu0 %v2477
    %2725 = vmatprep.subr.mxu0 %v2483
    %2726 = vmatpush1.msra.mxu0 %v2482
    %2727 = vmatprep.subr.mxu0 %v2488
    %2728 = vmatpush1.msra.mxu0 %v2487
    %2729 = vmatprep.subr.mxu0 %v2493
    %2730 = vmatpush1.msra.mxu0 %v2492
    %2731 = vmatprep.subr.mxu0 %v2498
    %2732 = vmatpush1.msra.mxu0 %v2497
    %2733 = vmatprep.subr.mxu0 %v2503
    %2734 = vmatpush1.msra.mxu0 %v2502
    %2735 = vmatprep.subr.mxu0 %v2508
    %2736 = vmatpush1.msra.mxu0 %v2507
    %2737 = vmatprep.subr.mxu0 %v2513
    %2738 = vmatpush1.msra.mxu0 %v2512
    %2739 = vmatprep.subr.mxu0 %v2518
    %2740 = vmatpush1.msra.mxu0 %v2517
    %2741 = vmatprep.subr.mxu0 %v2523
    %2742 = vmatpush1.msra.mxu0 %v2522
    %2743 = vmatprep.subr.mxu0 %v2528
    %2744 = vmatpush1.msra.mxu0 %v2527
    %2745 = vmatprep.subr.mxu0 %v2533
    %2746 = vmatpush1.msra.mxu0 %v2532
    %2747 = vmatprep.subr.mxu0 %v2538
    %2748 = vmatpush1.msra.mxu0 %v2537
    %2749 = vmatprep.subr.mxu0 %v2543
    %2750 = vmatpush1.msra.mxu0 %v2542
    %2751 = vmatprep.subr.mxu0 %v2548
    %2752 = vmatpush1.msra.mxu0 %v2547
    %2753 = vmatprep.subr.mxu0 %v2553
    %2754 = vmatpush1.msra.mxu0 %v2552
    %2755 = vmatprep.subr.mxu0 %v2558
    %2756 = vmatpush1.msra.mxu0 %v2557
    %2757 = vmatprep.subr.mxu0 %v2563
    %2758 = vmatpush1.msra.mxu0 %v2562
    %2759 = vmatprep.subr.mxu0 %v2568
    %2760 = vmatpush1.msra.mxu0 %v2567
    %2761 = vmatprep.subr.mxu0 %v2573
    %2762 = vmatpush1.msra.mxu0 %v2572
    %2763 = vmatprep.subr.mxu0 %v2578
    %2764 = vmatpush1.msra.mxu0 %v2577
    %2765 = vmatprep.subr.mxu0 %v2583
    %2766 = vmatpush1.msra.mxu0 %v2582
    %2767 = vmatprep.subr.mxu0 %v2588
    %2768 = vmatpush1.msra.mxu0 %v2587
    %2769 = vmatprep.subr.mxu0 %v2593
    %2770 = vmatpush1.msra.mxu0 %v2592
    %2771 = vmatprep.subr.mxu0 %v2598
    %2772 = vmatpush1.msra.mxu0 %v2597
    %2773 = vmatprep.mubr.f32.mxu0 %v2440
    %2774 = vmatmul.mubr.f32.gmra.mrb[0].mxu0 %v2439
    %v2775 = vpop.f32.mrb[0].mxu0
    %v2776 = vadd.f32 %v2687, %v2775
    %v2777 = vpop.f32.mrb[0].mxu0
    %v2778 = vadd.f32 %v2691, %v2777
    %2779 = vdwg.mxu0
    %2780 = vmatprep.subr.mxu0 %v2603
    %2781 = vmatpush1.msra.mxu0 %v2602
    %2782 = vmatprep.subr.mxu0 %v2608
    %2783 = vmatpush1.msra.mxu0 %v2607
    %2784 = vmatprep.subr.mxu0 %v2613
    %2785 = vmatpush1.msra.mxu0 %v2612
    %2786 = vmatprep.subr.mxu0 %v2618
    %2787 = vmatpush1.msra.mxu0 %v2617
    %2788 = vmatprep.subr.mxu0 %v2623
    %2789 = vmatpush1.msra.mxu0 %v2622
    %2790 = vmatprep.subr.mxu0 %v2628
    %2791 = vmatpush1.msra.mxu0 %v2627
    %2792 = vmatprep.subr.mxu0 %v2633
    %2793 = vmatpush1.msra.mxu0 %v2632
    %2794 = vmatprep.subr.mxu0 %v2638
    %2795 = vmatpush1.msra.mxu0 %v2637
    %2796 = vmatprep.subr.mxu0 %v2643
    %2797 = vmatpush1.msra.mxu0 %v2642
    %2798 = vmatprep.subr.mxu0 %v2648
    %2799 = vmatpush1.msra.mxu0 %v2647
    %2800 = vmatprep.subr.mxu0 %v2653
    %2801 = vmatpush1.msra.mxu0 %v2652
    %2802 = vmatprep.subr.mxu0 %v2658
    %2803 = vmatpush1.msra.mxu0 %v2657
    %2804 = vmatprep.subr.mxu0 %v2663
    %2805 = vmatpush1.msra.mxu0 %v2662
    %2806 = vmatprep.subr.mxu0 %v2668
    %2807 = vmatpush1.msra.mxu0 %v2667
    %2808 = vmatprep.subr.mxu0 %v2673
    %2809 = vmatpush1.msra.mxu0 %v2672
    %2810 = vmatprep.subr.mxu0 %v2678
    %2811 = vmatpush1.msra.mxu0 %v2677
    %2812 = vmatprep.subr.mxu0 0.0
    %2813 = vmatpush1.msra.mxu0 0.0
    %2814 = vmatprep.subr.mxu0 0.0
    %2815 = vmatpush1.msra.mxu0 0.0
    %2816 = vmatprep.subr.mxu0 0.0
    %2817 = vmatpush1.msra.mxu0 0.0
    %2818 = vmatprep.subr.mxu0 0.0
    %2819 = vmatpush1.msra.mxu0 0.0
    %2820 = vmatprep.subr.mxu0 0.0
    %2821 = vmatpush1.msra.mxu0 0.0
    %2822 = vmatprep.subr.mxu0 0.0
    %2823 = vmatpush1.msra.mxu0 0.0
    %2824 = vmatprep.subr.mxu0 0.0
    %2825 = vmatpush1.msra.mxu0 0.0
    %2826 = vmatprep.subr.mxu0 0.0
    %2827 = vmatpush1.msra.mxu0 0.0
    %2828 = vmatprep.subr.mxu0 0.0
    %2829 = vmatpush1.msra.mxu0 0.0
    %2830 = vmatprep.subr.mxu0 0.0
    %2831 = vmatpush1.msra.mxu0 0.0
    %2832 = vmatprep.subr.mxu0 0.0
    %2833 = vmatpush1.msra.mxu0 0.0
    %2834 = vmatprep.subr.mxu0 0.0
    %2835 = vmatpush1.msra.mxu0 0.0
    %2836 = vmatprep.subr.mxu0 0.0
    %2837 = vmatpush1.msra.mxu0 0.0
    %2838 = vmatprep.subr.mxu0 0.0
    %2839 = vmatpush1.msra.mxu0 0.0
    %2840 = vmatprep.subr.mxu0 0.0
    %2841 = vmatpush1.msra.mxu0 0.0
    %2842 = vmatprep.subr.mxu0 0.0
    %2843 = vmatpush1.msra.mxu0 0.0
    %2844 = vmatprep.mubr.f32.mxu0 0.0
    %2845 = vmatmul.mubr.f32.gmra.mrb[0].mxu0 %v2441
    %v2846 = vpop.f32.mrb[0].mxu0
    %v2847 = vadd.f32 %v2776, %v2846
    %v2848 = vpop.f32.mrb[0].mxu0
    %v2849 = vadd.f32 %v2778, %v2848
    %2850 = vdwg.mxu0
    %2851 = vmatprep.subr.mxu0 %v2445
    %2852 = vmatpush1.msra.mxu0 %v2444
    %2853 = vmatprep.subr.mxu0 %v2450
    %2854 = vmatpush1.msra.mxu0 %v2449
    %2855 = vmatprep.subr.mxu0 %v2455
    %2856 = vmatpush1.msra.mxu0 %v2454
    %2857 = vmatprep.subr.mxu0 %v2460
    %2858 = vmatpush1.msra.mxu0 %v2459
    %2859 = vmatprep.subr.mxu0 %v2465
    %2860 = vmatpush1.msra.mxu0 %v2464
    %2861 = vmatprep.subr.mxu0 %v2470
    %2862 = vmatpush1.msra.mxu0 %v2469
    %2863 = vmatprep.subr.mxu0 %v2475
    %2864 = vmatpush1.msra.mxu0 %v2474
    %2865 = vmatprep.subr.mxu0 %v2480
    %2866 = vmatpush1.msra.mxu0 %v2479
    %2867 = vmatprep.subr.mxu0 %v2485
    %2868 = vmatpush1.msra.mxu0 %v2484
    %2869 = vmatprep.subr.mxu0 %v2490
    %2870 = vmatpush1.msra.mxu0 %v2489
    %2871 = vmatprep.subr.mxu0 %v2495
    %2872 = vmatpush1.msra.mxu0 %v2494
    %2873 = vmatprep.subr.mxu0 %v2500
    %2874 = vmatpush1.msra.mxu0 %v2499
    %2875 = vmatprep.subr.mxu0 %v2505
    %2876 = vmatpush1.msra.mxu0 %v2504
    %2877 = vmatprep.subr.mxu0 %v2510
    %2878 = vmatpush1.msra.mxu0 %v2509
    %2879 = vmatprep.subr.mxu0 %v2515
    %2880 = vmatpush1.msra.mxu0 %v2514
    %2881 = vmatprep.subr.mxu0 %v2520
    %2882 = vmatpush1.msra.mxu0 %v2519
    %2883 = vmatprep.subr.mxu0 %v2525
    %2884 = vmatpush1.msra.mxu0 %v2524
    %2885 = vmatprep.subr.mxu0 %v2530
    %2886 = vmatpush1.msra.mxu0 %v2529
    %2887 = vmatprep.subr.mxu0 %v2535
    %2888 = vmatpush1.msra.mxu0 %v2534
    %2889 = vmatprep.subr.mxu0 %v2540
    %2890 = vmatpush1.msra.mxu0 %v2539
    %2891 = vmatprep.subr.mxu0 %v2545
    %2892 = vmatpush1.msra.mxu0 %v2544
    %2893 = vmatprep.subr.mxu0 %v2550
    %2894 = vmatpush1.msra.mxu0 %v2549
    %2895 = vmatprep.subr.mxu0 %v2555
    %2896 = vmatpush1.msra.mxu0 %v2554
    %2897 = vmatprep.subr.mxu0 %v2560
    %2898 = vmatpush1.msra.mxu0 %v2559
    %2899 = vmatprep.subr.mxu0 %v2565
    %2900 = vmatpush1.msra.mxu0 %v2564
    %2901 = vmatprep.subr.mxu0 %v2570
    %2902 = vmatpush1.msra.mxu0 %v2569
    %2903 = vmatprep.subr.mxu0 %v2575
    %2904 = vmatpush1.msra.mxu0 %v2574
    %2905 = vmatprep.subr.mxu0 %v2580
    %2906 = vmatpush1.msra.mxu0 %v2579
    %2907 = vmatprep.subr.mxu0 %v2585
    %2908 = vmatpush1.msra.mxu0 %v2584
    %2909 = vmatprep.subr.mxu0 %v2590
    %2910 = vmatpush1.msra.mxu0 %v2589
    %2911 = vmatprep.subr.mxu0 %v2595
    %2912 = vmatpush1.msra.mxu0 %v2594
    %2913 = vmatprep.subr.mxu0 %v2600
    %2914 = vmatpush1.msra.mxu0 %v2599
    %2915 = vmatprep.mubr.f32.mxu0 %v2440
    %2916 = vmatmul.mubr.f32.gmra.mrb[0].mxu0 %v2439
    %v2917 = vpop.f32.mrb[0].mxu0
    %v2918 = vadd.f32 %v2695, %v2917
    %v2919 = vpop.f32.mrb[0].mxu0
    %v2920 = vadd.f32 %v2699, %v2919
    %2921 = vdwg.mxu0
    %2922 = vmatprep.subr.mxu0 %v2605
    %2923 = vmatpush1.msra.mxu0 %v2604
    %2924 = vmatprep.subr.mxu0 %v2610
    %2925 = vmatpush1.msra.mxu0 %v2609
    %2926 = vmatprep.subr.mxu0 %v2615
    %2927 = vmatpush1.msra.mxu0 %v2614
    %2928 = vmatprep.subr.mxu0 %v2620
    %2929 = vmatpush1.msra.mxu0 %v2619
    %2930 = vmatprep.subr.mxu0 %v2625
    %2931 = vmatpush1.msra.mxu0 %v2624
    %2932 = vmatprep.subr.mxu0 %v2630
    %2933 = vmatpush1.msra.mxu0 %v2629
    %2934 = vmatprep.subr.mxu0 %v2635
    %2935 = vmatpush1.msra.mxu0 %v2634
    %2936 = vmatprep.subr.mxu0 %v2640
    %2937 = vmatpush1.msra.mxu0 %v2639
    %2938 = vmatprep.subr.mxu0 %v2645
    %2939 = vmatpush1.msra.mxu0 %v2644
    %2940 = vmatprep.subr.mxu0 %v2650
    %2941 = vmatpush1.msra.mxu0 %v2649
    %2942 = vmatprep.subr.mxu0 %v2655
    %2943 = vmatpush1.msra.mxu0 %v2654
    %2944 = vmatprep.subr.mxu0 %v2660
    %2945 = vmatpush1.msra.mxu0 %v2659
    %2946 = vmatprep.subr.mxu0 %v2665
    %2947 = vmatpush1.msra.mxu0 %v2664
    %2948 = vmatprep.subr.mxu0 %v2670
    %2949 = vmatpush1.msra.mxu0 %v2669
    %2950 = vmatprep.subr.mxu0 %v2675
    %2951 = vmatpush1.msra.mxu0 %v2674
    %2952 = vmatprep.subr.mxu0 %v2680
    %2953 = vmatpush1.msra.mxu0 %v2679
    %2954 = vmatprep.subr.mxu0 0.0
    %2955 = vmatpush1.msra.mxu0 0.0
    %2956 = vmatprep.subr.mxu0 0.0
    %2957 = vmatpush1.msra.mxu0 0.0
    %2958 = vmatprep.subr.mxu0 0.0
    %2959 = vmatpush1.msra.mxu0 0.0
    %2960 = vmatprep.subr.mxu0 0.0
    %2961 = vmatpush1.msra.mxu0 0.0
    %2962 = vmatprep.subr.mxu0 0.0
    %2963 = vmatpush1.msra.mxu0 0.0
    %2964 = vmatprep.subr.mxu0 0.0
    %2965 = vmatpush1.msra.mxu0 0.0
    %2966 = vmatprep.subr.mxu0 0.0
    %2967 = vmatpush1.msra.mxu0 0.0
    %2968 = vmatprep.subr.mxu0 0.0
    %2969 = vmatpush1.msra.mxu0 0.0
    %2970 = vmatprep.subr.mxu0 0.0
    %2971 = vmatpush1.msra.mxu0 0.0
    %2972 = vmatprep.subr.mxu0 0.0
    %2973 = vmatpush1.msra.mxu0 0.0
    %2974 = vmatprep.subr.mxu0 0.0
    %2975 = vmatpush1.msra.mxu0 0.0
    %2976 = vmatprep.subr.mxu0 0.0
    %2977 = vmatpush1.msra.mxu0 0.0
    %2978 = vmatprep.subr.mxu0 0.0
    %2979 = vmatpush1.msra.mxu0 0.0
    %2980 = vmatprep.subr.mxu0 0.0
    %2981 = vmatpush1.msra.mxu0 0.0
    %2982 = vmatprep.subr.mxu0 0.0
    %2983 = vmatpush1.msra.mxu0 0.0
    %2984 = vmatprep.subr.mxu0 0.0
    %2985 = vmatpush1.msra.mxu0 0.0
    %2986 = vmatprep.mubr.f32.mxu0 0.0
    %2987 = vmatmul.mubr.f32.gmra.mrb[0].mxu0 %v2441
    %v2988 = vpop.f32.mrb[0].mxu0
    %v2989 = vadd.f32 %v2918, %v2988
    %v2990 = vpop.f32.mrb[0].mxu0
    %v2991 = vadd.f32 %v2920, %v2990
    %2992 = vdwg.mxu0
    %2993 = vmatprep.subr.mxu0 0.0
    %2994 = vmatpush1.msra.mxu0 %v2446
    %2995 = vmatprep.subr.mxu0 0.0
    %2996 = vmatpush1.msra.mxu0 %v2451
    %2997 = vmatprep.subr.mxu0 0.0
    %2998 = vmatpush1.msra.mxu0 %v2456
    %2999 = vmatprep.subr.mxu0 0.0
    %3000 = vmatpush1.msra.mxu0 %v2461
    %3001 = vmatprep.subr.mxu0 0.0
    %3002 = vmatpush1.msra.mxu0 %v2466
    %3003 = vmatprep.subr.mxu0 0.0
    %3004 = vmatpush1.msra.mxu0 %v2471
    %3005 = vmatprep.subr.mxu0 0.0
    %3006 = vmatpush1.msra.mxu0 %v2476
    %3007 = vmatprep.subr.mxu0 0.0
    %3008 = vmatpush1.msra.mxu0 %v2481
    %3009 = vmatprep.subr.mxu0 0.0
    %3010 = vmatpush1.msra.mxu0 %v2486
    %3011 = vmatprep.subr.mxu0 0.0
    %3012 = vmatpush1.msra.mxu0 %v2491
    %3013 = vmatprep.subr.mxu0 0.0
    %3014 = vmatpush1.msra.mxu0 %v2496
    %3015 = vmatprep.subr.mxu0 0.0
    %3016 = vmatpush1.msra.mxu0 %v2501
    %3017 = vmatprep.subr.mxu0 0.0
    %3018 = vmatpush1.msra.mxu0 %v2506
    %3019 = vmatprep.subr.mxu0 0.0
    %3020 = vmatpush1.msra.mxu0 %v2511
    %3021 = vmatprep.subr.mxu0 0.0
    %3022 = vmatpush1.msra.mxu0 %v2516
    %3023 = vmatprep.subr.mxu0 0.0
    %3024 = vmatpush1.msra.mxu0 %v2521
    %3025 = vmatprep.subr.mxu0 0.0
    %3026 = vmatpush1.msra.mxu0 %v2526
    %3027 = vmatprep.subr.mxu0 0.0
    %3028 = vmatpush1.msra.mxu0 %v2531
    %3029 = vmatprep.subr.mxu0 0.0
    %3030 = vmatpush1.msra.mxu0 %v2536
    %3031 = vmatprep.subr.mxu0 0.0
    %3032 = vmatpush1.msra.mxu0 %v2541
    %3033 = vmatprep.subr.mxu0 0.0
    %3034 = vmatpush1.msra.mxu0 %v2546
    %3035 = vmatprep.subr.mxu0 0.0
    %3036 = vmatpush1.msra.mxu0 %v2551
    %3037 = vmatprep.subr.mxu0 0.0
    %3038 = vmatpush1.msra.mxu0 %v2556
    %3039 = vmatprep.subr.mxu0 0.0
    %3040 = vmatpush1.msra.mxu0 %v2561
    %3041 = vmatprep.subr.mxu0 0.0
    %3042 = vmatpush1.msra.mxu0 %v2566
    %3043 = vmatprep.subr.mxu0 0.0
    %3044 = vmatpush1.msra.mxu0 %v2571
    %3045 = vmatprep.subr.mxu0 0.0
    %3046 = vmatpush1.msra.mxu0 %v2576
    %3047 = vmatprep.subr.mxu0 0.0
    %3048 = vmatpush1.msra.mxu0 %v2581
    %3049 = vmatprep.subr.mxu0 0.0
    %3050 = vmatpush1.msra.mxu0 %v2586
    %3051 = vmatprep.subr.mxu0 0.0
    %3052 = vmatpush1.msra.mxu0 %v2591
    %3053 = vmatprep.subr.mxu0 0.0
    %3054 = vmatpush1.msra.mxu0 %v2596
    %3055 = vmatprep.subr.mxu0 0.0
    %3056 = vmatpush1.msra.mxu0 %v2601
    %3057 = vmatprep.mubr.f32.mxu0 %v2440
    %3058 = vmatmul.mubr.f32.gmra.mrb[0].mxu0 %v2439
    %v3059 = vpop.f32.mrb[0].mxu0
    %v3060 = vadd.f32 %v2703, %v3059
    %v3061 = vpop.f32.mrb[0].mxu0
    %3062 = vdwg.mxu0
    %3063 = vmatprep.subr.mxu0 0.0
    %3064 = vmatpush1.msra.mxu0 %v2606
    %3065 = vmatprep.subr.mxu0 0.0
    %3066 = vmatpush1.msra.mxu0 %v2611
    %3067 = vmatprep.subr.mxu0 0.0
    %3068 = vmatpush1.msra.mxu0 %v2616
    %3069 = vmatprep.subr.mxu0 0.0
    %3070 = vmatpush1.msra.mxu0 %v2621
    %3071 = vmatprep.subr.mxu0 0.0
    %3072 = vmatpush1.msra.mxu0 %v2626
    %3073 = vmatprep.subr.mxu0 0.0
    %3074 = vmatpush1.msra.mxu0 %v2631
    %3075 = vmatprep.subr.mxu0 0.0
    %3076 = vmatpush1.msra.mxu0 %v2636
    %3077 = vmatprep.subr.mxu0 0.0
    %3078 = vmatpush1.msra.mxu0 %v2641
    %3079 = vmatprep.subr.mxu0 0.0
    %3080 = vmatpush1.msra.mxu0 %v2646
    %3081 = vmatprep.subr.mxu0 0.0
    %3082 = vmatpush1.msra.mxu0 %v2651
    %3083 = vmatprep.subr.mxu0 0.0
    %3084 = vmatpush1.msra.mxu0 %v2656
    %3085 = vmatprep.subr.mxu0 0.0
    %3086 = vmatpush1.msra.mxu0 %v2661
    %3087 = vmatprep.subr.mxu0 0.0
    %3088 = vmatpush1.msra.mxu0 %v2666
    %3089 = vmatprep.subr.mxu0 0.0
    %3090 = vmatpush1.msra.mxu0 %v2671
    %3091 = vmatprep.subr.mxu0 0.0
    %3092 = vmatpush1.msra.mxu0 %v2676
    %3093 = vmatprep.subr.mxu0 0.0
    %3094 = vmatpush1.msra.mxu0 %v2681
    %3095 = vmatprep.subr.mxu0 0.0
    %3096 = vmatpush1.msra.mxu0 0.0
    %3097 = vmatprep.subr.mxu0 0.0
    %3098 = vmatpush1.msra.mxu0 0.0
    %3099 = vmatprep.subr.mxu0 0.0
    %3100 = vmatpush1.msra.mxu0 0.0
    %3101 = vmatprep.subr.mxu0 0.0
    %3102 = vmatpush1.msra.mxu0 0.0
    %3103 = vmatprep.subr.mxu0 0.0
    %3104 = vmatpush1.msra.mxu0 0.0
    %3105 = vmatprep.subr.mxu0 0.0
    %3106 = vmatpush1.msra.mxu0 0.0
    %3107 = vmatprep.subr.mxu0 0.0
    %3108 = vmatpush1.msra.mxu0 0.0
    %3109 = vmatprep.subr.mxu0 0.0
    %3110 = vmatpush1.msra.mxu0 0.0
    %3111 = vmatprep.subr.mxu0 0.0
    %3112 = vmatpush1.msra.mxu0 0.0
    %3113 = vmatprep.subr.mxu0 0.0
    %3114 = vmatpush1.msra.mxu0 0.0
    %3115 = vmatprep.subr.mxu0 0.0
    %3116 = vmatpush1.msra.mxu0 0.0
    %3117 = vmatprep.subr.mxu0 0.0
    %3118 = vmatpush1.msra.mxu0 0.0
    %3119 = vmatprep.subr.mxu0 0.0
    %3120 = vmatpush1.msra.mxu0 0.0
    %3121 = vmatprep.subr.mxu0 0.0
    %3122 = vmatpush1.msra.mxu0 0.0
    %3123 = vmatprep.subr.mxu0 0.0
    %3124 = vmatpush1.msra.mxu0 0.0
    %3125 = vmatprep.subr.mxu0 0.0
    %3126 = vmatpush1.msra.mxu0 0.0
    %3127 = vmatprep.mubr.f32.mxu0 0.0
    %3128 = vmatmul.mubr.f32.gmra.mrb[0].mxu0 %v2441
    %v3129 = vpop.f32.mrb[0].mxu0
    %v3130 = vadd.f32 %v3060, %v3129
    %v3131 = vpop.f32.mrb[0].mxu0
    %3132 = vdwg.mxu0
    %v3138 = vcombine.low %v2847, %v2849
    %v3139 = vcombine.low %v2989, %v2991
    %v3141 = vunpack.c.l.s4 1983009808
    %v3142 = vunpack.c.0.s8 %v3141
    %v3143 = vlaneseq
    %v3144 = vshrl.u32 %v3143, 7
    %v3145 = vsub.s32 %v3142, %v3144
    %v3146 = vrot.slane %v3138, %v3145
    %v3148 = vunpack.c.l.s4 1983009808
    %v3149 = vunpack.c.0.s8 %v3148
    %v3150 = vlaneseq
    %v3151 = vshrl.u32 %v3150, 7
    %v3152 = vsub.s32 %v3149, %v3151
    %v3153 = vrot.slane %v3139, %v3152
    %v3154 = vcombine.low %v3146, %v3153
    %v3156 = vunpack.c.l.s4 1983009808
    %v3157 = vunpack.c.0.s8 %v3156
    %v3158 = vlaneseq
    %v3159 = vshrl.u32 %v3158, 7
    %v3160 = vsub.s32 %v3157, %v3159
    %v3161 = vrot.slane %v3130, %v3160
    %3164 = vst [vmem:[%s17] sm:$0xff] %v3154
    %3165 = vst [vmem:[%s17 + $0x8] sm:$0x3] %v3161
    // Predicated region
    $region134: #{cae_forward_fused.1} parent=1 // pred_check
      _
    $region135: #{cae_forward_fused.1} parent=1 // pred_check_branch
      %3167 = sbr.rel (0) target = $region137
    $region136: #{cae_forward_fused.1} parent=1 // pred_region
      _
    $region137: #{cae_forward_fused.1} parent=1 // pred_fallthru
      _
    // Predicated region
    $region138: #{cae_forward_fused.1} parent=1 // pred_check
      _
    $region139: #{cae_forward_fused.1} parent=1 // pred_check_branch
      %3169 = sbr.rel (0) target = $region141
    $region140: #{cae_forward_fused.1} parent=1 // pred_region
      _
    $region141: #{cae_forward_fused.1} parent=1 // pred_fallthru
      _
    %3170 = vsyncpa [#allocation3], 1
    %3171 = vsyncpa [#allocation5], 1
    %3172 = vsyncpa [#allocation8], 1
    %3173 = vsyncpa [#allocation11], 1
    %3174 = vsyncpa [#allocation14], 1
    %3175 = vsyncpa [#allocation17], 1
    %3176 = vsyncpa [#allocation20], 1
    %3177 = vsyncpa [#allocation23], 1
    %3178 = vsyncpa [#allocation26], 1

</llo_original>
